<compile_context>
chip_gen: v7x
topology: tpu7x:2x2x1
jax: 0.10.0
libtpu: 0.0.40
codegen_flags: <defaults>
</compile_context>

<pallas_src>
import functools

import jax
import jax.numpy as jnp
from jax.experimental import pallas as pl
from jax.experimental.pallas import tpu as pltpu


# ----------------------------------------------------------------------------
# Fused kernel: keypoint head (1x1 conv) + |.| * multiplier + spatial softmax
#               + soft-argmax (integrate_tensor_2d) + coord rescale
# ----------------------------------------------------------------------------
def _heatmap_softargmax_kernel(x_ref, w_ref, b_ref, coord_ref, hm_ref, kp_ref,
                               *, multiplier, softmax):
    # x:     (C, HW)   pooled image for this (batch, view), channel-first
    # w:     (J, C)    fused (backbone-stub @ keypoint_head[:, :17]) weights
    # b:     (J, 1)    fused bias
    # coord: (HW, 2)   pixel coords, already scaled heatmap-res -> image-res
    h = jnp.dot(w_ref[...], x_ref[...],
                preferred_element_type=jnp.float32) + b_ref[...]        # (J, HW)
    h = jnp.abs(h) * multiplier
    if softmax:
        m = jnp.max(h, axis=1, keepdims=True)
        e = jnp.exp(h - m)
        p = e / jnp.sum(e, axis=1, keepdims=True)                       # (J, HW)
        hm_ref[...] = p
        kp_ref[...] = jnp.dot(p, coord_ref[...],
                              preferred_element_type=jnp.float32)       # (J, 2)
    else:
        p = jnp.maximum(h, 0.0)
        hm_ref[...] = p
        mass = jnp.sum(p, axis=1, keepdims=True)                        # (J, 1)
        kp_ref[...] = (jnp.dot(p, coord_ref[...],
                               preferred_element_type=jnp.float32) / mass)


def heatmap_softargmax(x_pooled, w_fused_t, b_fused, coords, multiplier, softmax):
    """x_pooled: (BV, C, HW), w_fused_t: (J, C), b_fused: (J, 1), coords: (HW, 2)
    -> heatmaps (BV, J, HW), keypoints_2d (BV, J, 2) at image resolution."""
    BV, C, HW = x_pooled.shape
    J = w_fused_t.shape[0]
    kernel = functools.partial(_heatmap_softargmax_kernel,
                               multiplier=float(multiplier),
                               softmax=bool(softmax))
    flops = BV * (2 * J * C * HW + 6 * J * HW + 2 * J * HW * 2)
    bytes_accessed = 4 * (BV * (C * HW + J * HW + J * 2) + J * C + J + HW * 2)
    return pl.pallas_call(
        kernel,
        out_shape=(jax.ShapeDtypeStruct((BV, J, HW), jnp.float32),
                   jax.ShapeDtypeStruct((BV, J, 2), jnp.float32)),
        grid=(BV,),
        in_specs=[
            pl.BlockSpec((None, C, HW), lambda i: (i, 0, 0)),   # per-(b,v) image
            pl.BlockSpec((J, C), lambda i: (0, 0)),             # weights (bcast)
            pl.BlockSpec((J, 1), lambda i: (0, 0)),             # bias (bcast)
            pl.BlockSpec((HW, 2), lambda i: (0, 0)),            # coords (bcast)
        ],
        out_specs=(
            pl.BlockSpec((None, J, HW), lambda i: (i, 0, 0)),   # lane-dense hm
            pl.BlockSpec((None, J, 2), lambda i: (i, 0, 0)),
        ),
        compiler_params=pltpu.CompilerParams(
            dimension_semantics=("parallel",),
            vmem_limit_bytes=32 * 1024 * 1024),
        cost_estimate=pl.CostEstimate(
            flops=flops, transcendentals=BV * J * HW,
            bytes_accessed=bytes_accessed),
    )(x_pooled, w_fused_t, b_fused, coords)


# ----------------------------------------------------------------------------
# DLT triangulation (multiview.triangulate_batch_of_points)
# ----------------------------------------------------------------------------
def triangulate_batch_of_points(proj_matricies, points, confidences):
    """proj: (B, V, 3, 4), points: (B, V, J, 2), confidences: (B, V, J)
    -> keypoints_3d (B, J, 3) via weighted linear (DLT) triangulation."""
    B, V, J, _ = points.shape
    A = (proj_matricies[:, :, None, 2:3, :] * points[:, :, :, :, None]
         - proj_matricies[:, :, None, 0:2, :])                   # (B, V, J, 2, 4)
    A = A * confidences[:, :, :, None, None]
    A = jnp.transpose(A, (0, 2, 1, 3, 4)).reshape(B, J, 2 * V, 4)
    # TODO(synk): the SVD null-space solve has no Pallas equivalent; the
    # per-joint matrices are tiny (2V x 4), so jnp.linalg.svd is used here.
    _, _, vh = jnp.linalg.svd(A, full_matrices=False)
    v_last = vh[..., -1, :]                                      # (B, J, 4)
    return v_last[..., :3] / v_last[..., 3:4]


# ----------------------------------------------------------------------------
# Model wrapper
# ----------------------------------------------------------------------------
class AlgebraicTriangulationNetPallas:
    NUM_KEPT_JOINTS = 17   # heatmaps = heatmaps[:, :17, :, :]

    def __init__(self, num_joints=133, heatmap_multiplier=100.0,
                 heatmap_softmax=True, use_confidences=True,
                 image_channels=3, seed=0):
        self.num_joints = num_joints
        self.heatmap_multiplier = heatmap_multiplier
        self.heatmap_softmax = heatmap_softmax
        # The reference forward always overrides confidences with ones.
        self.use_confidences = use_confidences

        k = jax.random.PRNGKey(seed)
        k1, k2, k3, k4 = jax.random.split(k, 4)
        # TODO(synk): stand-in for the HRNet whole-body backbone (48-channel
        # features at 1/4 resolution): 4x avg-pool + learned 1x1 conv 3->48.
        backbone_w = 0.1 * jax.random.normal(k1, (image_channels, 48), jnp.float32)
        backbone_b = 0.01 * jax.random.normal(k2, (48,), jnp.float32)
        # keypoint_head = nn.Conv2d(48, num_joints, 1)
        head_w = 0.1 * jax.random.normal(k3, (48, num_joints), jnp.float32)
        head_b = 0.01 * jax.random.normal(k4, (num_joints,), jnp.float32)

        # Fold backbone-stub conv + keypoint_head + [:17] channel slice into one
        # 3 -> 17 matmul (no nonlinearity in between; abs commutes with slice).
        J = self.NUM_KEPT_JOINTS
        w_fused = backbone_w @ head_w[:, :J]                    # (C, 17)
        b_fused = backbone_b @ head_w[:, :J] + head_b[:J]       # (17,)
        self.w_fused_t = jnp.transpose(w_fused)                 # (17, C)
        self.b_fused = b_fused.reshape(J, 1)                    # (17, 1)

    def __call__(self, images, proj_matricies, batch=None):
        # images: (B, V, C, H, W), proj_matricies: (B, V, 3, 4) at image res.
        B, V, Cimg, H, W = images.shape
        J = self.NUM_KEPT_JOINTS
        Hf, Wf = H // 4, W // 4
        HW = Hf * Wf

        # ---- backbone stub: stay channel-first, 4x avg-pool to 1/4 resolution
        x = images.reshape(B * V, Cimg, Hf, 4, Wf, 4).mean(axis=(3, 5))
        x = x.reshape(B * V, Cimg, HW)

        # ---- pixel coordinates for the soft-argmax, pre-scaled from heatmap
        #      resolution to image resolution (= keypoints_2d_transformed).
        sx = W / Wf
        sy = H / Hf
        hw_idx = jnp.arange(HW, dtype=jnp.int32)
        coords = jnp.stack(
            [(hw_idx % Wf).astype(jnp.float32) * sx,
             (hw_idx // Wf).astype(jnp.float32) * sy], axis=1)   # (HW, 2)

        # ---- fused keypoint head + abs + softmax + soft-argmax (Pallas)
        hm, kp = heatmap_softargmax(x, self.w_fused_t, self.b_fused, coords,
                                    self.heatmap_multiplier, self.heatmap_softmax)
        heatmaps = hm.reshape(B, V, J, Hf, Wf)
        keypoints_2d = kp.reshape(B, V, J, 2)

        # ---- algebraic confidences: ones, normalized over views, + 1e-5
        alg_confidences = jnp.full((B, V, self.num_joints),
                                   1.0 / V + 1e-5, jnp.float32)

        # ---- DLT triangulation at image resolution
        keypoints_3d = triangulate_batch_of_points(
            proj_matricies, keypoints_2d, alg_confidences[..., :J])

        return keypoints_3d, keypoints_2d, heatmaps, alg_confidences


# ----------------------------------------------------------------------------
# Demo
# ----------------------------------------------------------------------------
def _rot_y(theta):
    c, s = jnp.cos(theta), jnp.sin(theta)
    return jnp.array([[c, 0.0, s], [0.0, 1.0, 0.0], [-s, 0.0, c]], jnp.float32)


def _make_proj(f, cx, cy, R, t):
    K = jnp.array([[f, 0.0, cx], [0.0, f, cy], [0.0, 0.0, 1.0]], jnp.float32)
    Rt = jnp.concatenate([R, t.reshape(3, 1)], axis=1)
    return K @ Rt


if __name__ == "__main__":
    key = jax.random.PRNGKey(0)

    B, V, Cimg, H, W = 2, 4, 3, 32, 32
    Hf, Wf = H // 4, W // 4
    images = jax.random.normal(key, (B, V, Cimg, H, W), jnp.float32)

    # synthetic cameras at image resolution
    f, cx, cy = 30.0, (W - 1) / 2.0, (H - 1) / 2.0
    t = jnp.array([0.0, 0.0, 1000.0], jnp.float32)
    Ps = jnp.stack([_make_proj(f, cx, cy, _rot_y(0.3 * v), t) for v in range(V)],
                   axis=0)
    proj_matricies = jnp.broadcast_to(Ps[None], (B, V, 3, 4))

    model = AlgebraicTriangulationNetPallas(
        num_joints=133, heatmap_multiplier=100.0, heatmap_softmax=True,
        image_channels=Cimg, seed=0)

    fwd = jax.jit(lambda imgs, proj: model(imgs, proj))
    keypoints_3d, keypoints_2d, heatmaps, alg_conf = fwd(images, proj_matricies)
    jax.block_until_ready(keypoints_3d)
    jax.block_until_ready(keypoints_2d)
    jax.block_until_ready(heatmaps)
    jax.block_until_ready(alg_conf)

    assert keypoints_3d.shape == (B, 17, 3)
    assert keypoints_2d.shape == (B, V, 17, 2)
    assert heatmaps.shape == (B, V, 17, Hf, Wf)
    assert alg_conf.shape == (B, V, 133)
    print("KERNEL_OK")
</pallas_src>

<mosaic_0001>
module attributes {stable_mosaic.version = 11 : i64} {
  func.func @_heatmap_softargmax_kernel(%arg0: i32, %arg1: memref<1x3x64xf32, #tpu.memory_space<vmem>>, %arg2: memref<17x3xf32, #tpu.memory_space<vmem>>, %arg3: memref<17x1xf32, #tpu.memory_space<vmem>>, %arg4: memref<64x2xf32, #tpu.memory_space<vmem>>, %arg5: memref<1x17x64xf32, #tpu.memory_space<vmem>>, %arg6: memref<1x17x2xf32, #tpu.memory_space<vmem>>) attributes {dimension_semantics = [#tpu.dimension_semantics<parallel>], iteration_bounds = array<i64: 8>, scalar_prefetch = 0 : i64, scratch_operands = 0 : i64, tpu.core_type = #tpu.core_type<tc>, window_params = [{transform_indices = @transform_0, window_bounds = array<i64: 1, 3, 64>}, {pipeline_mode = #tpu.pipeline_mode<synchronous>, transform_indices = @transform_1, window_bounds = array<i64: 17, 3>}, {pipeline_mode = #tpu.pipeline_mode<synchronous>, transform_indices = @transform_2, window_bounds = array<i64: 17, 1>}, {pipeline_mode = #tpu.pipeline_mode<synchronous>, transform_indices = @transform_3, window_bounds = array<i64: 64, 2>}, {transform_indices = @transform_4, window_bounds = array<i64: 1, 17, 64>}, {transform_indices = @transform_5, window_bounds = array<i64: 1, 17, 2>}]} {
    %c0 = arith.constant 0 : index
    %c0_0 = arith.constant 0 : index
    %0 = vector.load %arg2[%c0, %c0_0] : memref<17x3xf32, #tpu.memory_space<vmem>>, vector<17x3xf32>
    %c0_1 = arith.constant 0 : index
    %c0_2 = arith.constant 0 : index
    %c0_3 = arith.constant 0 : index
    %1 = vector.load %arg1[%c0_1, %c0_2, %c0_3] : memref<1x3x64xf32, #tpu.memory_space<vmem>>, vector<1x3x64xf32>
    %2 = vector.shape_cast %1 : vector<1x3x64xf32> to vector<3x64xf32>
    %cst = arith.constant dense<0.000000e+00> : vector<17x64xf32>
    %3 = tpu.matmul %0, %2, %cst {dimension_numbers = #tpu.dot_dimension_numbers<[1], [0], [0], [1], [0, 0, 1, 1], [], []>} : vector<17x3xf32>, vector<3x64xf32>, vector<17x64xf32> -> vector<17x64xf32>
    %c0_4 = arith.constant 0 : index
    %c0_5 = arith.constant 0 : index
    %4 = vector.load %arg3[%c0_4, %c0_5] : memref<17x1xf32, #tpu.memory_space<vmem>>, vector<17x1xf32>
    %5 = vector.broadcast %4 : vector<17x1xf32> to vector<17x64xf32>
    %6 = arith.addf %3, %5 : vector<17x64xf32>
    %7 = math.absf %6 : vector<17x64xf32>
    %cst_6 = arith.constant 1.000000e+02 : f32
    %8 = vector.broadcast %cst_6 : f32 to vector<17x64xf32>
    %9 = arith.mulf %7, %8 : vector<17x64xf32>
    %cst_7 = arith.constant dense<0xFF800000> : vector<17xf32>
    %10 = vector.multi_reduction <maximumf>, %9, %cst_7 [1] : vector<17x64xf32> to vector<17xf32>
    %11 = vector.shape_cast %10 : vector<17xf32> to vector<17x1xf32>
    %12 = vector.broadcast %11 : vector<17x1xf32> to vector<17x64xf32>
    %13 = arith.subf %9, %12 : vector<17x64xf32>
    %14 = math.exp %13 : vector<17x64xf32>
    %cst_8 = arith.constant dense<0.000000e+00> : vector<17xf32>
    %15 = vector.multi_reduction <add>, %14, %cst_8 [1] : vector<17x64xf32> to vector<17xf32>
    %16 = vector.shape_cast %15 : vector<17xf32> to vector<17x1xf32>
    %17 = vector.broadcast %16 : vector<17x1xf32> to vector<17x64xf32>
    %18 = arith.divf %14, %17 : vector<17x64xf32>
    %c0_9 = arith.constant 0 : index
    %c0_10 = arith.constant 0 : index
    %c0_11 = arith.constant 0 : index
    %19 = vector.load %arg5[%c0_9, %c0_10, %c0_11] : memref<1x17x64xf32, #tpu.memory_space<vmem>>, vector<1x17x64xf32>
    %20 = vector.shape_cast %19 : vector<1x17x64xf32> to vector<17x64xf32>
    %21 = vector.shape_cast %18 : vector<17x64xf32> to vector<1x17x64xf32>
    tpu.vector_store %arg5[%c0_9, %c0_10, %c0_11], %21 {strides = array<i32>} : memref<1x17x64xf32, #tpu.memory_space<vmem>>, vector<1x17x64xf32>,
    %c0_12 = arith.constant 0 : index
    %c0_13 = arith.constant 0 : index
    %22 = vector.load %arg4[%c0_12, %c0_13] : memref<64x2xf32, #tpu.memory_space<vmem>>, vector<64x2xf32>
    %cst_14 = arith.constant dense<0.000000e+00> : vector<17x2xf32>
    %23 = tpu.matmul %18, %22, %cst_14 {dimension_numbers = #tpu.dot_dimension_numbers<[1], [0], [0], [1], [0, 0, 1, 1], [], []>} : vector<17x64xf32>, vector<64x2xf32>, vector<17x2xf32> -> vector<17x2xf32>
    %c0_15 = arith.constant 0 : index
    %c0_16 = arith.constant 0 : index
    %c0_17 = arith.constant 0 : index
    %24 = vector.load %arg6[%c0_15, %c0_16, %c0_17] : memref<1x17x2xf32, #tpu.memory_space<vmem>>, vector<1x17x2xf32>
    %25 = vector.shape_cast %24 : vector<1x17x2xf32> to vector<17x2xf32>
    %26 = vector.shape_cast %23 : vector<17x2xf32> to vector<1x17x2xf32>
    tpu.vector_store %arg6[%c0_15, %c0_16, %c0_17], %26 {strides = array<i32>} : memref<1x17x2xf32, #tpu.memory_space<vmem>>, vector<1x17x2xf32>,
    return
  }
  func.func @transform_0(%arg0: i32) -> (i32, i32, i32) {
    %c0_i32 = arith.constant 0 : i32
    %c0_i32_0 = arith.constant 0 : i32
    %c0_i32_1 = arith.constant 0 : i32
    return %arg0, %c0_i32, %c0_i32_0 : i32, i32, i32
  }
  func.func @transform_1(%arg0: i32) -> (i32, i32) {
    %c0_i32 = arith.constant 0 : i32
    %c0_i32_0 = arith.constant 0 : i32
    %c0_i32_1 = arith.constant 0 : i32
    return %c0_i32, %c0_i32_0 : i32, i32
  }
  func.func @transform_2(%arg0: i32) -> (i32, i32) {
    %c0_i32 = arith.constant 0 : i32
    %c0_i32_0 = arith.constant 0 : i32
    %c0_i32_1 = arith.constant 0 : i32
    return %c0_i32, %c0_i32_0 : i32, i32
  }
  func.func @transform_3(%arg0: i32) -> (i32, i32) {
    %c0_i32 = arith.constant 0 : i32
    %c0_i32_0 = arith.constant 0 : i32
    %c0_i32_1 = arith.constant 0 : i32
    return %c0_i32, %c0_i32_0 : i32, i32
  }
  func.func @transform_4(%arg0: i32) -> (i32, i32, i32) {
    %c0_i32 = arith.constant 0 : i32
    %c0_i32_0 = arith.constant 0 : i32
    %c0_i32_1 = arith.constant 0 : i32
    return %arg0, %c0_i32, %c0_i32_0 : i32, i32, i32
  }
  func.func @transform_5(%arg0: i32) -> (i32, i32, i32) {
    %c0_i32 = arith.constant 0 : i32
    %c0_i32_0 = arith.constant 0 : i32
    %c0_i32_1 = arith.constant 0 : i32
    return %arg0, %c0_i32, %c0_i32_0 : i32, i32, i32
  }
}

</mosaic_0001>

<llo_original>
// kernel: custom-call.31
$region0: #{custom-call.31}
  %s0 = inlined_call_operand.vmem [shape: f32[2,17,8,4], index: 0, kind: input, shape index: {}]
  %s1 = inlined_call_operand.vmem [shape: f32[2,17,8,4], index: 1, kind: output, shape index: {0}]
  %s2 = inlined_call_operand.hbm [shape: f32[2,17,4], index: 2, kind: output, shape index: {1}]
  %3 = xla_tuple %s1, %s2
  $region1: #{custom-call.31} parent=0
    #allocation0 [shape = 'u8[8192]{0}', space=vmem, size = 0x2000, scoped, tag = 'operand span for operand 0']
    #allocation1 [shape = 'u8[8192]{0}', space=vmem, size = 0x2000, scoped, tag = 'operand span for operand 1']
    #allocation2 [shape = 'u8[8192]{0}', space=vmem, size = 0x2000, scoped, tag = 'operand span for operand 2']
    #allocation3 [shape = 's32[2]{0}', space=sflag, size = 0x8, scoped, tag = 'scoped memory for custom-call.31']
    %4 = vsyncpa [#allocation3], 0
    %s5 = scalar_lea.sflag [#allocation3], 1
    %6 = vsyncpa %s5, 0
    loop: start=0, step=1, limit=36
    $region2: #{custom-call.31} parent=1 // loop_pre_header
      _
    $region3: #{custom-call.31} parent=1 // loop_header
      %s8 = sphi 0, %s12
      %p9 = scmp.ge.s32.totalorder %s8, 36
      %s15 = sphi 0, %s41
      %s16 = sphi 0, %s37
      %s17 = sphi 0, %s33
      %s18 = sphi 0, %s29
      %s19 = sphi 0, %s15
      %s20 = sphi 0, %s16
      %s21 = sphi 0, %s17
      %s22 = sphi 0, %s18
      %s23 = sphi 0, %s19
      %s24 = sphi 0, %s20
      %s25 = sphi 0, %s21
      %s26 = sphi 0, %s22
      %s58 = sphi 0, %s60
      %s61 = sphi 0, %s58
      %s62 = sphi 0, %s61
      %s78 = sphi 0, %s62
    $region4: #{custom-call.31} parent=1 // loop_header_branch
      %11 = sbr.rel (%p9) target = $region8
    $region5: #{custom-call.31} parent=1 // loop_body
      %s13 = ssub.s32 %s8, 1
      %s14 = ssub.s32 %s8, 2
      %s27 = sadd.s32 1, %s18
      %p28 = scmp.ge.s32.totalorder %s27, 1
      %s29 = scalar_select %p28, 0, %s27
      %s30 = sadd.s32 1, %s17
      %s31 = scalar_select %p28, %s30, %s17
      %p32 = scmp.ge.s32.totalorder %s31, 1
      %s33 = scalar_select %p32, 0, %s31
      %s34 = sadd.s32 1, %s16
      %s35 = scalar_select %p32, %s34, %s16
      %p36 = scmp.ge.s32.totalorder %s35, 17
      %s37 = scalar_select %p36, 0, %s35
      %s38 = sadd.s32 1, %s15
      %s39 = scalar_select %p36, %s38, %s15
      %p40 = scmp.ge.s32.totalorder %s39, 2
      %s41 = scalar_select %p40, 0, %s39
      %p42 = scmp.lt.s32.totalorder %s16, 0
      %s43 = ssub.s32 0, %s16
      %s44 = scalar_select %p42, %s43, %s16
      %s45 = sshrl.u32 %s44, 3
      %s46 = ssub.s32 0, %s45
      %s47 = scalar_select %p42, %s46, %s45
      %p48 = scmp.lt.s32.totalorder %s37, 0
      %s49 = ssub.s32 0, %s37
      %s50 = scalar_select %p48, %s49, %s37
      %s51 = sshrl.u32 %s50, 3
      %s52 = ssub.s32 0, %s51
      %s53 = scalar_select %p48, %s52, %s51
      %s54 = ssub.s32 %s15, %s41
      %s55 = ssub.s32 %s47, %s53
      %s56 = sor.u32 %s54, %s55
      %p57 = scmp.eq.s32.totalorder %s56, 0
      %s59 = sadd.s32 %s58, 1
      %s60 = scalar_select %p57, %s58, %s59
      %p63 = pneg %p57
      %p64 = scmp.eq.s32.totalorder %s8, 33
      %p65 = por %p63, %p64
      %p66 = scmp.ne.s32.totalorder %s58, %s61
      %p67 = scmp.eq.s32.totalorder %s8, 0
      %p68 = por %p66, %p67
      %p69 = scmp.ne.s32.totalorder %s58, %s61
      %p70 = scmp.eq.s32.totalorder %s13, 33
      %p71 = por %p69, %p70
      %p72 = scmp.ne.s32.totalorder %s61, %s62
      %p73 = scmp.eq.s32.totalorder %s13, 0
      %p74 = por %p72, %p73
      %p75 = scmp.ne.s32.totalorder %s61, %s62
      %p76 = scmp.eq.s32.totalorder %s14, 33
      %p77 = por %p75, %p76
      %p79 = scmp.ne.s32.totalorder %s62, %s78
      %p80 = scmp.eq.s32.totalorder %s14, 0
      %p81 = por %p79, %p80
      %p82 = scmp.le.s32.totalorder 1, %s8
      %p83 = scmp.lt.s32.totalorder %s8, 35
      %p84 = pnand %p82, %p83
      %p85 = pneg %p84
      // Predicated region
      $region9: #{custom-call.31} parent=5 // pred_check
        _
      $region10: #{custom-call.31} parent=5 // pred_check_branch
        %87 = sbr.rel (%p84) target = $region12
      $region11: #{custom-call.31} parent=5 // pred_region
        %s88 = ssub.s32 %s8, 1
      $region12: #{custom-call.31} parent=5 // pred_fallthru
        _
      %p89 = scmp.lt.s32.totalorder %s8, 34
      // Predicated region
      $region13: #{custom-call.31} parent=5 // pred_check
        %p90 = pneg %p89
      $region14: #{custom-call.31} parent=5 // pred_check_branch
        %92 = sbr.rel (%p90) target = $region16
      $region15: #{custom-call.31} parent=5 // pred_region
        %s93 = sand.u32 %s8, 1
        %s94 = sand.u32 %s8, 1
        %s95 = smul.addr %s94, 8
        %s96 = scalar_lea.vmem [#allocation0], %s95
        %s97 = sadd.s32 %s18, %s17
        %s98 = sadd.s32 %s97, %s16
        %s99 = smul.addr %s15, 17
        %s100 = sadd.s32 %s98, %s99
        %s101 = smul.addr %s100, 8
        %s102 = scalar_lea.vmem %s0, %s101
        // Predicated region
        $region17: #{custom-call.31} parent=15 // pred_check
          _
        $region18: #{custom-call.31} parent=15 // pred_check_branch
          %104 = sbr.rel (0) target = $region20
        $region19: #{custom-call.31} parent=15 // pred_region
          // Predicated region
          $region21: #{custom-call.31} parent=19 // pred_check
            _
          $region22: #{custom-call.31} parent=19 // pred_check_branch
            %106 = sbr.rel (0) target = $region24
          $region23: #{custom-call.31} parent=19 // pred_region
            // Predicated region
            $region36: #{custom-call.31} parent=23 // pred_check
              _
            $region37: #{custom-call.31} parent=23 // pred_check_branch
              %121 = sbr.rel (0) target = $region39
            $region38: #{custom-call.31} parent=23 // pred_region
              loop: start=0, step=1, limit=1
              $region40: #{custom-call.31} parent=38 // loop_pre_header
                _
              $region41: #{custom-call.31} parent=38 // loop_header
                %s123 = sphi 0, %s127
                %p124 = scmp.ge.s32.totalorder %s123, 1
                %s128 = sphi %s102, %s102
                %s129 = sphi %s96, %s96
              $region42: #{custom-call.31} parent=38 // loop_header_branch
                %126 = sbr.rel (%p124) target = $region46
              $region43: #{custom-call.31} parent=38 // loop_body
                %v130 = vld [vmem:[%s128] sm:$0xff]
                %131 = vst [vmem:[%s129] sm:$0xff] %v130
              $region44: #{custom-call.31} parent=38 // loop_footer
                %s127 = sadd.s32 1, %s123
              $region45: #{custom-call.31} parent=38 // loop_footer_branch
                %122 = sbr.rel target = $region41
              $region46: #{custom-call.31} parent=38 // loop_exit
                _
            $region39: #{custom-call.31} parent=23 // pred_fallthru
              _
            // Predicated region
            $region47: #{custom-call.31} parent=23 // pred_check
              _
            $region48: #{custom-call.31} parent=23 // pred_check_branch
              %133 = sbr.rel target = $region50
            $region49: #{custom-call.31} parent=23 // pred_region
              _
            $region50: #{custom-call.31} parent=23 // pred_fallthru
              _
          $region24: #{custom-call.31} parent=19 // pred_fallthru
            _
          // Predicated region
          $region25: #{custom-call.31} parent=19 // pred_check
            _
          $region26: #{custom-call.31} parent=19 // pred_check_branch
            %108 = sbr.rel target = $region28
          $region27: #{custom-call.31} parent=19 // pred_region
            loop: start=0, step=1, limit=1
            $region29: #{custom-call.31} parent=27 // loop_pre_header
              _
            $region30: #{custom-call.31} parent=27 // loop_header
              %s111 = sphi 0, %s115
              %p112 = scmp.ge.s32.totalorder %s111, 1
              %s116 = sphi %s102, %s102
              %s117 = sphi %s96, %s96
            $region31: #{custom-call.31} parent=27 // loop_header_branch
              %114 = sbr.rel (%p112) target = $region35
            $region32: #{custom-call.31} parent=27 // loop_body
              %v118 = vld [vmem:[%s116] sm:$0xff]
              %119 = vst [vmem:[%s117] sm:$0xff] %v118
            $region33: #{custom-call.31} parent=27 // loop_footer
              %s115 = sadd.s32 1, %s111
            $region34: #{custom-call.31} parent=27 // loop_footer_branch
              %110 = sbr.rel target = $region30
            $region35: #{custom-call.31} parent=27 // loop_exit
              _
          $region28: #{custom-call.31} parent=19 // pred_fallthru
            _
        $region20: #{custom-call.31} parent=15 // pred_fallthru
          _
        %134 = vnop
      $region16: #{custom-call.31} parent=5 // pred_fallthru
        _
      %p135 = scmp.le.s32.totalorder 1, %s8
      %p136 = scmp.lt.s32.totalorder %s8, 35
      %p137 = pnand %p135, %p136
      %p138 = pneg %p137
      // Predicated region
      $region51: #{custom-call.31} parent=5 // pred_check
        _
      $region52: #{custom-call.31} parent=5 // pred_check_branch
        %140 = sbr.rel (%p137) target = $region54
      $region53: #{custom-call.31} parent=5 // pred_region
        #allocation4 [shape = 'f32[8,128]{1,0}', space=vmem, size = 0x1000, scoped, tag = 'scratch for Householder reflectors']
        %s141 = ssub.s32 %s8, 1
        %s142 = sand.u32 %s13, 1
        %s143 = sand.u32 %s13, 1
        %s144 = smul.addr %s143, 8
        %s145 = scalar_lea.vmem [#allocation0], %s144
        %s146 = sand.u32 %s13, 1
        %s147 = sand.u32 %s13, 1
        %s148 = smul.addr %s147, 8
        %s149 = scalar_lea.vmem [#allocation0], %s148
        %s150 = sand.u32 %s13, 1
        %s151 = sand.u32 %s13, 1
        %s152 = smul.addr %s151, 8
        %s153 = scalar_lea.vmem [#allocation1], %s152
        %p154 = pneg %p74
        %p155 = pneg %p71
        %s156 = sand.u32 %s61, 1
        %s157 = scalar_lea.sflag [#allocation3], %s156
        %s158 = sand.u32 %s61, 1
        %s159 = smul.addr %s158, 8
        %s160 = scalar_lea.vmem [#allocation2], %s159
        %p161 = scmp.lt.s32.totalorder %s20, 0
        %s162 = ssub.s32 0, %s20
        %s163 = scalar_select %p161, %s162, %s20
        %s164 = sshrl.u32 %s163, 3
        %s165 = ssub.s32 0, %s164
        %s166 = scalar_select %p161, %s165, %s164
        %s167 = sand.u32 %s20, 7
        %s168 = scalar_lea.vmem %s160, %s167 [#allocation2]
        %v169 = vld [vmem:[%s145] sm:$0xff]
        %170 = vst [vmem:[%s153] sm:$0xff] %v169
        %171 = vst [vmem:[%s168] sm:$0x1] 0.0
        loop: start=0, step=1, limit=4
        $region55: #{custom-call.31} parent=53 // loop_pre_header
          _
        $region56: #{custom-call.31} parent=53 // loop_header
          %s173 = sphi 0, %s177
          %p174 = scmp.ge.s32.totalorder %s173, 4
        $region57: #{custom-call.31} parent=53 // loop_header_branch
          %176 = sbr.rel (%p174) target = $region61
        $region58: #{custom-call.31} parent=53 // loop_body
          %v178 = vld [vmem:[%s153] sm:$0xff]
          %v179 = vlaneseq
          %v180 = vshrl.u32 %v179, 7
          %v182 = vstv %s173
          %vm183 = vcmp.gt.s32.totalorder %v180, %v182
          %vm184 = vcmp.lt.s32.totalorder %v180, 8
          %vm185 = vmand %vm183, %vm184
          %v186 = vsel %vm185, %v178, 0.0
          %v187 = vmul.f32 %v186, %v186
          %v188 = vrot.slane %v187, 4
          %v189 = vadd.f32 %v187, %v188
          %v190 = vrot.slane %v189, 2
          %v191 = vadd.f32 %v189, %v190
          %v192 = vrot.slane %v191, 1
          %v193 = vadd.f32 %v191, %v192
          %v194 = vrsqrt.pop %v193
          %v195 = vmul.f32 %v193, %v194
          %vm196 = vcmp.eq.f32.partialorder %v193, inf
          %v197 = vsel %vm196, %v193, %v195
          %vm198 = vcmp.eq.f32.partialorder %v193, 0.0
          %v199 = vand.u32 %v193, 2147483648
          %v200 = vsel %vm198, %v199, %v197
          %vm201 = vcmp.eq.f32.partialorder %v193, 0.0
          %s202 = sshrl.u32 %s173, 3
          %s203 = sand.u32 %s173, 7
          %s204 = smul.addr %s202, 8
          %s205 = sadd.s32 %s203, %s204
          %s206 = scalar_lea.vmem %s153, %s205 [#allocation1]
          %v207 = vld [vmem:[%s206] ss:$0 sm:$0xff]
          %v208 = vand.u32 2147483647, %v207
          %v209 = vmax.f32 %v208, 0.0
          %v210 = vand.u32 2147483647, %v200
          %v211 = vmax.f32 %v209, %v210
          %v212 = vrcp.pop %v211
          %v213 = vmul.f32 %v208, %v212
          %v214 = vmul.f32 %v213, %v213
          %v215 = vrcp.pop %v211
          %v216 = vmul.f32 0.0, %v215
          %v217 = vmul.f32 %v216, %v216
          %v218 = vadd.f32 %v214, %v217
          %v219 = vrcp.pop %v211
          %v220 = vmul.f32 %v210, %v219
          %v221 = vmul.f32 %v220, %v220
          %v222 = vadd.f32 %v218, %v221
          %vm223 = vcmp.eq.f32.partialorder %v211, 0.0
          %v224 = vrsqrt.pop %v222
          %v225 = vmul.f32 %v222, %v224
          %vm226 = vcmp.eq.f32.partialorder %v222, inf
          %v227 = vsel %vm226, %v222, %v225
          %vm228 = vcmp.eq.f32.partialorder %v222, 0.0
          %v229 = vand.u32 %v222, 2147483648
          %v230 = vsel %vm228, %v229, %v227
          %v231 = vmul.f32 %v211, %v230
          %v232 = vsel %vm223, 0.0, %v231
          %vm233 = vcmp.lt.f32.partialorder %v207, 0.0
          %v234 = vxor.u32 %v232, 2147483648
          %v235 = vsel %vm233, %v232, %v234
          %v236 = vsub.f32 %v235, %v207
          %v237 = vrcp.pop %v235
          %v238 = vmul.f32 %v236, %v237
          %v239 = vsel %vm201, %v207, %v235
          %v240 = vsel %vm201, 0.0, %v238
          %v241 = vsub.f32 %v207, %v239
          %s242 = smov %s153
          %v243 = vlaneseq
          %v244 = vshrl.u32 %v243, 7
          %v245 = vmov %v244
          %v246 = vld [vmem:[%s242] sm:$0xff]
          %v248 = vstv %s173
          %vm249 = vcmp.gt.s32.totalorder %v245, %v248
          %vm250 = vcmp.lt.s32.totalorder %v245, 8
          %vm251 = vmand %vm249, %vm250
          %v252 = vsel %vm251, %v246, 0.0
          %v253 = vrcp.pop %v241
          %v254 = vmul.f32 %v252, %v253
          %v255 = vsel %vm201, 0.0, %v254
          %v256 = vstv %s173
          %v257 = vlaneseq
          %v258 = vand.u32 %v257, 127
          %vm259 = vcmp.eq.s32.totalorder %v258, %v256
          %v260 = vsel %vm259, %v255, 0.0
          %261 = vadd.xlane.f32.xlu0 %v260
          %v262 = vpop.xlane.xlu0 %261
          %263 = vst [vmem:[#allocation4] sm:$0xff] %v262
          %s264 = scalar_lea.vmem [#allocation4], %s173
          %265 = vst [vmem:[%s264] sm:$0x1] 1.0
          %v266 = vstv %s173
          %v267 = vlaneseq
          %v268 = vand.u32 %v267, 127
          %vm269 = vcmp.eq.s32.totalorder %v268, %v266
          %v270 = vsel %vm269, %v240, 0.0
          %271 = vadd.xlane.f32.xlu0 %v270
          %v272 = vpop.xlane.xlu0 %271
          %v273 = vstv %s173
          %v274 = vlaneseq
          %v275 = vand.u32 %v274, 127
          %vm276 = vcmp.eq.s32.totalorder %v275, %v273
          %v277 = vld [vmem:[%s168] ss:$0 sm:$0xff]
          %v278 = vsel %vm276, %v272, %v277
          %279 = vst [vmem:[%s168] sm:$0x1] %v278
          %s280 = smov %s153
          %s281 = smov [#allocation4]
          %v282 = vlaneseq
          %v283 = vshrl.u32 %v282, 7
          %v284 = vmov %v283
          %v286 = vld [vmem:[%s281] sm:$0xff]
          %v287 = vld [vmem:[%s280] sm:$0xff]
          %v288 = vmul.f32 %v286, %v287
          %vm289 = vcmp.lt.s32.totalorder %v284, 8
          %v290 = vsel %vm289, %v288, 0.0
          %v291 = vrot.slane %v290, 4
          %v292 = vadd.f32 %v290, %v291
          %v293 = vrot.slane %v292, 2
          %v294 = vadd.f32 %v292, %v293
          %v295 = vrot.slane %v294, 1
          %v296 = vadd.f32 %v294, %v295
          %s297 = smov %s280
          %s298 = smov %s281
          %v299 = vlaneseq
          %v300 = vshrl.u32 %v299, 7
          %v301 = vmov %v300
          %v302 = vmul.f32 %v296, %v272
          %v304 = vlaneseq
          %v305 = vand.u32 %v304, 127
          %v306 = vld [vmem:[%s298] sm:$0xff]
          %v307 = vmul.f32 %v306, %v302
          %v308 = vld [vmem:[%s297] sm:$0xff]
          %v309 = vstv %s173
          %vm310 = vcmp.gt.s32.totalorder %v305, %v309
          %v311 = vsub.f32 %v308, %v307
          %v312 = vsel %vm310, %v311, %v308
          %v313 = vstv %s173
          %v314 = vlaneseq
          %v315 = vand.u32 %v314, 127
          %vm316 = vcmp.eq.s32.totalorder %v315, %v313
          %v317 = vstv %s173
          %vm318 = vcmp.ge.s32.totalorder %v301, %v317
          %vm319 = vmand %vm316, %vm318
          %v320 = vsel %vm319, %v306, %v312
          %321 = vst [vmem:[%s297] sm:$0xff] %v320
          %s322 = scalar_lea.vmem %s297, %s173
          %v323 = vld [vmem:[%s322] ss:$0 sm:$0xff]
          %v324 = vstv %s173
          %v325 = vlaneseq
          %v326 = vand.u32 %v325, 127
          %vm327 = vcmp.eq.s32.totalorder %v326, %v324
          %v328 = vsel %vm327, %v239, %v323
          %329 = vst [vmem:[%s322] sm:$0x1] %v328
        $region59: #{custom-call.31} parent=53 // loop_footer
          %s177 = sadd.s32 1, %s173
        $region60: #{custom-call.31} parent=53 // loop_footer_branch
          %172 = sbr.rel target = $region56
        $region61: #{custom-call.31} parent=53 // loop_exit
          _
        %s330 = sand.u32 %s13, 1
        %s331 = sand.u32 %s13, 1
        %s332 = smul.addr %s331, 8
        %s333 = scalar_lea.vmem [#allocation1], %s332
        %s334 = sand.u32 %s61, 1
        %s335 = scalar_lea.sflag [#allocation3], %s334
        %s336 = sand.u32 %s61, 1
        %s337 = smul.addr %s336, 8
        %s338 = scalar_lea.vmem [#allocation2], %s337
        %s339 = sadd.s32 %s22, %s21
        %s340 = sadd.s32 %s339, %s20
        %s341 = smul.addr %s19, 17
        %s342 = sadd.s32 %s340, %s341
        %s343 = smul.addr %s342, 8
        %s344 = scalar_lea.vmem %s1, %s343
        // Predicated region
        $region62: #{custom-call.31} parent=53 // pred_check
          _
        $region63: #{custom-call.31} parent=53 // pred_check_branch
          %346 = sbr.rel (0) target = $region65
        $region64: #{custom-call.31} parent=53 // pred_region
          // Predicated region
          $region66: #{custom-call.31} parent=64 // pred_check
            _
          $region67: #{custom-call.31} parent=64 // pred_check_branch
            %348 = sbr.rel (0) target = $region69
          $region68: #{custom-call.31} parent=64 // pred_region
            // Predicated region
            $region81: #{custom-call.31} parent=68 // pred_check
              _
            $region82: #{custom-call.31} parent=68 // pred_check_branch
              %363 = sbr.rel (0) target = $region84
            $region83: #{custom-call.31} parent=68 // pred_region
              loop: start=0, step=1, limit=1
              $region85: #{custom-call.31} parent=83 // loop_pre_header
                _
              $region86: #{custom-call.31} parent=83 // loop_header
                %s365 = sphi 0, %s369
                %p366 = scmp.ge.s32.totalorder %s365, 1
                %s370 = sphi %s333, %s333
                %s371 = sphi %s344, %s344
              $region87: #{custom-call.31} parent=83 // loop_header_branch
                %368 = sbr.rel (%p366) target = $region91
              $region88: #{custom-call.31} parent=83 // loop_body
                %v372 = vld [vmem:[%s370] sm:$0xff]
                %373 = vst [vmem:[%s371] sm:$0xff] %v372
              $region89: #{custom-call.31} parent=83 // loop_footer
                %s369 = sadd.s32 1, %s365
              $region90: #{custom-call.31} parent=83 // loop_footer_branch
                %364 = sbr.rel target = $region86
              $region91: #{custom-call.31} parent=83 // loop_exit
                _
            $region84: #{custom-call.31} parent=68 // pred_fallthru
              _
            // Predicated region
            $region92: #{custom-call.31} parent=68 // pred_check
              _
            $region93: #{custom-call.31} parent=68 // pred_check_branch
              %375 = sbr.rel target = $region95
            $region94: #{custom-call.31} parent=68 // pred_region
              _
            $region95: #{custom-call.31} parent=68 // pred_fallthru
              _
          $region69: #{custom-call.31} parent=64 // pred_fallthru
            _
          // Predicated region
          $region70: #{custom-call.31} parent=64 // pred_check
            _
          $region71: #{custom-call.31} parent=64 // pred_check_branch
            %350 = sbr.rel target = $region73
          $region72: #{custom-call.31} parent=64 // pred_region
            loop: start=0, step=1, limit=1
            $region74: #{custom-call.31} parent=72 // loop_pre_header
              _
            $region75: #{custom-call.31} parent=72 // loop_header
              %s353 = sphi 0, %s357
              %p354 = scmp.ge.s32.totalorder %s353, 1
              %s358 = sphi %s333, %s333
              %s359 = sphi %s344, %s344
            $region76: #{custom-call.31} parent=72 // loop_header_branch
              %356 = sbr.rel (%p354) target = $region80
            $region77: #{custom-call.31} parent=72 // loop_body
              %v360 = vld [vmem:[%s358] sm:$0xff]
              %361 = vst [vmem:[%s359] sm:$0xff] %v360
            $region78: #{custom-call.31} parent=72 // loop_footer
              %s357 = sadd.s32 1, %s353
            $region79: #{custom-call.31} parent=72 // loop_footer_branch
              %352 = sbr.rel target = $region75
            $region80: #{custom-call.31} parent=72 // loop_exit
              _
          $region73: #{custom-call.31} parent=64 // pred_fallthru
            _
        $region65: #{custom-call.31} parent=53 // pred_fallthru
          _
        %376 = vnop
        // Predicated region
        $region96: #{custom-call.31} parent=53 // pred_check
          %p377 = pneg %p71
        $region97: #{custom-call.31} parent=53 // pred_check_branch
          %379 = sbr.rel (%p377) target = $region99
        $region98: #{custom-call.31} parent=53 // pred_region
          %p380 = scmp.lt.s32.totalorder %s20, 0
          %s381 = ssub.s32 0, %s20
          %s382 = scalar_select %p380, %s381, %s20
          %s383 = sshrl.u32 %s382, 3
          %s384 = ssub.s32 0, %s383
          %s385 = scalar_select %p380, %s384, %s383
          %s387 = ssub.s32 128, 128
          %388 = vsyncadd %s335, %s387
          %s389 = smul.addr %s19, 3
          %s390 = sadd.s32 %s385, %s389
          %s391 = smul.addr %s390, 128
          %s392 = scalar_lea.hbm %s2, %s391
          %s394 = sshll.u32 %s338, 4
          %s395 = int_to_ptr.vmem [resolvable:$true] %s394
          %397 = dma.vmem_to_hbm [thread:$0]  %s395, 128, %s392, %s335
        $region99: #{custom-call.31} parent=53 // pred_fallthru
          _
      $region54: #{custom-call.31} parent=5 // pred_fallthru
        _
      %p398 = scmp.le.s32.totalorder 2, %s8
      // Predicated region
      $region100: #{custom-call.31} parent=5 // pred_check
        %p399 = pneg %p398
      $region101: #{custom-call.31} parent=5 // pred_check_branch
        %401 = sbr.rel (%p399) target = $region103
      $region102: #{custom-call.31} parent=5 // pred_region
        %s402 = ssub.s32 %s8, 2
        %s403 = sand.u32 %s14, 1
        %s404 = sand.u32 %s14, 1
        %s405 = smul.addr %s404, 8
        %s406 = scalar_lea.vmem [#allocation1], %s405
        // Predicated region
        $region104: #{custom-call.31} parent=102 // pred_check
          %p407 = pneg %p77
        $region105: #{custom-call.31} parent=102 // pred_check_branch
          %409 = sbr.rel (%p407) target = $region107
        $region106: #{custom-call.31} parent=102 // pred_region
          %s410 = sand.u32 %s62, 1
          %s411 = scalar_lea.sflag [#allocation3], %s410
          %s412 = sand.u32 %s62, 1
          %s413 = smul.addr %s412, 8
          %s414 = scalar_lea.vmem [#allocation2], %s413
          %415 = dma.done %s411, 128
        $region107: #{custom-call.31} parent=102 // pred_fallthru
          _
      $region103: #{custom-call.31} parent=5 // pred_fallthru
        _
    $region6: #{custom-call.31} parent=1 // loop_footer
      %s12 = sadd.s32 1, %s8
    $region7: #{custom-call.31} parent=1 // loop_footer_branch
      %7 = sbr.rel target = $region3
    $region8: #{custom-call.31} parent=1 // loop_exit
      _
    %416 = vsyncpa [#allocation3], 1
    %s417 = scalar_lea.sflag [#allocation3], 1
    %418 = vsyncpa %s417, 1

// kernel: _lambda_.1
$region0: #{_lambda_.1}
  #allocation0 [shape = 'u32[]', space=smem, size = 0x4, offset = 0x4, fixed_abs, tag = 'smem constant byte address 0x4 - core index']
  #allocation1 [shape = 'u32[144,128]{1,0:T(1,128)}', space=vmem, size = 0x12000, scoped, tag = 'internal scratch']
  %s0 = inlined_call_operand.vmem [shape: f32[8,3,64], index: 0, kind: input, shape index: {}]
  %s1 = inlined_call_operand.vmem [shape: f32[17,3], index: 1, kind: input, shape index: {}]
  %s2 = inlined_call_operand.vmem [shape: f32[17,1], index: 2, kind: input, shape index: {}]
  %s3 = inlined_call_operand.vmem [shape: f32[64,2], index: 3, kind: input, shape index: {}]
  %s4 = inlined_call_operand.vmem [shape: f32[8,17,64], index: 4, kind: output, shape index: {0}]
  %s5 = inlined_call_operand.vmem [shape: f32[8,17,2], index: 5, kind: output, shape index: {1}]
  %6 = xla_tuple %s4, %s5
  %s7 = sld [smem:[#allocation0]]
  $region57: #{_lambda_.1} parent=0
    _
  %s9 = ssub.s32 1, %s7
  %s10 = scalar_select 0, %s9, %s7
  loop: start=0, step=1, limit=10
  $region2: #{_lambda_.1} parent=0 // loop_pre_header
    _
  $region3: #{_lambda_.1} parent=0 // loop_header
    %s12 = sphi 0, %s16
    %p13 = scmp.ge.s32.totalorder %s12, 10
    %s22 = sphi 0, %s24
    %s25 = sphi 0, %s22
    %s26 = sphi 0, %s25
    %s42 = sphi 0, %s26
    %s46 = sphi 0, %s46
    %s48 = sphi 0, %s46
    %s49 = sphi 0, %s48
    %s63 = sphi 0, %s49
    %s67 = sphi 0, %s67
    %s69 = sphi 0, %s67
    %s70 = sphi 0, %s69
    %s84 = sphi 0, %s70
    %s88 = sphi 0, %s88
    %s90 = sphi 0, %s88
    %s91 = sphi 0, %s90
    %s105 = sphi 0, %s91
    %s111 = sphi 0, %s113
    %s114 = sphi 0, %s111
    %s115 = sphi 0, %s114
    %s131 = sphi 0, %s115
    %s137 = sphi 0, %s139
    %s140 = sphi 0, %s137
    %s141 = sphi 0, %s140
    %s157 = sphi 0, %s141
  $region4: #{_lambda_.1} parent=0 // loop_header_branch
    %15 = sbr.rel (%p13) target = $region8
  $region5: #{_lambda_.1} parent=0 // loop_body
    %s17 = ssub.s32 %s12, 1
    %s18 = ssub.s32 %s12, 2
    %s19 = sadd.s32 %s12, 1
    %s20 = ssub.s32 %s12, %s19
    %p21 = scmp.eq.s32.totalorder %s20, 0
    %s23 = sadd.s32 %s22, 1
    %s24 = scalar_select %p21, %s22, %s23
    %p27 = pneg %p21
    %p28 = scmp.eq.s32.totalorder %s12, 7
    %p29 = por %p27, %p28
    %p30 = scmp.ne.s32.totalorder %s22, %s25
    %p31 = scmp.eq.s32.totalorder %s12, 0
    %p32 = por %p30, %p31
    %p33 = scmp.ne.s32.totalorder %s22, %s25
    %p34 = scmp.eq.s32.totalorder %s17, 7
    %p35 = por %p33, %p34
    %p36 = scmp.ne.s32.totalorder %s25, %s26
    %p37 = scmp.eq.s32.totalorder %s17, 0
    %p38 = por %p36, %p37
    %p39 = scmp.ne.s32.totalorder %s25, %s26
    %p40 = scmp.eq.s32.totalorder %s18, 7
    %p41 = por %p39, %p40
    %p43 = scmp.ne.s32.totalorder %s26, %s42
    %p44 = scmp.eq.s32.totalorder %s18, 0
    %p45 = por %p43, %p44
    %s47 = sadd.s32 %s46, 1
    %p50 = scmp.eq.s32.totalorder %s12, 7
    %p51 = scmp.ne.s32.totalorder %s46, %s48
    %p52 = scmp.eq.s32.totalorder %s12, 0
    %p53 = por %p51, %p52
    %p54 = scmp.ne.s32.totalorder %s46, %s48
    %p55 = scmp.eq.s32.totalorder %s17, 7
    %p56 = por %p54, %p55
    %p57 = scmp.ne.s32.totalorder %s48, %s49
    %p58 = scmp.eq.s32.totalorder %s17, 0
    %p59 = por %p57, %p58
    %p60 = scmp.ne.s32.totalorder %s48, %s49
    %p61 = scmp.eq.s32.totalorder %s18, 7
    %p62 = por %p60, %p61
    %p64 = scmp.ne.s32.totalorder %s49, %s63
    %p65 = scmp.eq.s32.totalorder %s18, 0
    %p66 = por %p64, %p65
    %s68 = sadd.s32 %s67, 1
    %p71 = scmp.eq.s32.totalorder %s12, 7
    %p72 = scmp.ne.s32.totalorder %s67, %s69
    %p73 = scmp.eq.s32.totalorder %s12, 0
    %p74 = por %p72, %p73
    %p75 = scmp.ne.s32.totalorder %s67, %s69
    %p76 = scmp.eq.s32.totalorder %s17, 7
    %p77 = por %p75, %p76
    %p78 = scmp.ne.s32.totalorder %s69, %s70
    %p79 = scmp.eq.s32.totalorder %s17, 0
    %p80 = por %p78, %p79
    %p81 = scmp.ne.s32.totalorder %s69, %s70
    %p82 = scmp.eq.s32.totalorder %s18, 7
    %p83 = por %p81, %p82
    %p85 = scmp.ne.s32.totalorder %s70, %s84
    %p86 = scmp.eq.s32.totalorder %s18, 0
    %p87 = por %p85, %p86
    %s89 = sadd.s32 %s88, 1
    %p92 = scmp.eq.s32.totalorder %s12, 7
    %p93 = scmp.ne.s32.totalorder %s88, %s90
    %p94 = scmp.eq.s32.totalorder %s12, 0
    %p95 = por %p93, %p94
    %p96 = scmp.ne.s32.totalorder %s88, %s90
    %p97 = scmp.eq.s32.totalorder %s17, 7
    %p98 = por %p96, %p97
    %p99 = scmp.ne.s32.totalorder %s90, %s91
    %p100 = scmp.eq.s32.totalorder %s17, 0
    %p101 = por %p99, %p100
    %p102 = scmp.ne.s32.totalorder %s90, %s91
    %p103 = scmp.eq.s32.totalorder %s18, 7
    %p104 = por %p102, %p103
    %p106 = scmp.ne.s32.totalorder %s91, %s105
    %p107 = scmp.eq.s32.totalorder %s18, 0
    %p108 = por %p106, %p107
    %s109 = ssub.s32 %s12, %s19
    %p110 = scmp.eq.s32.totalorder %s109, 0
    %s112 = sadd.s32 %s111, 1
    %s113 = scalar_select %p110, %s111, %s112
    %p116 = pneg %p110
    %p117 = scmp.eq.s32.totalorder %s12, 7
    %p118 = por %p116, %p117
    %p119 = scmp.ne.s32.totalorder %s111, %s114
    %p120 = scmp.eq.s32.totalorder %s12, 0
    %p121 = por %p119, %p120
    %p122 = scmp.ne.s32.totalorder %s111, %s114
    %p123 = scmp.eq.s32.totalorder %s17, 7
    %p124 = por %p122, %p123
    %p125 = scmp.ne.s32.totalorder %s114, %s115
    %p126 = scmp.eq.s32.totalorder %s17, 0
    %p127 = por %p125, %p126
    %p128 = scmp.ne.s32.totalorder %s114, %s115
    %p129 = scmp.eq.s32.totalorder %s18, 7
    %p130 = por %p128, %p129
    %p132 = scmp.ne.s32.totalorder %s115, %s131
    %p133 = scmp.eq.s32.totalorder %s18, 0
    %p134 = por %p132, %p133
    %s135 = ssub.s32 %s12, %s19
    %p136 = scmp.eq.s32.totalorder %s135, 0
    %s138 = sadd.s32 %s137, 1
    %s139 = scalar_select %p136, %s137, %s138
    %p142 = pneg %p136
    %p143 = scmp.eq.s32.totalorder %s12, 7
    %p144 = por %p142, %p143
    %p145 = scmp.ne.s32.totalorder %s137, %s140
    %p146 = scmp.eq.s32.totalorder %s12, 0
    %p147 = por %p145, %p146
    %p148 = scmp.ne.s32.totalorder %s137, %s140
    %p149 = scmp.eq.s32.totalorder %s17, 7
    %p150 = por %p148, %p149
    %p151 = scmp.ne.s32.totalorder %s140, %s141
    %p152 = scmp.eq.s32.totalorder %s17, 0
    %p153 = por %p151, %p152
    %p154 = scmp.ne.s32.totalorder %s140, %s141
    %p155 = scmp.eq.s32.totalorder %s18, 7
    %p156 = por %p154, %p155
    %p158 = scmp.ne.s32.totalorder %s141, %s157
    %p159 = scmp.eq.s32.totalorder %s18, 0
    %p160 = por %p158, %p159
    %p161 = scmp.le.s32.totalorder 1, %s12
    %p162 = scmp.lt.s32.totalorder %s12, 9
    %p163 = pnand %p161, %p162
    %p164 = pneg %p163
    // Predicated region
    $region9: #{_lambda_.1} parent=5 // pred_check
      _
    $region10: #{_lambda_.1} parent=5 // pred_check_branch
      %166 = sbr.rel (%p163) target = $region12
    $region11: #{_lambda_.1} parent=5 // pred_region
      %s167 = ssub.s32 %s12, 1
      // Predicated region
      $region13: #{_lambda_.1} parent=11 // pred_check
        %p168 = pneg %p59
      $region14: #{_lambda_.1} parent=11 // pred_check_branch
        %170 = sbr.rel (%p168) target = $region16
      $region15: #{_lambda_.1} parent=11 // pred_region
        _
      $region16: #{_lambda_.1} parent=11 // pred_fallthru
        _
      // Predicated region
      $region17: #{_lambda_.1} parent=11 // pred_check
        %p171 = pneg %p80
      $region18: #{_lambda_.1} parent=11 // pred_check_branch
        %173 = sbr.rel (%p171) target = $region20
      $region19: #{_lambda_.1} parent=11 // pred_region
        _
      $region20: #{_lambda_.1} parent=11 // pred_fallthru
        _
      // Predicated region
      $region21: #{_lambda_.1} parent=11 // pred_check
        %p174 = pneg %p101
      $region22: #{_lambda_.1} parent=11 // pred_check_branch
        %176 = sbr.rel (%p174) target = $region24
      $region23: #{_lambda_.1} parent=11 // pred_region
        _
      $region24: #{_lambda_.1} parent=11 // pred_fallthru
        _
    $region12: #{_lambda_.1} parent=5 // pred_fallthru
      _
    %p177 = scmp.lt.s32.totalorder %s12, 8
    // Predicated region
    $region25: #{_lambda_.1} parent=5 // pred_check
      %p178 = pneg %p177
    $region26: #{_lambda_.1} parent=5 // pred_check_branch
      %180 = sbr.rel (%p178) target = $region28
    $region27: #{_lambda_.1} parent=5 // pred_region
      // Predicated region
      $region29: #{_lambda_.1} parent=27 // pred_check
        %p181 = pneg %p32
      $region30: #{_lambda_.1} parent=27 // pred_check_branch
        %183 = sbr.rel (%p181) target = $region32
      $region31: #{_lambda_.1} parent=27 // pred_region
        %p184 = scmp.lt.s32.totalorder %s12, 7
        %s185 = scalar_select %p184, %s12, 7
        %s186 = smul.addr %s185, 4
        %s187 = scalar_lea.vmem %s0, %s186
      $region32: #{_lambda_.1} parent=27 // pred_fallthru
        _
    $region28: #{_lambda_.1} parent=5 // pred_fallthru
      _
    %p188 = scmp.le.s32.totalorder 1, %s12
    %p189 = scmp.lt.s32.totalorder %s12, 9
    %p190 = pnand %p188, %p189
    %p191 = pneg %p190
    // Predicated region
    $region33: #{_lambda_.1} parent=5 // pred_check
      _
    $region34: #{_lambda_.1} parent=5 // pred_check_branch
      %193 = sbr.rel (%p190) target = $region36
    $region35: #{_lambda_.1} parent=5 // pred_region
      %s194 = ssub.s32 %s12, 1
      %p195 = scmp.lt.s32.totalorder %s17, 7
      %s196 = scalar_select %p195, %s17, 7
      %s197 = smul.addr %s196, 4
      %s198 = scalar_lea.vmem %s0, %s197
      %p199 = pneg %p38
      %p200 = pneg %p35
      %p201 = pneg %p59
      %p202 = pneg %p56
      %p203 = pneg %p80
      %p204 = pneg %p77
      %p205 = pneg %p101
      %p206 = pneg %p98
      %p207 = pneg %p127
      %p208 = pneg %p124
      %p209 = scmp.lt.s32.totalorder %s17, 7
      %s210 = scalar_select %p209, %s17, 7
      %s211 = smul.addr %s210, 3
      %s212 = smul.addr %s211, 8
      %s213 = scalar_lea.vmem %s4, %s212
      %p214 = pneg %p153
      %p215 = pneg %p150
      %p216 = scmp.lt.s32.totalorder %s17, 7
      %s217 = scalar_select %p216, %s17, 7
      %s218 = smul.addr %s217, 3
      %s219 = smul.addr %s218, 8
      %s220 = scalar_lea.vmem %s5, %s219
      %p221 = scmp.lt.s32.totalorder %s17, 7
      %s222 = scalar_select %p221, %s17, 7
      %s223 = smul.addr %s222, 4
      %s224 = scalar_lea.vmem %s0, %s223
      %p225 = scmp.lt.s32.totalorder %s17, 7
      %s226 = scalar_select %p225, %s17, 7
      %s227 = smul.addr %s226, 3
      %s228 = smul.addr %s227, 8
      %s229 = scalar_lea.vmem %s4, %s228
      %p230 = scmp.lt.s32.totalorder %s17, 7
      %s231 = scalar_select %p230, %s17, 7
      %s232 = smul.addr %s231, 3
      %s233 = smul.addr %s232, 8
      %s234 = scalar_lea.vmem %s5, %s233
      %v235 = vld [vmem:[%s1] sm:$0xff]
      %v236 = vld [vmem:[%s1 + $0x8] sm:$0xff]
      %v237 = vld [vmem:[%s1 + $0x10] sm:$0x1]
      %v238 = vld [vmem:[%s224] sm:$0x7]
      %v239 = vld [vmem:[%s2] sm:$0xff]
      %v240 = vld [vmem:[%s2 + $0x8] sm:$0xff]
      %v241 = vld [vmem:[%s2 + $0x10] sm:$0x1]
      %243 = vset.pattern.permute.xlu0 0
      %244 = vperm.xlu0 %243, %v239
      %v245 = vpop.permute.xlu0 %244
      %248 = vset.pattern.permute.xlu0 0
      %249 = vperm.xlu0 %248, %v240
      %v250 = vpop.permute.xlu0 %249
      %253 = vset.pattern.permute.xlu0 0
      %254 = vperm.xlu0 %253, %v241
      %v255 = vpop.permute.xlu0 %254
      %vm257 = vcmask 23552
      %v259 = vsel %vm257, %v235, 0
      %v262 = vsel %vm257, %v236, 0
      %v265 = vsel %vm257, %v237, 0
      %vm267 = vcmask 1042432
      %v269 = vsel %vm267, %v238, 0
      %271 = vmatprep.subr.mxu0 0.0
      %272 = vmatpush1.msra.mxu0 %v269
      %273 = vmatprep.subr.mxu0 0.0
      %274 = vmatpush1.msra.mxu0 0.0
      %275 = vmatprep.subr.mxu0 0.0
      %276 = vmatpush1.msra.mxu0 0.0
      %277 = vmatprep.subr.mxu0 0.0
      %278 = vmatpush1.msra.mxu0 0.0
      %279 = vmatprep.subr.mxu0 0.0
      %280 = vmatpush1.msra.mxu0 0.0
      %281 = vmatprep.subr.mxu0 0.0
      %282 = vmatpush1.msra.mxu0 0.0
      %283 = vmatprep.subr.mxu0 0.0
      %284 = vmatpush1.msra.mxu0 0.0
      %285 = vmatprep.subr.mxu0 0.0
      %286 = vmatpush1.msra.mxu0 0.0
      %287 = vmatprep.subr.mxu0 0.0
      %288 = vmatpush1.msra.mxu0 0.0
      %289 = vmatprep.subr.mxu0 0.0
      %290 = vmatpush1.msra.mxu0 0.0
      %291 = vmatprep.subr.mxu0 0.0
      %292 = vmatpush1.msra.mxu0 0.0
      %293 = vmatprep.subr.mxu0 0.0
      %294 = vmatpush1.msra.mxu0 0.0
      %295 = vmatprep.subr.mxu0 0.0
      %296 = vmatpush1.msra.mxu0 0.0
      %297 = vmatprep.subr.mxu0 0.0
      %298 = vmatpush1.msra.mxu0 0.0
      %299 = vmatprep.subr.mxu0 0.0
      %300 = vmatpush1.msra.mxu0 0.0
      %301 = vmatprep.subr.mxu0 0.0
      %302 = vmatpush1.msra.mxu0 0.0
      %303 = vmatprep.subr.mxu0 0.0
      %304 = vmatpush1.msra.mxu0 0.0
      %305 = vmatprep.subr.mxu0 0.0
      %306 = vmatpush1.msra.mxu0 0.0
      %307 = vmatprep.subr.mxu0 0.0
      %308 = vmatpush1.msra.mxu0 0.0
      %309 = vmatprep.subr.mxu0 0.0
      %310 = vmatpush1.msra.mxu0 0.0
      %311 = vmatprep.subr.mxu0 0.0
      %312 = vmatpush1.msra.mxu0 0.0
      %313 = vmatprep.subr.mxu0 0.0
      %314 = vmatpush1.msra.mxu0 0.0
      %315 = vmatprep.subr.mxu0 0.0
      %316 = vmatpush1.msra.mxu0 0.0
      %317 = vmatprep.subr.mxu0 0.0
      %318 = vmatpush1.msra.mxu0 0.0
      %319 = vmatprep.subr.mxu0 0.0
      %320 = vmatpush1.msra.mxu0 0.0
      %321 = vmatprep.subr.mxu0 0.0
      %322 = vmatpush1.msra.mxu0 0.0
      %323 = vmatprep.subr.mxu0 0.0
      %324 = vmatpush1.msra.mxu0 0.0
      %325 = vmatprep.subr.mxu0 0.0
      %326 = vmatpush1.msra.mxu0 0.0
      %327 = vmatprep.subr.mxu0 0.0
      %328 = vmatpush1.msra.mxu0 0.0
      %329 = vmatprep.subr.mxu0 0.0
      %330 = vmatpush1.msra.mxu0 0.0
      %331 = vmatprep.subr.mxu0 0.0
      %332 = vmatpush1.msra.mxu0 0.0
      %333 = vmatprep.subr.mxu0 0.0
      %334 = vmatpush1.msra.mxu0 0.0
      %335 = vmatprep.mubr.f32.mxu0 0.0
      %336 = vmatmul.mubr.f32.gmra.mrb[0].mxu0 %v259
      %v337 = vpop.f32.mrb[0].mxu0
      %v338 = vadd.f32 %v245, %v337
      %v339 = vpop.f32.mrb[0].mxu0
      %340 = vmatprep.mubr.f32.mxu0 0.0
      %341 = vmatmul.mubr.f32.gmra.mrb[0].mxu0 %v262
      %v342 = vpop.f32.mrb[0].mxu0
      %v343 = vadd.f32 %v250, %v342
      %v344 = vpop.f32.mrb[0].mxu0
      %345 = vmatprep.mubr.f32.mxu0 0.0
      %346 = vmatmul.mubr.f32.gmra.mrb[0].mxu0 %v265
      %v347 = vpop.f32.mrb[0].mxu0
      %v348 = vadd.f32 %v255, %v347
      %v349 = vpop.f32.mrb[0].mxu0
      %350 = vdwg.mxu0
      %v351 = vand.u32 2147483647, %v338
      %v352 = vand.u32 2147483647, %v343
      %v353 = vand.u32 2147483647, %v348
      %v354 = vmul.f32 %v351, 100.0
      %v355 = vmul.f32 %v352, 100.0
      %v356 = vmul.f32 %v353, 100.0
      %vm357 = vcmask 523264
      %v358 = vsel %vm357, %v354, -inf
      %359 = vmax.xlane.f32.xlu0 %v358
      %v360 = vpop.xlane.xlu0 %359
      %v361 = vsel %vm357, %v355, -inf
      %362 = vmax.xlane.f32.xlu0 %v361
      %v363 = vpop.xlane.xlu0 %362
      %vm364 = vcmask 516096
      %v365 = vsel %vm364, %v356, -inf
      %366 = vmax.xlane.f32.xlu0 %v365
      %v367 = vpop.xlane.xlu0 %366
      %v368 = vsub.f32 %v354, %v360
      %v369 = vsub.f32 %v355, %v363
      %v370 = vsub.f32 %v356, %v367
      %v371 = vmul.f32 %v368, 1.442695
      %v372 = vpow.pop %v371
      %v373 = vmul.f32 %v369, 1.442695
      %v374 = vpow.pop %v373
      %v375 = vmul.f32 %v370, 1.442695
      %v376 = vpow.pop %v375
      %v377 = vsel %vm357, %v372, 0.0
      %378 = vadd.xlane.f32.xlu0 %v377
      %v379 = vpop.xlane.xlu0 %378
      %v380 = vsel %vm357, %v374, 0.0
      %381 = vadd.xlane.f32.xlu0 %v380
      %v382 = vpop.xlane.xlu0 %381
      %v383 = vsel %vm364, %v376, 0.0
      %384 = vadd.xlane.f32.xlu0 %v383
      %v385 = vpop.xlane.xlu0 %384
      %v386 = vrcp.pop %v379
      %v387 = vmul.f32 %v372, %v386
      %v388 = vrcp.pop %v382
      %v389 = vmul.f32 %v374, %v388
      %v390 = vrcp.pop %v385
      %v391 = vmul.f32 %v376, %v390
      %392 = vst.msk [vmem:[%s229] sm:$0xff] %vm357, %v387
      %393 = vst.msk [vmem:[%s229 + $0x8] sm:$0xff] %vm357, %v389
      %394 = vst.msk [vmem:[%s229 + $0x10] sm:$0x1] %vm364, %v391
      %v395 = vld [vmem:[%s3] sm:$0xff]
      %v396 = vld [vmem:[%s3 + $0x8] sm:$0xff]
      %v397 = vld [vmem:[%s3 + $0x10] sm:$0xff]
      %v398 = vld [vmem:[%s3 + $0x18] sm:$0xff]
      %v399 = vld [vmem:[%s3 + $0x20] sm:$0xff]
      %v400 = vld [vmem:[%s3 + $0x28] sm:$0xff]
      %v401 = vld [vmem:[%s3 + $0x30] sm:$0xff]
      %v402 = vld [vmem:[%s3 + $0x38] sm:$0xff]
      %v404 = vsel %vm357, %v387, 0
      %v407 = vsel %vm357, %v389, 0
      %v410 = vsel %vm357, %v391, 0
      %412 = vmatprep.subr.mxu0 0.0
      %413 = vmatpush1.msra.mxu0 %v395
      %414 = vmatprep.subr.mxu0 0.0
      %415 = vmatpush1.msra.mxu0 %v396
      %416 = vmatprep.subr.mxu0 0.0
      %417 = vmatpush1.msra.mxu0 %v397
      %418 = vmatprep.subr.mxu0 0.0
      %419 = vmatpush1.msra.mxu0 %v398
      %420 = vmatprep.subr.mxu0 0.0
      %421 = vmatpush1.msra.mxu0 %v399
      %422 = vmatprep.subr.mxu0 0.0
      %423 = vmatpush1.msra.mxu0 %v400
      %424 = vmatprep.subr.mxu0 0.0
      %425 = vmatpush1.msra.mxu0 %v401
      %426 = vmatprep.subr.mxu0 0.0
      %427 = vmatpush1.msra.mxu0 %v402
      %428 = vmatprep.subr.mxu0 0.0
      %429 = vmatpush1.msra.mxu0 0.0
      %430 = vmatprep.subr.mxu0 0.0
      %431 = vmatpush1.msra.mxu0 0.0
      %432 = vmatprep.subr.mxu0 0.0
      %433 = vmatpush1.msra.mxu0 0.0
      %434 = vmatprep.subr.mxu0 0.0
      %435 = vmatpush1.msra.mxu0 0.0
      %436 = vmatprep.subr.mxu0 0.0
      %437 = vmatpush1.msra.mxu0 0.0
      %438 = vmatprep.subr.mxu0 0.0
      %439 = vmatpush1.msra.mxu0 0.0
      %440 = vmatprep.subr.mxu0 0.0
      %441 = vmatpush1.msra.mxu0 0.0
      %442 = vmatprep.subr.mxu0 0.0
      %443 = vmatpush1.msra.mxu0 0.0
      %444 = vmatprep.subr.mxu0 0.0
      %445 = vmatpush1.msra.mxu0 0.0
      %446 = vmatprep.subr.mxu0 0.0
      %447 = vmatpush1.msra.mxu0 0.0
      %448 = vmatprep.subr.mxu0 0.0
      %449 = vmatpush1.msra.mxu0 0.0
      %450 = vmatprep.subr.mxu0 0.0
      %451 = vmatpush1.msra.mxu0 0.0
      %452 = vmatprep.subr.mxu0 0.0
      %453 = vmatpush1.msra.mxu0 0.0
      %454 = vmatprep.subr.mxu0 0.0
      %455 = vmatpush1.msra.mxu0 0.0
      %456 = vmatprep.subr.mxu0 0.0
      %457 = vmatpush1.msra.mxu0 0.0
      %458 = vmatprep.subr.mxu0 0.0
      %459 = vmatpush1.msra.mxu0 0.0
      %460 = vmatprep.subr.mxu0 0.0
      %461 = vmatpush1.msra.mxu0 0.0
      %462 = vmatprep.subr.mxu0 0.0
      %463 = vmatpush1.msra.mxu0 0.0
      %464 = vmatprep.subr.mxu0 0.0
      %465 = vmatpush1.msra.mxu0 0.0
      %466 = vmatprep.subr.mxu0 0.0
      %467 = vmatpush1.msra.mxu0 0.0
      %468 = vmatprep.subr.mxu0 0.0
      %469 = vmatpush1.msra.mxu0 0.0
      %470 = vmatprep.subr.mxu0 0.0
      %471 = vmatpush1.msra.mxu0 0.0
      %472 = vmatprep.subr.mxu0 0.0
      %473 = vmatpush1.msra.mxu0 0.0
      %474 = vmatprep.subr.mxu0 0.0
      %475 = vmatpush1.msra.mxu0 0.0
      %476 = vmatprep.mubr.f32.mxu0 0.0
      %477 = vmatmul.mubr.f32.gmra.mrb[0].mxu0 %v404
      %v478 = vpop.f32.mrb[0].mxu0
      %v479 = vadd.f32 0.0, %v478
      %v480 = vpop.f32.mrb[0].mxu0
      %481 = vmatprep.mubr.f32.mxu0 0.0
      %482 = vmatmul.mubr.f32.gmra.mrb[0].mxu0 %v407
      %v483 = vpop.f32.mrb[0].mxu0
      %v484 = vadd.f32 0.0, %v483
      %v485 = vpop.f32.mrb[0].mxu0
      %486 = vmatprep.mubr.f32.mxu0 0.0
      %487 = vmatmul.mubr.f32.gmra.mrb[0].mxu0 %v410
      %v488 = vpop.f32.mrb[0].mxu0
      %v489 = vadd.f32 0.0, %v488
      %v490 = vpop.f32.mrb[0].mxu0
      %491 = vdwg.mxu0
      %vm492 = vcmask 15360
      %493 = vst.msk [vmem:[%s234] sm:$0xff] %vm492, %v479
      %494 = vst.msk [vmem:[%s234 + $0x8] sm:$0xff] %vm492, %v484
      %vm495 = vcmask 8192
      %496 = vst.msk [vmem:[%s234 + $0x10] sm:$0x1] %vm495, %v489
      %p497 = scmp.lt.s32.totalorder %s17, 7
      %s498 = scalar_select %p497, %s17, 7
      %s499 = smul.addr %s498, 3
      %s500 = smul.addr %s499, 8
      %s501 = scalar_lea.vmem %s4, %s500
      %p502 = scmp.lt.s32.totalorder %s17, 7
      %s503 = scalar_select %p502, %s17, 7
      %s504 = smul.addr %s503, 3
      %s505 = smul.addr %s504, 8
      %s506 = scalar_lea.vmem %s5, %s505
      // Predicated region
      $region37: #{_lambda_.1} parent=35 // pred_check
        %p507 = pneg %p124
      $region38: #{_lambda_.1} parent=35 // pred_check_branch
        %509 = sbr.rel (%p507) target = $region40
      $region39: #{_lambda_.1} parent=35 // pred_region
        _
      $region40: #{_lambda_.1} parent=35 // pred_fallthru
        _
      // Predicated region
      $region41: #{_lambda_.1} parent=35 // pred_check
        %p510 = pneg %p150
      $region42: #{_lambda_.1} parent=35 // pred_check_branch
        %512 = sbr.rel (%p510) target = $region44
      $region43: #{_lambda_.1} parent=35 // pred_region
        _
      $region44: #{_lambda_.1} parent=35 // pred_fallthru
        _
    $region36: #{_lambda_.1} parent=5 // pred_fallthru
      _
    %p513 = scmp.le.s32.totalorder 2, %s12
    // Predicated region
    $region45: #{_lambda_.1} parent=5 // pred_check
      %p514 = pneg %p513
    $region46: #{_lambda_.1} parent=5 // pred_check_branch
      %516 = sbr.rel (%p514) target = $region48
    $region47: #{_lambda_.1} parent=5 // pred_region
      %s517 = ssub.s32 %s12, 2
      // Predicated region
      $region49: #{_lambda_.1} parent=47 // pred_check
        %p518 = pneg %p130
      $region50: #{_lambda_.1} parent=47 // pred_check_branch
        %520 = sbr.rel (%p518) target = $region52
      $region51: #{_lambda_.1} parent=47 // pred_region
        %p521 = scmp.lt.s32.totalorder %s18, 7
        %s522 = scalar_select %p521, %s18, 7
        %s523 = smul.addr %s522, 3
        %s524 = smul.addr %s523, 8
        %s525 = scalar_lea.vmem %s4, %s524
      $region52: #{_lambda_.1} parent=47 // pred_fallthru
        _
      // Predicated region
      $region53: #{_lambda_.1} parent=47 // pred_check
        %p526 = pneg %p156
      $region54: #{_lambda_.1} parent=47 // pred_check_branch
        %528 = sbr.rel (%p526) target = $region56
      $region55: #{_lambda_.1} parent=47 // pred_region
        %p529 = scmp.lt.s32.totalorder %s18, 7
        %s530 = scalar_select %p529, %s18, 7
        %s531 = smul.addr %s530, 3
        %s532 = smul.addr %s531, 8
        %s533 = scalar_lea.vmem %s5, %s532
      $region56: #{_lambda_.1} parent=47 // pred_fallthru
        _
    $region48: #{_lambda_.1} parent=5 // pred_fallthru
      _
  $region6: #{_lambda_.1} parent=0 // loop_footer
    %s16 = sadd.s32 1, %s12
  $region7: #{_lambda_.1} parent=0 // loop_footer_branch
    %11 = sbr.rel target = $region3
  $region8: #{_lambda_.1} parent=0 // loop_exit
    _

// kernel: custom-call.39
$region0: #{custom-call.39}
  %s0 = inlined_call_operand.vmem [shape: f32[2,17,8,4], index: 0, kind: input, shape index: {}]
  %s1 = inlined_call_operand.vmem [shape: f32[2,17,8,4], index: 1, kind: output, shape index: {0}]
  %s2 = inlined_call_operand.vmem [shape: f32[2,17,4], index: 2, kind: output, shape index: {1}]
  %3 = xla_tuple %s1, %s2
  $region1: #{custom-call.39} parent=0
    #allocation0 [shape = 'u8[8192]{0}', space=vmem, size = 0x2000, scoped, tag = 'operand span for operand 0']
    #allocation1 [shape = 'u8[8192]{0}', space=vmem, size = 0x2000, scoped, tag = 'operand span for operand 1']
    #allocation2 [shape = 'u8[8192]{0}', space=vmem, size = 0x2000, scoped, tag = 'operand span for operand 2']
    loop: start=0, step=1, limit=36
    $region2: #{custom-call.39} parent=1 // loop_pre_header
      _
    $region3: #{custom-call.39} parent=1 // loop_header
      %s5 = sphi 0, %s9
      %p6 = scmp.ge.s32.totalorder %s5, 36
      %s12 = sphi 0, %s38
      %s13 = sphi 0, %s34
      %s14 = sphi 0, %s30
      %s15 = sphi 0, %s26
      %s16 = sphi 0, %s12
      %s17 = sphi 0, %s13
      %s18 = sphi 0, %s14
      %s19 = sphi 0, %s15
      %s20 = sphi 0, %s16
      %s21 = sphi 0, %s17
      %s22 = sphi 0, %s18
      %s23 = sphi 0, %s19
      %s55 = sphi 0, %s57
      %s58 = sphi 0, %s55
      %s59 = sphi 0, %s58
      %s75 = sphi 0, %s59
    $region4: #{custom-call.39} parent=1 // loop_header_branch
      %8 = sbr.rel (%p6) target = $region8
    $region5: #{custom-call.39} parent=1 // loop_body
      %s10 = ssub.s32 %s5, 1
      %s11 = ssub.s32 %s5, 2
      %s24 = sadd.s32 1, %s15
      %p25 = scmp.ge.s32.totalorder %s24, 1
      %s26 = scalar_select %p25, 0, %s24
      %s27 = sadd.s32 1, %s14
      %s28 = scalar_select %p25, %s27, %s14
      %p29 = scmp.ge.s32.totalorder %s28, 1
      %s30 = scalar_select %p29, 0, %s28
      %s31 = sadd.s32 1, %s13
      %s32 = scalar_select %p29, %s31, %s13
      %p33 = scmp.ge.s32.totalorder %s32, 17
      %s34 = scalar_select %p33, 0, %s32
      %s35 = sadd.s32 1, %s12
      %s36 = scalar_select %p33, %s35, %s12
      %p37 = scmp.ge.s32.totalorder %s36, 2
      %s38 = scalar_select %p37, 0, %s36
      %p39 = scmp.lt.s32.totalorder %s13, 0
      %s40 = ssub.s32 0, %s13
      %s41 = scalar_select %p39, %s40, %s13
      %s42 = sshrl.u32 %s41, 3
      %s43 = ssub.s32 0, %s42
      %s44 = scalar_select %p39, %s43, %s42
      %p45 = scmp.lt.s32.totalorder %s34, 0
      %s46 = ssub.s32 0, %s34
      %s47 = scalar_select %p45, %s46, %s34
      %s48 = sshrl.u32 %s47, 3
      %s49 = ssub.s32 0, %s48
      %s50 = scalar_select %p45, %s49, %s48
      %s51 = ssub.s32 %s12, %s38
      %s52 = ssub.s32 %s44, %s50
      %s53 = sor.u32 %s51, %s52
      %p54 = scmp.eq.s32.totalorder %s53, 0
      %s56 = sadd.s32 %s55, 1
      %s57 = scalar_select %p54, %s55, %s56
      %p60 = pneg %p54
      %p61 = scmp.eq.s32.totalorder %s5, 33
      %p62 = por %p60, %p61
      %p63 = scmp.ne.s32.totalorder %s55, %s58
      %p64 = scmp.eq.s32.totalorder %s5, 0
      %p65 = por %p63, %p64
      %p66 = scmp.ne.s32.totalorder %s55, %s58
      %p67 = scmp.eq.s32.totalorder %s10, 33
      %p68 = por %p66, %p67
      %p69 = scmp.ne.s32.totalorder %s58, %s59
      %p70 = scmp.eq.s32.totalorder %s10, 0
      %p71 = por %p69, %p70
      %p72 = scmp.ne.s32.totalorder %s58, %s59
      %p73 = scmp.eq.s32.totalorder %s11, 33
      %p74 = por %p72, %p73
      %p76 = scmp.ne.s32.totalorder %s59, %s75
      %p77 = scmp.eq.s32.totalorder %s11, 0
      %p78 = por %p76, %p77
      %p79 = scmp.le.s32.totalorder 1, %s5
      %p80 = scmp.lt.s32.totalorder %s5, 35
      %p81 = pnand %p79, %p80
      %p82 = pneg %p81
      // Predicated region
      $region9: #{custom-call.39} parent=5 // pred_check
        _
      $region10: #{custom-call.39} parent=5 // pred_check_branch
        %84 = sbr.rel (%p81) target = $region12
      $region11: #{custom-call.39} parent=5 // pred_region
        %s85 = ssub.s32 %s5, 1
      $region12: #{custom-call.39} parent=5 // pred_fallthru
        _
      %p86 = scmp.lt.s32.totalorder %s5, 34
      // Predicated region
      $region13: #{custom-call.39} parent=5 // pred_check
        %p87 = pneg %p86
      $region14: #{custom-call.39} parent=5 // pred_check_branch
        %89 = sbr.rel (%p87) target = $region16
      $region15: #{custom-call.39} parent=5 // pred_region
        %s90 = sand.u32 %s5, 1
        %s91 = sand.u32 %s5, 1
        %s92 = smul.addr %s91, 8
        %s93 = scalar_lea.vmem [#allocation0], %s92
        %s94 = sadd.s32 %s15, %s14
        %s95 = sadd.s32 %s94, %s13
        %s96 = smul.addr %s12, 17
        %s97 = sadd.s32 %s95, %s96
        %s98 = smul.addr %s97, 8
        %s99 = scalar_lea.vmem %s0, %s98
        // Predicated region
        $region17: #{custom-call.39} parent=15 // pred_check
          _
        $region18: #{custom-call.39} parent=15 // pred_check_branch
          %101 = sbr.rel (0) target = $region20
        $region19: #{custom-call.39} parent=15 // pred_region
          // Predicated region
          $region21: #{custom-call.39} parent=19 // pred_check
            _
          $region22: #{custom-call.39} parent=19 // pred_check_branch
            %103 = sbr.rel (0) target = $region24
          $region23: #{custom-call.39} parent=19 // pred_region
            // Predicated region
            $region36: #{custom-call.39} parent=23 // pred_check
              _
            $region37: #{custom-call.39} parent=23 // pred_check_branch
              %118 = sbr.rel (0) target = $region39
            $region38: #{custom-call.39} parent=23 // pred_region
              loop: start=0, step=1, limit=1
              $region40: #{custom-call.39} parent=38 // loop_pre_header
                _
              $region41: #{custom-call.39} parent=38 // loop_header
                %s120 = sphi 0, %s124
                %p121 = scmp.ge.s32.totalorder %s120, 1
                %s125 = sphi %s99, %s99
                %s126 = sphi %s93, %s93
              $region42: #{custom-call.39} parent=38 // loop_header_branch
                %123 = sbr.rel (%p121) target = $region46
              $region43: #{custom-call.39} parent=38 // loop_body
                %v127 = vld [vmem:[%s125] sm:$0xff]
                %128 = vst [vmem:[%s126] sm:$0xff] %v127
              $region44: #{custom-call.39} parent=38 // loop_footer
                %s124 = sadd.s32 1, %s120
              $region45: #{custom-call.39} parent=38 // loop_footer_branch
                %119 = sbr.rel target = $region41
              $region46: #{custom-call.39} parent=38 // loop_exit
                _
            $region39: #{custom-call.39} parent=23 // pred_fallthru
              _
            // Predicated region
            $region47: #{custom-call.39} parent=23 // pred_check
              _
            $region48: #{custom-call.39} parent=23 // pred_check_branch
              %130 = sbr.rel target = $region50
            $region49: #{custom-call.39} parent=23 // pred_region
              _
            $region50: #{custom-call.39} parent=23 // pred_fallthru
              _
          $region24: #{custom-call.39} parent=19 // pred_fallthru
            _
          // Predicated region
          $region25: #{custom-call.39} parent=19 // pred_check
            _
          $region26: #{custom-call.39} parent=19 // pred_check_branch
            %105 = sbr.rel target = $region28
          $region27: #{custom-call.39} parent=19 // pred_region
            loop: start=0, step=1, limit=1
            $region29: #{custom-call.39} parent=27 // loop_pre_header
              _
            $region30: #{custom-call.39} parent=27 // loop_header
              %s108 = sphi 0, %s112
              %p109 = scmp.ge.s32.totalorder %s108, 1
              %s113 = sphi %s99, %s99
              %s114 = sphi %s93, %s93
            $region31: #{custom-call.39} parent=27 // loop_header_branch
              %111 = sbr.rel (%p109) target = $region35
            $region32: #{custom-call.39} parent=27 // loop_body
              %v115 = vld [vmem:[%s113] sm:$0xff]
              %116 = vst [vmem:[%s114] sm:$0xff] %v115
            $region33: #{custom-call.39} parent=27 // loop_footer
              %s112 = sadd.s32 1, %s108
            $region34: #{custom-call.39} parent=27 // loop_footer_branch
              %107 = sbr.rel target = $region30
            $region35: #{custom-call.39} parent=27 // loop_exit
              _
          $region28: #{custom-call.39} parent=19 // pred_fallthru
            _
        $region20: #{custom-call.39} parent=15 // pred_fallthru
          _
        %131 = vnop
      $region16: #{custom-call.39} parent=5 // pred_fallthru
        _
      %p132 = scmp.le.s32.totalorder 1, %s5
      %p133 = scmp.lt.s32.totalorder %s5, 35
      %p134 = pnand %p132, %p133
      %p135 = pneg %p134
      // Predicated region
      $region51: #{custom-call.39} parent=5 // pred_check
        _
      $region52: #{custom-call.39} parent=5 // pred_check_branch
        %137 = sbr.rel (%p134) target = $region54
      $region53: #{custom-call.39} parent=5 // pred_region
        #allocation3 [shape = 'f32[8,128]{1,0}', space=vmem, size = 0x1000, scoped, tag = 'scratch for Householder reflectors']
        %s138 = ssub.s32 %s5, 1
        %s139 = sand.u32 %s10, 1
        %s140 = sand.u32 %s10, 1
        %s141 = smul.addr %s140, 8
        %s142 = scalar_lea.vmem [#allocation0], %s141
        %s143 = sand.u32 %s10, 1
        %s144 = sand.u32 %s10, 1
        %s145 = smul.addr %s144, 8
        %s146 = scalar_lea.vmem [#allocation0], %s145
        %s147 = sand.u32 %s10, 1
        %s148 = sand.u32 %s10, 1
        %s149 = smul.addr %s148, 8
        %s150 = scalar_lea.vmem [#allocation1], %s149
        %p151 = pneg %p71
        %p152 = pneg %p68
        %s153 = sand.u32 %s58, 1
        %s154 = sand.u32 %s58, 1
        %s155 = smul.addr %s154, 8
        %s156 = scalar_lea.vmem [#allocation2], %s155
        %p157 = scmp.lt.s32.totalorder %s17, 0
        %s158 = ssub.s32 0, %s17
        %s159 = scalar_select %p157, %s158, %s17
        %s160 = sshrl.u32 %s159, 3
        %s161 = ssub.s32 0, %s160
        %s162 = scalar_select %p157, %s161, %s160
        %s163 = sand.u32 %s17, 7
        %s164 = scalar_lea.vmem %s156, %s163 [#allocation2]
        %v165 = vld [vmem:[%s142] sm:$0xff]
        %166 = vst [vmem:[%s150] sm:$0xff] %v165
        %167 = vst [vmem:[%s164] sm:$0x1] 0.0
        loop: start=0, step=1, limit=4
        $region55: #{custom-call.39} parent=53 // loop_pre_header
          _
        $region56: #{custom-call.39} parent=53 // loop_header
          %s169 = sphi 0, %s173
          %p170 = scmp.ge.s32.totalorder %s169, 4
        $region57: #{custom-call.39} parent=53 // loop_header_branch
          %172 = sbr.rel (%p170) target = $region61
        $region58: #{custom-call.39} parent=53 // loop_body
          %v174 = vld [vmem:[%s150] sm:$0xff]
          %v175 = vlaneseq
          %v176 = vshrl.u32 %v175, 7
          %v178 = vstv %s169
          %vm179 = vcmp.gt.s32.totalorder %v176, %v178
          %vm180 = vcmp.lt.s32.totalorder %v176, 8
          %vm181 = vmand %vm179, %vm180
          %v182 = vsel %vm181, %v174, 0.0
          %v183 = vmul.f32 %v182, %v182
          %v184 = vrot.slane %v183, 4
          %v185 = vadd.f32 %v183, %v184
          %v186 = vrot.slane %v185, 2
          %v187 = vadd.f32 %v185, %v186
          %v188 = vrot.slane %v187, 1
          %v189 = vadd.f32 %v187, %v188
          %v190 = vrsqrt.pop %v189
          %v191 = vmul.f32 %v189, %v190
          %vm192 = vcmp.eq.f32.partialorder %v189, inf
          %v193 = vsel %vm192, %v189, %v191
          %vm194 = vcmp.eq.f32.partialorder %v189, 0.0
          %v195 = vand.u32 %v189, 2147483648
          %v196 = vsel %vm194, %v195, %v193
          %vm197 = vcmp.eq.f32.partialorder %v189, 0.0
          %s198 = sshrl.u32 %s169, 3
          %s199 = sand.u32 %s169, 7
          %s200 = smul.addr %s198, 8
          %s201 = sadd.s32 %s199, %s200
          %s202 = scalar_lea.vmem %s150, %s201 [#allocation1]
          %v203 = vld [vmem:[%s202] ss:$0 sm:$0xff]
          %v204 = vand.u32 2147483647, %v203
          %v205 = vmax.f32 %v204, 0.0
          %v206 = vand.u32 2147483647, %v196
          %v207 = vmax.f32 %v205, %v206
          %v208 = vrcp.pop %v207
          %v209 = vmul.f32 %v204, %v208
          %v210 = vmul.f32 %v209, %v209
          %v211 = vrcp.pop %v207
          %v212 = vmul.f32 0.0, %v211
          %v213 = vmul.f32 %v212, %v212
          %v214 = vadd.f32 %v210, %v213
          %v215 = vrcp.pop %v207
          %v216 = vmul.f32 %v206, %v215
          %v217 = vmul.f32 %v216, %v216
          %v218 = vadd.f32 %v214, %v217
          %vm219 = vcmp.eq.f32.partialorder %v207, 0.0
          %v220 = vrsqrt.pop %v218
          %v221 = vmul.f32 %v218, %v220
          %vm222 = vcmp.eq.f32.partialorder %v218, inf
          %v223 = vsel %vm222, %v218, %v221
          %vm224 = vcmp.eq.f32.partialorder %v218, 0.0
          %v225 = vand.u32 %v218, 2147483648
          %v226 = vsel %vm224, %v225, %v223
          %v227 = vmul.f32 %v207, %v226
          %v228 = vsel %vm219, 0.0, %v227
          %vm229 = vcmp.lt.f32.partialorder %v203, 0.0
          %v230 = vxor.u32 %v228, 2147483648
          %v231 = vsel %vm229, %v228, %v230
          %v232 = vsub.f32 %v231, %v203
          %v233 = vrcp.pop %v231
          %v234 = vmul.f32 %v232, %v233
          %v235 = vsel %vm197, %v203, %v231
          %v236 = vsel %vm197, 0.0, %v234
          %v237 = vsub.f32 %v203, %v235
          %s238 = smov %s150
          %v239 = vlaneseq
          %v240 = vshrl.u32 %v239, 7
          %v241 = vmov %v240
          %v242 = vld [vmem:[%s238] sm:$0xff]
          %v244 = vstv %s169
          %vm245 = vcmp.gt.s32.totalorder %v241, %v244
          %vm246 = vcmp.lt.s32.totalorder %v241, 8
          %vm247 = vmand %vm245, %vm246
          %v248 = vsel %vm247, %v242, 0.0
          %v249 = vrcp.pop %v237
          %v250 = vmul.f32 %v248, %v249
          %v251 = vsel %vm197, 0.0, %v250
          %v252 = vstv %s169
          %v253 = vlaneseq
          %v254 = vand.u32 %v253, 127
          %vm255 = vcmp.eq.s32.totalorder %v254, %v252
          %v256 = vsel %vm255, %v251, 0.0
          %257 = vadd.xlane.f32.xlu0 %v256
          %v258 = vpop.xlane.xlu0 %257
          %259 = vst [vmem:[#allocation3] sm:$0xff] %v258
          %s260 = scalar_lea.vmem [#allocation3], %s169
          %261 = vst [vmem:[%s260] sm:$0x1] 1.0
          %v262 = vstv %s169
          %v263 = vlaneseq
          %v264 = vand.u32 %v263, 127
          %vm265 = vcmp.eq.s32.totalorder %v264, %v262
          %v266 = vsel %vm265, %v236, 0.0
          %267 = vadd.xlane.f32.xlu0 %v266
          %v268 = vpop.xlane.xlu0 %267
          %v269 = vstv %s169
          %v270 = vlaneseq
          %v271 = vand.u32 %v270, 127
          %vm272 = vcmp.eq.s32.totalorder %v271, %v269
          %v273 = vld [vmem:[%s164] ss:$0 sm:$0xff]
          %v274 = vsel %vm272, %v268, %v273
          %275 = vst [vmem:[%s164] sm:$0x1] %v274
          %s276 = smov %s150
          %s277 = smov [#allocation3]
          %v278 = vlaneseq
          %v279 = vshrl.u32 %v278, 7
          %v280 = vmov %v279
          %v282 = vld [vmem:[%s277] sm:$0xff]
          %v283 = vld [vmem:[%s276] sm:$0xff]
          %v284 = vmul.f32 %v282, %v283
          %vm285 = vcmp.lt.s32.totalorder %v280, 8
          %v286 = vsel %vm285, %v284, 0.0
          %v287 = vrot.slane %v286, 4
          %v288 = vadd.f32 %v286, %v287
          %v289 = vrot.slane %v288, 2
          %v290 = vadd.f32 %v288, %v289
          %v291 = vrot.slane %v290, 1
          %v292 = vadd.f32 %v290, %v291
          %s293 = smov %s276
          %s294 = smov %s277
          %v295 = vlaneseq
          %v296 = vshrl.u32 %v295, 7
          %v297 = vmov %v296
          %v298 = vmul.f32 %v292, %v268
          %v300 = vlaneseq
          %v301 = vand.u32 %v300, 127
          %v302 = vld [vmem:[%s294] sm:$0xff]
          %v303 = vmul.f32 %v302, %v298
          %v304 = vld [vmem:[%s293] sm:$0xff]
          %v305 = vstv %s169
          %vm306 = vcmp.gt.s32.totalorder %v301, %v305
          %v307 = vsub.f32 %v304, %v303
          %v308 = vsel %vm306, %v307, %v304
          %v309 = vstv %s169
          %v310 = vlaneseq
          %v311 = vand.u32 %v310, 127
          %vm312 = vcmp.eq.s32.totalorder %v311, %v309
          %v313 = vstv %s169
          %vm314 = vcmp.ge.s32.totalorder %v297, %v313
          %vm315 = vmand %vm312, %vm314
          %v316 = vsel %vm315, %v302, %v308
          %317 = vst [vmem:[%s293] sm:$0xff] %v316
          %s318 = scalar_lea.vmem %s293, %s169
          %v319 = vld [vmem:[%s318] ss:$0 sm:$0xff]
          %v320 = vstv %s169
          %v321 = vlaneseq
          %v322 = vand.u32 %v321, 127
          %vm323 = vcmp.eq.s32.totalorder %v322, %v320
          %v324 = vsel %vm323, %v235, %v319
          %325 = vst [vmem:[%s318] sm:$0x1] %v324
        $region59: #{custom-call.39} parent=53 // loop_footer
          %s173 = sadd.s32 1, %s169
        $region60: #{custom-call.39} parent=53 // loop_footer_branch
          %168 = sbr.rel target = $region56
        $region61: #{custom-call.39} parent=53 // loop_exit
          _
        %s326 = sand.u32 %s10, 1
        %s327 = sand.u32 %s10, 1
        %s328 = smul.addr %s327, 8
        %s329 = scalar_lea.vmem [#allocation1], %s328
        %s330 = sand.u32 %s58, 1
        %s331 = sand.u32 %s58, 1
        %s332 = smul.addr %s331, 8
        %s333 = scalar_lea.vmem [#allocation2], %s332
        %s334 = sadd.s32 %s19, %s18
        %s335 = sadd.s32 %s334, %s17
        %s336 = smul.addr %s16, 17
        %s337 = sadd.s32 %s335, %s336
        %s338 = smul.addr %s337, 8
        %s339 = scalar_lea.vmem %s1, %s338
        // Predicated region
        $region62: #{custom-call.39} parent=53 // pred_check
          _
        $region63: #{custom-call.39} parent=53 // pred_check_branch
          %341 = sbr.rel (0) target = $region65
        $region64: #{custom-call.39} parent=53 // pred_region
          // Predicated region
          $region66: #{custom-call.39} parent=64 // pred_check
            _
          $region67: #{custom-call.39} parent=64 // pred_check_branch
            %343 = sbr.rel (0) target = $region69
          $region68: #{custom-call.39} parent=64 // pred_region
            // Predicated region
            $region81: #{custom-call.39} parent=68 // pred_check
              _
            $region82: #{custom-call.39} parent=68 // pred_check_branch
              %358 = sbr.rel (0) target = $region84
            $region83: #{custom-call.39} parent=68 // pred_region
              loop: start=0, step=1, limit=1
              $region85: #{custom-call.39} parent=83 // loop_pre_header
                _
              $region86: #{custom-call.39} parent=83 // loop_header
                %s360 = sphi 0, %s364
                %p361 = scmp.ge.s32.totalorder %s360, 1
                %s365 = sphi %s329, %s329
                %s366 = sphi %s339, %s339
              $region87: #{custom-call.39} parent=83 // loop_header_branch
                %363 = sbr.rel (%p361) target = $region91
              $region88: #{custom-call.39} parent=83 // loop_body
                %v367 = vld [vmem:[%s365] sm:$0xff]
                %368 = vst [vmem:[%s366] sm:$0xff] %v367
              $region89: #{custom-call.39} parent=83 // loop_footer
                %s364 = sadd.s32 1, %s360
              $region90: #{custom-call.39} parent=83 // loop_footer_branch
                %359 = sbr.rel target = $region86
              $region91: #{custom-call.39} parent=83 // loop_exit
                _
            $region84: #{custom-call.39} parent=68 // pred_fallthru
              _
            // Predicated region
            $region92: #{custom-call.39} parent=68 // pred_check
              _
            $region93: #{custom-call.39} parent=68 // pred_check_branch
              %370 = sbr.rel target = $region95
            $region94: #{custom-call.39} parent=68 // pred_region
              _
            $region95: #{custom-call.39} parent=68 // pred_fallthru
              _
          $region69: #{custom-call.39} parent=64 // pred_fallthru
            _
          // Predicated region
          $region70: #{custom-call.39} parent=64 // pred_check
            _
          $region71: #{custom-call.39} parent=64 // pred_check_branch
            %345 = sbr.rel target = $region73
          $region72: #{custom-call.39} parent=64 // pred_region
            loop: start=0, step=1, limit=1
            $region74: #{custom-call.39} parent=72 // loop_pre_header
              _
            $region75: #{custom-call.39} parent=72 // loop_header
              %s348 = sphi 0, %s352
              %p349 = scmp.ge.s32.totalorder %s348, 1
              %s353 = sphi %s329, %s329
              %s354 = sphi %s339, %s339
            $region76: #{custom-call.39} parent=72 // loop_header_branch
              %351 = sbr.rel (%p349) target = $region80
            $region77: #{custom-call.39} parent=72 // loop_body
              %v355 = vld [vmem:[%s353] sm:$0xff]
              %356 = vst [vmem:[%s354] sm:$0xff] %v355
            $region78: #{custom-call.39} parent=72 // loop_footer
              %s352 = sadd.s32 1, %s348
            $region79: #{custom-call.39} parent=72 // loop_footer_branch
              %347 = sbr.rel target = $region75
            $region80: #{custom-call.39} parent=72 // loop_exit
              _
          $region73: #{custom-call.39} parent=64 // pred_fallthru
            _
        $region65: #{custom-call.39} parent=53 // pred_fallthru
          _
        %371 = vnop
        // Predicated region
        $region96: #{custom-call.39} parent=53 // pred_check
          %p372 = pneg %p68
        $region97: #{custom-call.39} parent=53 // pred_check_branch
          %374 = sbr.rel (%p372) target = $region99
        $region98: #{custom-call.39} parent=53 // pred_region
          %p375 = scmp.lt.s32.totalorder %s17, 0
          %s376 = ssub.s32 0, %s17
          %s377 = scalar_select %p375, %s376, %s17
          %s378 = sshrl.u32 %s377, 3
          %s379 = ssub.s32 0, %s378
          %s380 = scalar_select %p375, %s379, %s378
          %s381 = smul.addr %s16, 3
          %s382 = sadd.s32 %s380, %s381
          %s383 = smul.addr %s382, 8
          %s384 = scalar_lea.vmem %s2, %s383
          // Predicated region
          $region100: #{custom-call.39} parent=98 // pred_check
            _
          $region101: #{custom-call.39} parent=98 // pred_check_branch
            %386 = sbr.rel (0) target = $region103
          $region102: #{custom-call.39} parent=98 // pred_region
            // Predicated region
            $region104: #{custom-call.39} parent=102 // pred_check
              _
            $region105: #{custom-call.39} parent=102 // pred_check_branch
              %388 = sbr.rel (0) target = $region107
            $region106: #{custom-call.39} parent=102 // pred_region
              // Predicated region
              $region119: #{custom-call.39} parent=106 // pred_check
                _
              $region120: #{custom-call.39} parent=106 // pred_check_branch
                %403 = sbr.rel (0) target = $region122
              $region121: #{custom-call.39} parent=106 // pred_region
                loop: start=0, step=1, limit=1
                $region123: #{custom-call.39} parent=121 // loop_pre_header
                  _
                $region124: #{custom-call.39} parent=121 // loop_header
                  %s405 = sphi 0, %s409
                  %p406 = scmp.ge.s32.totalorder %s405, 1
                  %s410 = sphi %s333, %s333
                  %s411 = sphi %s384, %s384
                $region125: #{custom-call.39} parent=121 // loop_header_branch
                  %408 = sbr.rel (%p406) target = $region129
                $region126: #{custom-call.39} parent=121 // loop_body
                  %v412 = vld [vmem:[%s410] sm:$0xff]
                  %413 = vst [vmem:[%s411] sm:$0xff] %v412
                $region127: #{custom-call.39} parent=121 // loop_footer
                  %s409 = sadd.s32 1, %s405
                $region128: #{custom-call.39} parent=121 // loop_footer_branch
                  %404 = sbr.rel target = $region124
                $region129: #{custom-call.39} parent=121 // loop_exit
                  _
              $region122: #{custom-call.39} parent=106 // pred_fallthru
                _
              // Predicated region
              $region130: #{custom-call.39} parent=106 // pred_check
                _
              $region131: #{custom-call.39} parent=106 // pred_check_branch
                %415 = sbr.rel target = $region133
              $region132: #{custom-call.39} parent=106 // pred_region
                _
              $region133: #{custom-call.39} parent=106 // pred_fallthru
                _
            $region107: #{custom-call.39} parent=102 // pred_fallthru
              _
            // Predicated region
            $region108: #{custom-call.39} parent=102 // pred_check
              _
            $region109: #{custom-call.39} parent=102 // pred_check_branch
              %390 = sbr.rel target = $region111
            $region110: #{custom-call.39} parent=102 // pred_region
              loop: start=0, step=1, limit=1
              $region112: #{custom-call.39} parent=110 // loop_pre_header
                _
              $region113: #{custom-call.39} parent=110 // loop_header
                %s393 = sphi 0, %s397
                %p394 = scmp.ge.s32.totalorder %s393, 1
                %s398 = sphi %s333, %s333
                %s399 = sphi %s384, %s384
              $region114: #{custom-call.39} parent=110 // loop_header_branch
                %396 = sbr.rel (%p394) target = $region118
              $region115: #{custom-call.39} parent=110 // loop_body
                %v400 = vld [vmem:[%s398] sm:$0xff]
                %401 = vst [vmem:[%s399] sm:$0xff] %v400
              $region116: #{custom-call.39} parent=110 // loop_footer
                %s397 = sadd.s32 1, %s393
              $region117: #{custom-call.39} parent=110 // loop_footer_branch
                %392 = sbr.rel target = $region113
              $region118: #{custom-call.39} parent=110 // loop_exit
                _
            $region111: #{custom-call.39} parent=102 // pred_fallthru
              _
          $region103: #{custom-call.39} parent=98 // pred_fallthru
            _
          %416 = vnop
        $region99: #{custom-call.39} parent=53 // pred_fallthru
          _
      $region54: #{custom-call.39} parent=5 // pred_fallthru
        _
      %p417 = scmp.le.s32.totalorder 2, %s5
      // Predicated region
      $region134: #{custom-call.39} parent=5 // pred_check
        %p418 = pneg %p417
      $region135: #{custom-call.39} parent=5 // pred_check_branch
        %420 = sbr.rel (%p418) target = $region137
      $region136: #{custom-call.39} parent=5 // pred_region
        %s421 = ssub.s32 %s5, 2
        %s422 = sand.u32 %s11, 1
        %s423 = sand.u32 %s11, 1
        %s424 = smul.addr %s423, 8
        %s425 = scalar_lea.vmem [#allocation1], %s424
        // Predicated region
        $region138: #{custom-call.39} parent=136 // pred_check
          %p426 = pneg %p74
        $region139: #{custom-call.39} parent=136 // pred_check_branch
          %428 = sbr.rel (%p426) target = $region141
        $region140: #{custom-call.39} parent=136 // pred_region
          %s429 = sand.u32 %s59, 1
          %s430 = sand.u32 %s59, 1
          %s431 = smul.addr %s430, 8
          %s432 = scalar_lea.vmem [#allocation2], %s431
        $region141: #{custom-call.39} parent=136 // pred_fallthru
          _
      $region137: #{custom-call.39} parent=5 // pred_fallthru
        _
    $region6: #{custom-call.39} parent=1 // loop_footer
      %s9 = sadd.s32 1, %s5
    $region7: #{custom-call.39} parent=1 // loop_footer_branch
      %4 = sbr.rel target = $region3
    $region8: #{custom-call.39} parent=1 // loop_exit
      _

// kernel: custom-call.40
$region0: #{custom-call.40}
  %s0 = inlined_call_operand.vmem [shape: f32[2,17,4,4], index: 0, kind: input, shape index: {}]
  %s1 = inlined_call_operand.vmem [shape: f32[2,17,4,4], index: 1, kind: output, shape index: {}]
  $region1: #{custom-call.40} parent=0
    #allocation0 [shape = 'u8[4096]{0}', space=vmem, size = 0x1000, scoped, tag = 'operand span for operand 0']
    #allocation1 [shape = 'u8[4096]{0}', space=vmem, size = 0x1000, scoped, tag = 'packed  for operand 0']
    #allocation2 [shape = 'u8[4096]{0}', space=vmem, size = 0x1000, scoped, tag = 'operand span for operand 1']
    #allocation3 [shape = 'u8[4096]{0}', space=vmem, size = 0x1000, scoped, tag = 'packed  for operand 1']
    loop: start=0, step=1, limit=36
    $region2: #{custom-call.40} parent=1 // loop_pre_header
      _
    $region3: #{custom-call.40} parent=1 // loop_header
      %s3 = sphi 0, %s7
      %p4 = scmp.ge.s32.totalorder %s3, 36
      %s10 = sphi 0, %s22
      %s11 = sphi 0, %s18
      %s12 = sphi 0, %s10
      %s13 = sphi 0, %s11
      %s14 = sphi 0, %s12
      %s15 = sphi 0, %s13
    $region4: #{custom-call.40} parent=1 // loop_header_branch
      %6 = sbr.rel (%p4) target = $region8
    $region5: #{custom-call.40} parent=1 // loop_body
      %s8 = ssub.s32 %s3, 1
      %s9 = ssub.s32 %s3, 2
      %s16 = sadd.s32 1, %s11
      %p17 = scmp.ge.s32.totalorder %s16, 17
      %s18 = scalar_select %p17, 0, %s16
      %s19 = sadd.s32 1, %s10
      %s20 = scalar_select %p17, %s19, %s10
      %p21 = scmp.ge.s32.totalorder %s20, 2
      %s22 = scalar_select %p21, 0, %s20
      %p23 = scmp.le.s32.totalorder 1, %s3
      %p24 = scmp.lt.s32.totalorder %s3, 35
      %p25 = pnand %p23, %p24
      %p26 = pneg %p25
      // Predicated region
      $region9: #{custom-call.40} parent=5 // pred_check
        _
      $region10: #{custom-call.40} parent=5 // pred_check_branch
        %28 = sbr.rel (%p25) target = $region12
      $region11: #{custom-call.40} parent=5 // pred_region
        %s29 = ssub.s32 %s3, 1
      $region12: #{custom-call.40} parent=5 // pred_fallthru
        _
      %p30 = scmp.lt.s32.totalorder %s3, 34
      // Predicated region
      $region13: #{custom-call.40} parent=5 // pred_check
        %p31 = pneg %p30
      $region14: #{custom-call.40} parent=5 // pred_check_branch
        %33 = sbr.rel (%p31) target = $region16
      $region15: #{custom-call.40} parent=5 // pred_region
        %s34 = sand.u32 %s3, 1
        %s35 = sand.u32 %s3, 1
        %s36 = smul.addr %s35, 4
        %s37 = scalar_lea.vmem [#allocation1], %s36
        %s38 = smul.addr %s10, 17
        %s39 = sadd.s32 %s11, %s38
        %s40 = smul.addr %s39, 4
        %s41 = scalar_lea.vmem %s0, %s40
        // Predicated region
        $region17: #{custom-call.40} parent=15 // pred_check
          _
        $region18: #{custom-call.40} parent=15 // pred_check_branch
          %43 = sbr.rel (0) target = $region20
        $region19: #{custom-call.40} parent=15 // pred_region
          // Predicated region
          $region21: #{custom-call.40} parent=19 // pred_check
            _
          $region22: #{custom-call.40} parent=19 // pred_check_branch
            %45 = sbr.rel target = $region24
          $region23: #{custom-call.40} parent=19 // pred_region
            // Predicated region
            $region36: #{custom-call.40} parent=23 // pred_check
              _
            $region37: #{custom-call.40} parent=23 // pred_check_branch
              %60 = sbr.rel (0) target = $region39
            $region38: #{custom-call.40} parent=23 // pred_region
              loop: start=0, step=1, limit=1
              $region40: #{custom-call.40} parent=38 // loop_pre_header
                _
              $region41: #{custom-call.40} parent=38 // loop_header
                %s63 = sphi 0, %s67
                %p64 = scmp.ge.s32.totalorder %s63, 1
                %s68 = sphi %s41, %s41
                %s69 = sphi %s37, %s37
              $region42: #{custom-call.40} parent=38 // loop_header_branch
                %66 = sbr.rel (%p64) target = $region46
              $region43: #{custom-call.40} parent=38 // loop_body
                %v70 = vld [vmem:[%s68] sm:$0xf]
                %71 = vst [vmem:[%s69] sm:$0xf] %v70
              $region44: #{custom-call.40} parent=38 // loop_footer
                %s67 = sadd.s32 1, %s63
              $region45: #{custom-call.40} parent=38 // loop_footer_branch
                %62 = sbr.rel target = $region41
              $region46: #{custom-call.40} parent=38 // loop_exit
                _
            $region39: #{custom-call.40} parent=23 // pred_fallthru
              _
          $region24: #{custom-call.40} parent=19 // pred_fallthru
            _
          // Predicated region
          $region25: #{custom-call.40} parent=19 // pred_check
            _
          $region26: #{custom-call.40} parent=19 // pred_check_branch
            %47 = sbr.rel (0) target = $region28
          $region27: #{custom-call.40} parent=19 // pred_region
            loop: start=0, step=1, limit=1
            $region29: #{custom-call.40} parent=27 // loop_pre_header
              _
            $region30: #{custom-call.40} parent=27 // loop_header
              %s50 = sphi 0, %s54
              %p51 = scmp.ge.s32.totalorder %s50, 1
              %s55 = sphi %s41, %s41
              %s56 = sphi %s37, %s37
            $region31: #{custom-call.40} parent=27 // loop_header_branch
              %53 = sbr.rel (%p51) target = $region35
            $region32: #{custom-call.40} parent=27 // loop_body
              %v57 = vld [vmem:[%s55] sm:$0xf]
              %58 = vst [vmem:[%s56] sm:$0xf] %v57
            $region33: #{custom-call.40} parent=27 // loop_footer
              %s54 = sadd.s32 1, %s50
            $region34: #{custom-call.40} parent=27 // loop_footer_branch
              %49 = sbr.rel target = $region30
            $region35: #{custom-call.40} parent=27 // loop_exit
              _
          $region28: #{custom-call.40} parent=19 // pred_fallthru
            _
        $region20: #{custom-call.40} parent=15 // pred_fallthru
          _
        %72 = vnop
      $region16: #{custom-call.40} parent=5 // pred_fallthru
        _
      %p73 = scmp.le.s32.totalorder 1, %s3
      %p74 = scmp.lt.s32.totalorder %s3, 35
      %p75 = pnand %p73, %p74
      %p76 = pneg %p75
      // Predicated region
      $region47: #{custom-call.40} parent=5 // pred_check
        _
      $region48: #{custom-call.40} parent=5 // pred_check_branch
        %78 = sbr.rel (%p75) target = $region50
      $region49: #{custom-call.40} parent=5 // pred_region
        %s79 = ssub.s32 %s3, 1
        %s80 = sand.u32 %s8, 1
        %s81 = sand.u32 %s8, 1
        %s82 = smul.addr %s81, 4
        %s83 = scalar_lea.vmem [#allocation1], %s82
        %s84 = sand.u32 %s8, 1
        %s85 = sand.u32 %s8, 1
        %s86 = smul.addr %s85, 4
        %s87 = scalar_lea.vmem [#allocation1], %s86
        %s88 = sand.u32 %s8, 1
        %s89 = sand.u32 %s8, 1
        %s90 = smul.addr %s89, 4
        %s91 = scalar_lea.vmem [#allocation3], %s90
        %s93 = sshllo.u32 0, 4
        %v94 = vld [vmem:[%s87] sm:%s93]
        %95 = vst [vmem:[#allocation0] sm:%s93] %v94
        %v96 = vlaneseq
        %v97 = vand.u32 %v96, 127
        %v98 = vlaneseq
        %v99 = vshrl.u32 %v98, 7
        %vm101 = vcmp.eq.s32.totalorder %v97, %v99
        %v102 = vld [vmem:[#allocation0] sm:$0xff]
        %v103 = vlaneseq
        %v104 = vand.u32 %v103, 127
        %vm105 = vcmp.eq.s32.totalorder %v104, 0
        %v106 = vsel %vm105, %v102, 1.0
        %v107 = vsel %vm101, %v106, 0.0
        %s108 = scalar_lea.vmem [#allocation0], 1
        %v109 = vld [vmem:[%s108] ss:$0 sm:$0xff]
        %vm110 = vcmask 31744
        %v111 = vsel %vm110, %v109, 0.0
        %v112 = vlaneseq
        %v113 = vand.u32 %v112, 127
        %vm114 = vcmp.eq.s32.totalorder %v113, 1
        %v115 = vmul.f32 %v111, %v107
        %116 = vadd.xlane.f32.xlu0 %v115
        %v117 = vpop.xlane.xlu0 %116
        %v118 = vsel %vm114, %v117, %v107
        %s119 = scalar_lea.vmem [#allocation0], 2
        %v120 = vld [vmem:[%s119] ss:$0 sm:$0xff]
        %vm121 = vcmask 31744
        %v122 = vsel %vm121, %v120, 0.0
        %v123 = vlaneseq
        %v124 = vand.u32 %v123, 127
        %vm125 = vcmp.eq.s32.totalorder %v124, 2
        %v126 = vmul.f32 %v122, %v118
        %127 = vadd.xlane.f32.xlu0 %v126
        %v128 = vpop.xlane.xlu0 %127
        %v129 = vsel %vm125, %v128, %v118
        %s130 = scalar_lea.vmem [#allocation0], 3
        %v131 = vld [vmem:[%s130] ss:$0 sm:$0xff]
        %vm132 = vcmask 31744
        %v133 = vsel %vm132, %v131, 0.0
        %v134 = vlaneseq
        %v135 = vand.u32 %v134, 127
        %vm136 = vcmp.eq.s32.totalorder %v135, 3
        %v137 = vmul.f32 %v133, %v129
        %138 = vadd.xlane.f32.xlu0 %v137
        %v139 = vpop.xlane.xlu0 %138
        %v140 = vsel %vm136, %v139, %v129
        %141 = vst [vmem:[#allocation2] sm:$0xff] %v140
        %s143 = sshllo.u32 0, 4
        %v145 = vld [vmem:[#allocation2] sm:%s143]
        %s146 = sshllo.u32 0, 4
        %147 = vst [vmem:[%s91] sm:%s146] %v145
        %s148 = sand.u32 %s8, 1
        %s149 = sand.u32 %s8, 1
        %s150 = smul.addr %s149, 4
        %s151 = scalar_lea.vmem [#allocation3], %s150
        %s152 = smul.addr %s12, 17
        %s153 = sadd.s32 %s13, %s152
        %s154 = smul.addr %s153, 4
        %s155 = scalar_lea.vmem %s1, %s154
        // Predicated region
        $region51: #{custom-call.40} parent=49 // pred_check
          _
        $region52: #{custom-call.40} parent=49 // pred_check_branch
          %157 = sbr.rel (0) target = $region54
        $region53: #{custom-call.40} parent=49 // pred_region
          // Predicated region
          $region55: #{custom-call.40} parent=53 // pred_check
            _
          $region56: #{custom-call.40} parent=53 // pred_check_branch
            %159 = sbr.rel target = $region58
          $region57: #{custom-call.40} parent=53 // pred_region
            // Predicated region
            $region70: #{custom-call.40} parent=57 // pred_check
              _
            $region71: #{custom-call.40} parent=57 // pred_check_branch
              %174 = sbr.rel (0) target = $region73
            $region72: #{custom-call.40} parent=57 // pred_region
              loop: start=0, step=1, limit=1
              $region74: #{custom-call.40} parent=72 // loop_pre_header
                _
              $region75: #{custom-call.40} parent=72 // loop_header
                %s177 = sphi 0, %s181
                %p178 = scmp.ge.s32.totalorder %s177, 1
                %s182 = sphi %s151, %s151
                %s183 = sphi %s155, %s155
              $region76: #{custom-call.40} parent=72 // loop_header_branch
                %180 = sbr.rel (%p178) target = $region80
              $region77: #{custom-call.40} parent=72 // loop_body
                %v184 = vld [vmem:[%s182] sm:$0xf]
                %185 = vst [vmem:[%s183] sm:$0xf] %v184
              $region78: #{custom-call.40} parent=72 // loop_footer
                %s181 = sadd.s32 1, %s177
              $region79: #{custom-call.40} parent=72 // loop_footer_branch
                %176 = sbr.rel target = $region75
              $region80: #{custom-call.40} parent=72 // loop_exit
                _
            $region73: #{custom-call.40} parent=57 // pred_fallthru
              _
          $region58: #{custom-call.40} parent=53 // pred_fallthru
            _
          // Predicated region
          $region59: #{custom-call.40} parent=53 // pred_check
            _
          $region60: #{custom-call.40} parent=53 // pred_check_branch
            %161 = sbr.rel (0) target = $region62
          $region61: #{custom-call.40} parent=53 // pred_region
            loop: start=0, step=1, limit=1
            $region63: #{custom-call.40} parent=61 // loop_pre_header
              _
            $region64: #{custom-call.40} parent=61 // loop_header
              %s164 = sphi 0, %s168
              %p165 = scmp.ge.s32.totalorder %s164, 1
              %s169 = sphi %s151, %s151
              %s170 = sphi %s155, %s155
            $region65: #{custom-call.40} parent=61 // loop_header_branch
              %167 = sbr.rel (%p165) target = $region69
            $region66: #{custom-call.40} parent=61 // loop_body
              %v171 = vld [vmem:[%s169] sm:$0xf]
              %172 = vst [vmem:[%s170] sm:$0xf] %v171
            $region67: #{custom-call.40} parent=61 // loop_footer
              %s168 = sadd.s32 1, %s164
            $region68: #{custom-call.40} parent=61 // loop_footer_branch
              %163 = sbr.rel target = $region64
            $region69: #{custom-call.40} parent=61 // loop_exit
              _
          $region62: #{custom-call.40} parent=53 // pred_fallthru
            _
        $region54: #{custom-call.40} parent=49 // pred_fallthru
          _
        %186 = vnop
      $region50: #{custom-call.40} parent=5 // pred_fallthru
        _
      %p187 = scmp.le.s32.totalorder 2, %s3
      // Predicated region
      $region81: #{custom-call.40} parent=5 // pred_check
        %p188 = pneg %p187
      $region82: #{custom-call.40} parent=5 // pred_check_branch
        %190 = sbr.rel (%p188) target = $region84
      $region83: #{custom-call.40} parent=5 // pred_region
        %s191 = ssub.s32 %s3, 2
        %s192 = sand.u32 %s9, 1
        %s193 = sand.u32 %s9, 1
        %s194 = smul.addr %s193, 4
        %s195 = scalar_lea.vmem [#allocation3], %s194
      $region84: #{custom-call.40} parent=5 // pred_fallthru
        _
    $region6: #{custom-call.40} parent=1 // loop_footer
      %s7 = sadd.s32 1, %s3
    $region7: #{custom-call.40} parent=1 // loop_footer_branch
      %2 = sbr.rel target = $region3
    $region8: #{custom-call.40} parent=1 // loop_exit
      _

// kernel: custom-call.32
$region0: #{custom-call.32}
  %s0 = inlined_call_operand.hbm [shape: pred[2,17], index: 0, kind: output, shape index: {}]

// kernel: custom-call.37
$region0: #{custom-call.37}
  %s0 = inlined_call_operand.vmem [shape: f32[2,17,4,4], index: 0, kind: input, shape index: {}]
  %s1 = inlined_call_operand.vmem [shape: f32[2,17,4,4], index: 1, kind: output, shape index: {}]
  $region1: #{custom-call.37} parent=0
    #allocation0 [shape = 'u8[4096]{0}', space=vmem, size = 0x1000, scoped, tag = 'operand span for operand 0']
    #allocation1 [shape = 'u8[4096]{0}', space=vmem, size = 0x1000, scoped, tag = 'packed  for operand 0']
    #allocation2 [shape = 'u8[4096]{0}', space=vmem, size = 0x1000, scoped, tag = 'operand span for operand 1']
    #allocation3 [shape = 'u8[4096]{0}', space=vmem, size = 0x1000, scoped, tag = 'packed  for operand 1']
    loop: start=0, step=1, limit=36
    $region2: #{custom-call.37} parent=1 // loop_pre_header
      _
    $region3: #{custom-call.37} parent=1 // loop_header
      %s3 = sphi 0, %s7
      %p4 = scmp.ge.s32.totalorder %s3, 36
      %s10 = sphi 0, %s36
      %s11 = sphi 0, %s32
      %s12 = sphi 0, %s28
      %s13 = sphi 0, %s24
      %s14 = sphi 0, %s10
      %s15 = sphi 0, %s11
      %s16 = sphi 0, %s12
      %s17 = sphi 0, %s13
      %s18 = sphi 0, %s14
      %s19 = sphi 0, %s15
      %s20 = sphi 0, %s16
      %s21 = sphi 0, %s17
    $region4: #{custom-call.37} parent=1 // loop_header_branch
      %6 = sbr.rel (%p4) target = $region8
    $region5: #{custom-call.37} parent=1 // loop_body
      %s8 = ssub.s32 %s3, 1
      %s9 = ssub.s32 %s3, 2
      %s22 = sadd.s32 1, %s13
      %p23 = scmp.ge.s32.totalorder %s22, 1
      %s24 = scalar_select %p23, 0, %s22
      %s25 = sadd.s32 1, %s12
      %s26 = scalar_select %p23, %s25, %s12
      %p27 = scmp.ge.s32.totalorder %s26, 1
      %s28 = scalar_select %p27, 0, %s26
      %s29 = sadd.s32 1, %s11
      %s30 = scalar_select %p27, %s29, %s11
      %p31 = scmp.ge.s32.totalorder %s30, 17
      %s32 = scalar_select %p31, 0, %s30
      %s33 = sadd.s32 1, %s10
      %s34 = scalar_select %p31, %s33, %s10
      %p35 = scmp.ge.s32.totalorder %s34, 2
      %s36 = scalar_select %p35, 0, %s34
      %p37 = scmp.le.s32.totalorder 1, %s3
      %p38 = scmp.lt.s32.totalorder %s3, 35
      %p39 = pnand %p37, %p38
      %p40 = pneg %p39
      // Predicated region
      $region9: #{custom-call.37} parent=5 // pred_check
        _
      $region10: #{custom-call.37} parent=5 // pred_check_branch
        %42 = sbr.rel (%p39) target = $region12
      $region11: #{custom-call.37} parent=5 // pred_region
        %s43 = ssub.s32 %s3, 1
      $region12: #{custom-call.37} parent=5 // pred_fallthru
        _
      %p44 = scmp.lt.s32.totalorder %s3, 34
      // Predicated region
      $region13: #{custom-call.37} parent=5 // pred_check
        %p45 = pneg %p44
      $region14: #{custom-call.37} parent=5 // pred_check_branch
        %47 = sbr.rel (%p45) target = $region16
      $region15: #{custom-call.37} parent=5 // pred_region
        %s48 = sand.u32 %s3, 1
        %s49 = sand.u32 %s3, 1
        %s50 = smul.addr %s49, 4
        %s51 = scalar_lea.vmem [#allocation1], %s50
        %s52 = sadd.s32 %s13, %s12
        %s53 = sadd.s32 %s52, %s11
        %s54 = smul.addr %s10, 17
        %s55 = sadd.s32 %s53, %s54
        %s56 = smul.addr %s55, 4
        %s57 = scalar_lea.vmem %s0, %s56
        // Predicated region
        $region17: #{custom-call.37} parent=15 // pred_check
          _
        $region18: #{custom-call.37} parent=15 // pred_check_branch
          %59 = sbr.rel (0) target = $region20
        $region19: #{custom-call.37} parent=15 // pred_region
          // Predicated region
          $region21: #{custom-call.37} parent=19 // pred_check
            _
          $region22: #{custom-call.37} parent=19 // pred_check_branch
            %61 = sbr.rel target = $region24
          $region23: #{custom-call.37} parent=19 // pred_region
            // Predicated region
            $region36: #{custom-call.37} parent=23 // pred_check
              _
            $region37: #{custom-call.37} parent=23 // pred_check_branch
              %76 = sbr.rel (0) target = $region39
            $region38: #{custom-call.37} parent=23 // pred_region
              loop: start=0, step=1, limit=1
              $region40: #{custom-call.37} parent=38 // loop_pre_header
                _
              $region41: #{custom-call.37} parent=38 // loop_header
                %s79 = sphi 0, %s83
                %p80 = scmp.ge.s32.totalorder %s79, 1
                %s84 = sphi %s57, %s57
                %s85 = sphi %s51, %s51
              $region42: #{custom-call.37} parent=38 // loop_header_branch
                %82 = sbr.rel (%p80) target = $region46
              $region43: #{custom-call.37} parent=38 // loop_body
                %v86 = vld [vmem:[%s84] sm:$0xf]
                %87 = vst [vmem:[%s85] sm:$0xf] %v86
              $region44: #{custom-call.37} parent=38 // loop_footer
                %s83 = sadd.s32 1, %s79
              $region45: #{custom-call.37} parent=38 // loop_footer_branch
                %78 = sbr.rel target = $region41
              $region46: #{custom-call.37} parent=38 // loop_exit
                _
            $region39: #{custom-call.37} parent=23 // pred_fallthru
              _
          $region24: #{custom-call.37} parent=19 // pred_fallthru
            _
          // Predicated region
          $region25: #{custom-call.37} parent=19 // pred_check
            _
          $region26: #{custom-call.37} parent=19 // pred_check_branch
            %63 = sbr.rel (0) target = $region28
          $region27: #{custom-call.37} parent=19 // pred_region
            loop: start=0, step=1, limit=1
            $region29: #{custom-call.37} parent=27 // loop_pre_header
              _
            $region30: #{custom-call.37} parent=27 // loop_header
              %s66 = sphi 0, %s70
              %p67 = scmp.ge.s32.totalorder %s66, 1
              %s71 = sphi %s57, %s57
              %s72 = sphi %s51, %s51
            $region31: #{custom-call.37} parent=27 // loop_header_branch
              %69 = sbr.rel (%p67) target = $region35
            $region32: #{custom-call.37} parent=27 // loop_body
              %v73 = vld [vmem:[%s71] sm:$0xf]
              %74 = vst [vmem:[%s72] sm:$0xf] %v73
            $region33: #{custom-call.37} parent=27 // loop_footer
              %s70 = sadd.s32 1, %s66
            $region34: #{custom-call.37} parent=27 // loop_footer_branch
              %65 = sbr.rel target = $region30
            $region35: #{custom-call.37} parent=27 // loop_exit
              _
          $region28: #{custom-call.37} parent=19 // pred_fallthru
            _
        $region20: #{custom-call.37} parent=15 // pred_fallthru
          _
        %88 = vnop
      $region16: #{custom-call.37} parent=5 // pred_fallthru
        _
      %p89 = scmp.le.s32.totalorder 1, %s3
      %p90 = scmp.lt.s32.totalorder %s3, 35
      %p91 = pnand %p89, %p90
      %p92 = pneg %p91
      // Predicated region
      $region47: #{custom-call.37} parent=5 // pred_check
        _
      $region48: #{custom-call.37} parent=5 // pred_check_branch
        %94 = sbr.rel (%p91) target = $region50
      $region49: #{custom-call.37} parent=5 // pred_region
        %s95 = ssub.s32 %s3, 1
        %s96 = sand.u32 %s8, 1
        %s97 = sand.u32 %s8, 1
        %s98 = smul.addr %s97, 4
        %s99 = scalar_lea.vmem [#allocation1], %s98
        %s100 = sand.u32 %s8, 1
        %s101 = sand.u32 %s8, 1
        %s102 = smul.addr %s101, 4
        %s103 = scalar_lea.vmem [#allocation1], %s102
        %s104 = sand.u32 %s8, 1
        %s105 = sand.u32 %s8, 1
        %s106 = smul.addr %s105, 4
        %s107 = scalar_lea.vmem [#allocation3], %s106
        %s109 = sshllo.u32 0, 4
        %v110 = vld [vmem:[%s103] sm:%s109]
        %111 = vst [vmem:[#allocation0] sm:%s109] %v110
        %112 = vst [vmem:[#allocation2] sm:$0xff] 0.0
        %vm113 = vcmask 7168
        %v114 = vld [vmem:[#allocation2] ss:$0 sm:$0xff]
        %v115 = vld [vmem:[#allocation0] ss:$0 sm:$0xff]
        %v116 = vmul.f32 %v114, %v114
        %117 = vadd.xlane.f32.xlu0 %v116
        %v118 = vpop.xlane.xlu0 %117
        %v119 = vsub.f32 %v115, %v118
        %v120 = vrsqrt.pop %v119
        %v121 = vld [vmem:[#allocation0] sm:$0xff]
        %v122 = vld [vmem:[#allocation2] sm:$0xff]
        %v123 = vmul.f32 %v122, %v114
        %124 = vadd.xlane.f32.xlu0 %v123
        %v125 = vpop.xlane.xlu0 %124
        %v126 = vsub.f32 %v121, %v125
        %v127 = vmul.f32 %v126, %v120
        %v128 = vsel %vm113, %v127, 0.0
        %v129 = vadd.f32 %v122, %v128
        %130 = vst [vmem:[#allocation2] sm:$0xff] %v129
        %vm131 = vcmask 15368
        %s132 = scalar_lea.vmem [#allocation2], 1
        %v133 = vld [vmem:[%s132] ss:$0 sm:$0xff]
        %s134 = scalar_lea.vmem [#allocation0], 1
        %v135 = vld [vmem:[%s134] ss:$0 sm:$0xff]
        %v136 = vmul.f32 %v133, %v133
        %137 = vadd.xlane.f32.xlu0 %v136
        %v138 = vpop.xlane.xlu0 %137
        %v139 = vsub.f32 %v135, %v138
        %v140 = vrsqrt.pop %v139
        %v141 = vld [vmem:[#allocation0] sm:$0xff]
        %v142 = vld [vmem:[#allocation2] sm:$0xff]
        %v143 = vmul.f32 %v142, %v133
        %144 = vadd.xlane.f32.xlu0 %v143
        %v145 = vpop.xlane.xlu0 %144
        %v146 = vsub.f32 %v141, %v145
        %v147 = vmul.f32 %v146, %v140
        %vm148 = vcmask 1047553
        %vm149 = vmand %vm131, %vm148
        %v150 = vsel %vm149, %v147, 0.0
        %v151 = vadd.f32 %v142, %v150
        %152 = vst [vmem:[#allocation2] sm:$0xff] %v151
        %vm153 = vcmask 23568
        %s154 = scalar_lea.vmem [#allocation2], 2
        %v155 = vld [vmem:[%s154] ss:$0 sm:$0xff]
        %s156 = scalar_lea.vmem [#allocation0], 2
        %v157 = vld [vmem:[%s156] ss:$0 sm:$0xff]
        %v158 = vmul.f32 %v155, %v155
        %159 = vadd.xlane.f32.xlu0 %v158
        %v160 = vpop.xlane.xlu0 %159
        %v161 = vsub.f32 %v157, %v160
        %v162 = vrsqrt.pop %v161
        %v163 = vld [vmem:[#allocation0] sm:$0xff]
        %v164 = vld [vmem:[#allocation2] sm:$0xff]
        %v165 = vmul.f32 %v164, %v155
        %166 = vadd.xlane.f32.xlu0 %v165
        %v167 = vpop.xlane.xlu0 %166
        %v168 = vsub.f32 %v163, %v167
        %v169 = vmul.f32 %v168, %v162
        %vm170 = vcmask 1047554
        %vm171 = vmand %vm153, %vm170
        %v172 = vsel %vm171, %v169, 0.0
        %v173 = vadd.f32 %v164, %v172
        %174 = vst [vmem:[#allocation2] sm:$0xff] %v173
        %vm175 = vcmask 31768
        %s176 = scalar_lea.vmem [#allocation2], 3
        %v177 = vld [vmem:[%s176] ss:$0 sm:$0xff]
        %s178 = scalar_lea.vmem [#allocation0], 3
        %v179 = vld [vmem:[%s178] ss:$0 sm:$0xff]
        %v180 = vmul.f32 %v177, %v177
        %181 = vadd.xlane.f32.xlu0 %v180
        %v182 = vpop.xlane.xlu0 %181
        %v183 = vsub.f32 %v179, %v182
        %v184 = vrsqrt.pop %v183
        %v185 = vld [vmem:[#allocation0] sm:$0xff]
        %v186 = vld [vmem:[#allocation2] sm:$0xff]
        %v187 = vmul.f32 %v186, %v177
        %188 = vadd.xlane.f32.xlu0 %v187
        %v189 = vpop.xlane.xlu0 %188
        %v190 = vsub.f32 %v185, %v189
        %v191 = vmul.f32 %v190, %v184
        %vm192 = vcmask 1047555
        %vm193 = vmand %vm175, %vm192
        %v194 = vsel %vm193, %v191, 0.0
        %v195 = vadd.f32 %v186, %v194
        %196 = vst [vmem:[#allocation2] sm:$0xff] %v195
        %s198 = sshllo.u32 0, 4
        %v200 = vld [vmem:[#allocation2] sm:%s198]
        %s201 = sshllo.u32 0, 4
        %202 = vst [vmem:[%s107] sm:%s201] %v200
        %s203 = sand.u32 %s8, 1
        %s204 = sand.u32 %s8, 1
        %s205 = smul.addr %s204, 4
        %s206 = scalar_lea.vmem [#allocation3], %s205
        %s207 = sadd.s32 %s17, %s16
        %s208 = sadd.s32 %s207, %s15
        %s209 = smul.addr %s14, 17
        %s210 = sadd.s32 %s208, %s209
        %s211 = smul.addr %s210, 4
        %s212 = scalar_lea.vmem %s1, %s211
        // Predicated region
        $region51: #{custom-call.37} parent=49 // pred_check
          _
        $region52: #{custom-call.37} parent=49 // pred_check_branch
          %214 = sbr.rel (0) target = $region54
        $region53: #{custom-call.37} parent=49 // pred_region
          // Predicated region
          $region55: #{custom-call.37} parent=53 // pred_check
            _
          $region56: #{custom-call.37} parent=53 // pred_check_branch
            %216 = sbr.rel target = $region58
          $region57: #{custom-call.37} parent=53 // pred_region
            // Predicated region
            $region70: #{custom-call.37} parent=57 // pred_check
              _
            $region71: #{custom-call.37} parent=57 // pred_check_branch
              %231 = sbr.rel (0) target = $region73
            $region72: #{custom-call.37} parent=57 // pred_region
              loop: start=0, step=1, limit=1
              $region74: #{custom-call.37} parent=72 // loop_pre_header
                _
              $region75: #{custom-call.37} parent=72 // loop_header
                %s234 = sphi 0, %s238
                %p235 = scmp.ge.s32.totalorder %s234, 1
                %s239 = sphi %s206, %s206
                %s240 = sphi %s212, %s212
              $region76: #{custom-call.37} parent=72 // loop_header_branch
                %237 = sbr.rel (%p235) target = $region80
              $region77: #{custom-call.37} parent=72 // loop_body
                %v241 = vld [vmem:[%s239] sm:$0xf]
                %242 = vst [vmem:[%s240] sm:$0xf] %v241
              $region78: #{custom-call.37} parent=72 // loop_footer
                %s238 = sadd.s32 1, %s234
              $region79: #{custom-call.37} parent=72 // loop_footer_branch
                %233 = sbr.rel target = $region75
              $region80: #{custom-call.37} parent=72 // loop_exit
                _
            $region73: #{custom-call.37} parent=57 // pred_fallthru
              _
          $region58: #{custom-call.37} parent=53 // pred_fallthru
            _
          // Predicated region
          $region59: #{custom-call.37} parent=53 // pred_check
            _
          $region60: #{custom-call.37} parent=53 // pred_check_branch
            %218 = sbr.rel (0) target = $region62
          $region61: #{custom-call.37} parent=53 // pred_region
            loop: start=0, step=1, limit=1
            $region63: #{custom-call.37} parent=61 // loop_pre_header
              _
            $region64: #{custom-call.37} parent=61 // loop_header
              %s221 = sphi 0, %s225
              %p222 = scmp.ge.s32.totalorder %s221, 1
              %s226 = sphi %s206, %s206
              %s227 = sphi %s212, %s212
            $region65: #{custom-call.37} parent=61 // loop_header_branch
              %224 = sbr.rel (%p222) target = $region69
            $region66: #{custom-call.37} parent=61 // loop_body
              %v228 = vld [vmem:[%s226] sm:$0xf]
              %229 = vst [vmem:[%s227] sm:$0xf] %v228
            $region67: #{custom-call.37} parent=61 // loop_footer
              %s225 = sadd.s32 1, %s221
            $region68: #{custom-call.37} parent=61 // loop_footer_branch
              %220 = sbr.rel target = $region64
            $region69: #{custom-call.37} parent=61 // loop_exit
              _
          $region62: #{custom-call.37} parent=53 // pred_fallthru
            _
        $region54: #{custom-call.37} parent=49 // pred_fallthru
          _
        %243 = vnop
      $region50: #{custom-call.37} parent=5 // pred_fallthru
        _
      %p244 = scmp.le.s32.totalorder 2, %s3
      // Predicated region
      $region81: #{custom-call.37} parent=5 // pred_check
        %p245 = pneg %p244
      $region82: #{custom-call.37} parent=5 // pred_check_branch
        %247 = sbr.rel (%p245) target = $region84
      $region83: #{custom-call.37} parent=5 // pred_region
        %s248 = ssub.s32 %s3, 2
        %s249 = sand.u32 %s9, 1
        %s250 = sand.u32 %s9, 1
        %s251 = smul.addr %s250, 4
        %s252 = scalar_lea.vmem [#allocation3], %s251
      $region84: #{custom-call.37} parent=5 // pred_fallthru
        _
    $region6: #{custom-call.37} parent=1 // loop_footer
      %s7 = sadd.s32 1, %s3
    $region7: #{custom-call.37} parent=1 // loop_footer_branch
      %2 = sbr.rel target = $region3
    $region8: #{custom-call.37} parent=1 // loop_exit
      _

// kernel: custom-call.38
$region0: #{custom-call.38}
  %s0 = inlined_call_operand.vmem [shape: f32[2,17,1,4,4], index: 0, kind: input, shape index: {}]
  %s1 = inlined_call_operand.vmem [shape: f32[2,17,1,4,4], index: 1, kind: output, shape index: {}]
  $region1: #{custom-call.38} parent=0
    #allocation0 [shape = 'u8[4096]{0}', space=vmem, size = 0x1000, scoped, tag = 'operand span for operand 0']
    #allocation1 [shape = 'u8[4096]{0}', space=vmem, size = 0x1000, scoped, tag = 'packed  for operand 0']
    #allocation2 [shape = 'u8[4096]{0}', space=vmem, size = 0x1000, scoped, tag = 'operand span for operand 1']
    #allocation3 [shape = 'u8[4096]{0}', space=vmem, size = 0x1000, scoped, tag = 'packed  for operand 1']
    loop: start=0, step=1, limit=36
    $region2: #{custom-call.38} parent=1 // loop_pre_header
      _
    $region3: #{custom-call.38} parent=1 // loop_header
      %s3 = sphi 0, %s7
      %p4 = scmp.ge.s32.totalorder %s3, 36
      %s10 = sphi 0, %s43
      %s11 = sphi 0, %s39
      %s12 = sphi 0, %s35
      %s13 = sphi 0, %s31
      %s14 = sphi 0, %s27
      %s15 = sphi 0, %s10
      %s16 = sphi 0, %s11
      %s17 = sphi 0, %s12
      %s18 = sphi 0, %s13
      %s19 = sphi 0, %s14
      %s20 = sphi 0, %s15
      %s21 = sphi 0, %s16
      %s22 = sphi 0, %s17
      %s23 = sphi 0, %s18
      %s24 = sphi 0, %s19
    $region4: #{custom-call.38} parent=1 // loop_header_branch
      %6 = sbr.rel (%p4) target = $region8
    $region5: #{custom-call.38} parent=1 // loop_body
      %s8 = ssub.s32 %s3, 1
      %s9 = ssub.s32 %s3, 2
      %s25 = sadd.s32 1, %s14
      %p26 = scmp.ge.s32.totalorder %s25, 1
      %s27 = scalar_select %p26, 0, %s25
      %s28 = sadd.s32 1, %s13
      %s29 = scalar_select %p26, %s28, %s13
      %p30 = scmp.ge.s32.totalorder %s29, 1
      %s31 = scalar_select %p30, 0, %s29
      %s32 = sadd.s32 1, %s12
      %s33 = scalar_select %p30, %s32, %s12
      %p34 = scmp.ge.s32.totalorder %s33, 1
      %s35 = scalar_select %p34, 0, %s33
      %s36 = sadd.s32 1, %s11
      %s37 = scalar_select %p34, %s36, %s11
      %p38 = scmp.ge.s32.totalorder %s37, 17
      %s39 = scalar_select %p38, 0, %s37
      %s40 = sadd.s32 1, %s10
      %s41 = scalar_select %p38, %s40, %s10
      %p42 = scmp.ge.s32.totalorder %s41, 2
      %s43 = scalar_select %p42, 0, %s41
      %p44 = scmp.le.s32.totalorder 1, %s3
      %p45 = scmp.lt.s32.totalorder %s3, 35
      %p46 = pnand %p44, %p45
      %p47 = pneg %p46
      // Predicated region
      $region9: #{custom-call.38} parent=5 // pred_check
        _
      $region10: #{custom-call.38} parent=5 // pred_check_branch
        %49 = sbr.rel (%p46) target = $region12
      $region11: #{custom-call.38} parent=5 // pred_region
        %s50 = ssub.s32 %s3, 1
      $region12: #{custom-call.38} parent=5 // pred_fallthru
        _
      %p51 = scmp.lt.s32.totalorder %s3, 34
      // Predicated region
      $region13: #{custom-call.38} parent=5 // pred_check
        %p52 = pneg %p51
      $region14: #{custom-call.38} parent=5 // pred_check_branch
        %54 = sbr.rel (%p52) target = $region16
      $region15: #{custom-call.38} parent=5 // pred_region
        %s55 = sand.u32 %s3, 1
        %s56 = sand.u32 %s3, 1
        %s57 = smul.addr %s56, 4
        %s58 = scalar_lea.vmem [#allocation1], %s57
        %s59 = sadd.s32 %s14, %s13
        %s60 = sadd.s32 %s59, %s12
        %s61 = sadd.s32 %s60, %s11
        %s62 = smul.addr %s10, 17
        %s63 = sadd.s32 %s61, %s62
        %s64 = smul.addr %s63, 4
        %s65 = scalar_lea.vmem %s0, %s64
        // Predicated region
        $region17: #{custom-call.38} parent=15 // pred_check
          _
        $region18: #{custom-call.38} parent=15 // pred_check_branch
          %67 = sbr.rel (0) target = $region20
        $region19: #{custom-call.38} parent=15 // pred_region
          // Predicated region
          $region21: #{custom-call.38} parent=19 // pred_check
            _
          $region22: #{custom-call.38} parent=19 // pred_check_branch
            %69 = sbr.rel target = $region24
          $region23: #{custom-call.38} parent=19 // pred_region
            // Predicated region
            $region36: #{custom-call.38} parent=23 // pred_check
              _
            $region37: #{custom-call.38} parent=23 // pred_check_branch
              %84 = sbr.rel (0) target = $region39
            $region38: #{custom-call.38} parent=23 // pred_region
              loop: start=0, step=1, limit=1
              $region40: #{custom-call.38} parent=38 // loop_pre_header
                _
              $region41: #{custom-call.38} parent=38 // loop_header
                %s87 = sphi 0, %s91
                %p88 = scmp.ge.s32.totalorder %s87, 1
                %s92 = sphi %s65, %s65
                %s93 = sphi %s58, %s58
              $region42: #{custom-call.38} parent=38 // loop_header_branch
                %90 = sbr.rel (%p88) target = $region46
              $region43: #{custom-call.38} parent=38 // loop_body
                %v94 = vld [vmem:[%s92] sm:$0xf]
                %95 = vst [vmem:[%s93] sm:$0xf] %v94
              $region44: #{custom-call.38} parent=38 // loop_footer
                %s91 = sadd.s32 1, %s87
              $region45: #{custom-call.38} parent=38 // loop_footer_branch
                %86 = sbr.rel target = $region41
              $region46: #{custom-call.38} parent=38 // loop_exit
                _
            $region39: #{custom-call.38} parent=23 // pred_fallthru
              _
          $region24: #{custom-call.38} parent=19 // pred_fallthru
            _
          // Predicated region
          $region25: #{custom-call.38} parent=19 // pred_check
            _
          $region26: #{custom-call.38} parent=19 // pred_check_branch
            %71 = sbr.rel (0) target = $region28
          $region27: #{custom-call.38} parent=19 // pred_region
            loop: start=0, step=1, limit=1
            $region29: #{custom-call.38} parent=27 // loop_pre_header
              _
            $region30: #{custom-call.38} parent=27 // loop_header
              %s74 = sphi 0, %s78
              %p75 = scmp.ge.s32.totalorder %s74, 1
              %s79 = sphi %s65, %s65
              %s80 = sphi %s58, %s58
            $region31: #{custom-call.38} parent=27 // loop_header_branch
              %77 = sbr.rel (%p75) target = $region35
            $region32: #{custom-call.38} parent=27 // loop_body
              %v81 = vld [vmem:[%s79] sm:$0xf]
              %82 = vst [vmem:[%s80] sm:$0xf] %v81
            $region33: #{custom-call.38} parent=27 // loop_footer
              %s78 = sadd.s32 1, %s74
            $region34: #{custom-call.38} parent=27 // loop_footer_branch
              %73 = sbr.rel target = $region30
            $region35: #{custom-call.38} parent=27 // loop_exit
              _
          $region28: #{custom-call.38} parent=19 // pred_fallthru
            _
        $region20: #{custom-call.38} parent=15 // pred_fallthru
          _
        %96 = vnop
      $region16: #{custom-call.38} parent=5 // pred_fallthru
        _
      %p97 = scmp.le.s32.totalorder 1, %s3
      %p98 = scmp.lt.s32.totalorder %s3, 35
      %p99 = pnand %p97, %p98
      %p100 = pneg %p99
      // Predicated region
      $region47: #{custom-call.38} parent=5 // pred_check
        _
      $region48: #{custom-call.38} parent=5 // pred_check_branch
        %102 = sbr.rel (%p99) target = $region50
      $region49: #{custom-call.38} parent=5 // pred_region
        #allocation4 [shape = 'f32[4,4]{1,0}', space=vmem, size = 0x1000, scoped, tag = 'rescaled input a']
        %s103 = ssub.s32 %s3, 1
        %s104 = sand.u32 %s8, 1
        %s105 = sand.u32 %s8, 1
        %s106 = smul.addr %s105, 4
        %s107 = scalar_lea.vmem [#allocation1], %s106
        %s108 = sand.u32 %s8, 1
        %s109 = sand.u32 %s8, 1
        %s110 = smul.addr %s109, 4
        %s111 = scalar_lea.vmem [#allocation1], %s110
        %s112 = sand.u32 %s8, 1
        %s113 = sand.u32 %s8, 1
        %s114 = smul.addr %s113, 4
        %s115 = scalar_lea.vmem [#allocation3], %s114
        %s117 = sshllo.u32 0, 4
        %v118 = vld [vmem:[%s111] sm:%s117]
        %119 = vst [vmem:[#allocation0] sm:%s117] %v118
        %v120 = vlaneseq
        %v121 = vand.u32 %v120, 127
        %vm122 = vcmp.lt.s32.totalorder %v121, 4
        %v123 = vlaneseq
        %v124 = vshrl.u32 %v123, 7
        %vm126 = vcmp.eq.s32.totalorder %v124, %v121
        %v127 = vld [vmem:[#allocation0] sm:$0xff]
        %v128 = vsel %vm126, %v127, 0.0
        %129 = vadd.xlane.f32.xlu0 %v128
        %v130 = vpop.xlane.xlu0 %129
        %vm131 = vcmp.ge.s32.totalorder %v124, %v121
        %vm132 = vmand %vm131, %vm122
        %v133 = vsel %vm132, %v127, 0.0
        %v134 = vrcp.pop %v130
        %v135 = vmul.f32 %v133, %v134
        %136 = vst [vmem:[#allocation4] sm:$0xff] %v135
        %v137 = vlaneseq
        %v138 = vand.u32 %v137, 127
        %v139 = vlaneseq
        %v140 = vshrl.u32 %v139, 7
        %vm142 = vcmp.eq.s32.totalorder %v138, %v140
        %v143 = vlaneseq
        %v144 = vand.u32 %v143, 127
        %vm145 = vcmp.eq.s32.totalorder %v144, 0
        %v146 = vsel %vm145, 1.0, -1.0
        %v147 = vsel %vm142, %v146, 0.0
        %s148 = scalar_lea.vmem [#allocation4], 1
        %v149 = vld [vmem:[%s148] ss:$0 sm:$0xff]
        %v150 = vxor.u32 %v149, 2147483648
        %v151 = vlaneseq
        %v152 = vand.u32 %v151, 127
        %vm153 = vcmp.eq.s32.totalorder %v152, 1
        %v154 = vmul.f32 %v150, %v147
        %155 = vadd.xlane.f32.xlu0 %v154
        %v156 = vpop.xlane.xlu0 %155
        %v157 = vsel %vm153, %v156, %v147
        %s158 = scalar_lea.vmem [#allocation4], 2
        %v159 = vld [vmem:[%s158] ss:$0 sm:$0xff]
        %v160 = vxor.u32 %v159, 2147483648
        %v161 = vlaneseq
        %v162 = vand.u32 %v161, 127
        %vm163 = vcmp.eq.s32.totalorder %v162, 2
        %v164 = vmul.f32 %v160, %v157
        %165 = vadd.xlane.f32.xlu0 %v164
        %v166 = vpop.xlane.xlu0 %165
        %v167 = vsel %vm163, %v166, %v157
        %s168 = scalar_lea.vmem [#allocation4], 3
        %v169 = vld [vmem:[%s168] ss:$0 sm:$0xff]
        %v170 = vxor.u32 %v169, 2147483648
        %v171 = vlaneseq
        %v172 = vand.u32 %v171, 127
        %vm173 = vcmp.eq.s32.totalorder %v172, 3
        %v174 = vmul.f32 %v170, %v167
        %175 = vadd.xlane.f32.xlu0 %v174
        %v176 = vpop.xlane.xlu0 %175
        %v177 = vsel %vm173, %v176, %v167
        %v178 = vrcp.pop %v130
        %v179 = vmul.f32 %v177, %v178
        %vm180 = vweird.f32 %v130
        %v181 = vsel %vm180, %v177, %v179
        %182 = vst [vmem:[#allocation2] sm:$0xff] %v181
        %s184 = sshllo.u32 0, 4
        %v186 = vld [vmem:[#allocation2] sm:%s184]
        %s187 = sshllo.u32 0, 4
        %188 = vst [vmem:[%s115] sm:%s187] %v186
        %s189 = sand.u32 %s8, 1
        %s190 = sand.u32 %s8, 1
        %s191 = smul.addr %s190, 4
        %s192 = scalar_lea.vmem [#allocation3], %s191
        %s193 = sadd.s32 %s19, %s18
        %s194 = sadd.s32 %s193, %s17
        %s195 = sadd.s32 %s194, %s16
        %s196 = smul.addr %s15, 17
        %s197 = sadd.s32 %s195, %s196
        %s198 = smul.addr %s197, 4
        %s199 = scalar_lea.vmem %s1, %s198
        // Predicated region
        $region51: #{custom-call.38} parent=49 // pred_check
          _
        $region52: #{custom-call.38} parent=49 // pred_check_branch
          %201 = sbr.rel (0) target = $region54
        $region53: #{custom-call.38} parent=49 // pred_region
          // Predicated region
          $region55: #{custom-call.38} parent=53 // pred_check
            _
          $region56: #{custom-call.38} parent=53 // pred_check_branch
            %203 = sbr.rel target = $region58
          $region57: #{custom-call.38} parent=53 // pred_region
            // Predicated region
            $region70: #{custom-call.38} parent=57 // pred_check
              _
            $region71: #{custom-call.38} parent=57 // pred_check_branch
              %218 = sbr.rel (0) target = $region73
            $region72: #{custom-call.38} parent=57 // pred_region
              loop: start=0, step=1, limit=1
              $region74: #{custom-call.38} parent=72 // loop_pre_header
                _
              $region75: #{custom-call.38} parent=72 // loop_header
                %s221 = sphi 0, %s225
                %p222 = scmp.ge.s32.totalorder %s221, 1
                %s226 = sphi %s192, %s192
                %s227 = sphi %s199, %s199
              $region76: #{custom-call.38} parent=72 // loop_header_branch
                %224 = sbr.rel (%p222) target = $region80
              $region77: #{custom-call.38} parent=72 // loop_body
                %v228 = vld [vmem:[%s226] sm:$0xf]
                %229 = vst [vmem:[%s227] sm:$0xf] %v228
              $region78: #{custom-call.38} parent=72 // loop_footer
                %s225 = sadd.s32 1, %s221
              $region79: #{custom-call.38} parent=72 // loop_footer_branch
                %220 = sbr.rel target = $region75
              $region80: #{custom-call.38} parent=72 // loop_exit
                _
            $region73: #{custom-call.38} parent=57 // pred_fallthru
              _
          $region58: #{custom-call.38} parent=53 // pred_fallthru
            _
          // Predicated region
          $region59: #{custom-call.38} parent=53 // pred_check
            _
          $region60: #{custom-call.38} parent=53 // pred_check_branch
            %205 = sbr.rel (0) target = $region62
          $region61: #{custom-call.38} parent=53 // pred_region
            loop: start=0, step=1, limit=1
            $region63: #{custom-call.38} parent=61 // loop_pre_header
              _
            $region64: #{custom-call.38} parent=61 // loop_header
              %s208 = sphi 0, %s212
              %p209 = scmp.ge.s32.totalorder %s208, 1
              %s213 = sphi %s192, %s192
              %s214 = sphi %s199, %s199
            $region65: #{custom-call.38} parent=61 // loop_header_branch
              %211 = sbr.rel (%p209) target = $region69
            $region66: #{custom-call.38} parent=61 // loop_body
              %v215 = vld [vmem:[%s213] sm:$0xf]
              %216 = vst [vmem:[%s214] sm:$0xf] %v215
            $region67: #{custom-call.38} parent=61 // loop_footer
              %s212 = sadd.s32 1, %s208
            $region68: #{custom-call.38} parent=61 // loop_footer_branch
              %207 = sbr.rel target = $region64
            $region69: #{custom-call.38} parent=61 // loop_exit
              _
          $region62: #{custom-call.38} parent=53 // pred_fallthru
            _
        $region54: #{custom-call.38} parent=49 // pred_fallthru
          _
        %230 = vnop
      $region50: #{custom-call.38} parent=5 // pred_fallthru
        _
      %p231 = scmp.le.s32.totalorder 2, %s3
      // Predicated region
      $region81: #{custom-call.38} parent=5 // pred_check
        %p232 = pneg %p231
      $region82: #{custom-call.38} parent=5 // pred_check_branch
        %234 = sbr.rel (%p232) target = $region84
      $region83: #{custom-call.38} parent=5 // pred_region
        %s235 = ssub.s32 %s3, 2
        %s236 = sand.u32 %s9, 1
        %s237 = sand.u32 %s9, 1
        %s238 = smul.addr %s237, 4
        %s239 = scalar_lea.vmem [#allocation3], %s238
      $region84: #{custom-call.38} parent=5 // pred_fallthru
        _
    $region6: #{custom-call.38} parent=1 // loop_footer
      %s7 = sadd.s32 1, %s3
    $region7: #{custom-call.38} parent=1 // loop_footer_branch
      %2 = sbr.rel target = $region3
    $region8: #{custom-call.38} parent=1 // loop_exit
      _

// kernel: custom-call.16
$region0: #{custom-call.16}
  %s0 = inlined_call_operand.vmem [shape: f32[2,17,2,2], index: 0, kind: input, shape index: {}]
  %s1 = inlined_call_operand.vmem [shape: f32[2,17,2,2], index: 1, kind: input, shape index: {}]
  %s2 = inlined_call_operand.vmem [shape: f32[2,17,2,2], index: 2, kind: input, shape index: {}]
  %s3 = inlined_call_operand.vmem [shape: f32[2,17,2,2], index: 3, kind: input, shape index: {}]
  %s4 = inlined_call_operand.vmem [shape: f32[2,17,2], index: 4, kind: output, shape index: {0}]
  %s5 = inlined_call_operand.vmem [shape: f32[2,17,2], index: 5, kind: output, shape index: {1}]
  %s6 = inlined_call_operand.vmem [shape: f32[2,17,2,2], index: 6, kind: output, shape index: {2}]
  %s7 = inlined_call_operand.vmem [shape: f32[2,17,2,2], index: 7, kind: output, shape index: {3}]
  %s8 = inlined_call_operand.vmem [shape: f32[2,17,2,2], index: 8, kind: output, shape index: {4}]
  %s9 = inlined_call_operand.vmem [shape: f32[2,17,2,2], index: 9, kind: output, shape index: {5}]
  %10 = xla_tuple %s4, %s5, %s6, %s7, %s8, %s9
  $region1: #{custom-call.16} parent=0
    #allocation0 [shape = 'u8[4096]{0}', space=vmem, size = 0x1000, scoped, tag = 'operand span for operand 0']
    #allocation1 [shape = 'u8[2048]{0}', space=vmem, size = 0x800, scoped, tag = 'packed  for operand 0']
    #allocation2 [shape = 'u8[4096]{0}', space=vmem, size = 0x1000, scoped, tag = 'operand span for operand 1']
    #allocation3 [shape = 'u8[2048]{0}', space=vmem, size = 0x800, scoped, tag = 'packed  for operand 1']
    #allocation4 [shape = 'u8[4096]{0}', space=vmem, size = 0x1000, scoped, tag = 'operand span for operand 2']
    #allocation5 [shape = 'u8[2048]{0}', space=vmem, size = 0x800, scoped, tag = 'packed  for operand 2']
    #allocation6 [shape = 'u8[4096]{0}', space=vmem, size = 0x1000, scoped, tag = 'operand span for operand 3']
    #allocation7 [shape = 'u8[2048]{0}', space=vmem, size = 0x800, scoped, tag = 'packed  for operand 3']
    #allocation8 [shape = 'u8[8192]{0}', space=vmem, size = 0x2000, scoped, tag = 'operand span for operand 4']
    #allocation9 [shape = 'u8[8192]{0}', space=vmem, size = 0x2000, scoped, tag = 'operand span for operand 5']
    #allocation10 [shape = 'u8[4096]{0}', space=vmem, size = 0x1000, scoped, tag = 'operand span for operand 6']
    #allocation11 [shape = 'u8[2048]{0}', space=vmem, size = 0x800, scoped, tag = 'packed  for operand 6']
    #allocation12 [shape = 'u8[4096]{0}', space=vmem, size = 0x1000, scoped, tag = 'operand span for operand 7']
    #allocation13 [shape = 'u8[2048]{0}', space=vmem, size = 0x800, scoped, tag = 'packed  for operand 7']
    #allocation14 [shape = 'u8[4096]{0}', space=vmem, size = 0x1000, scoped, tag = 'operand span for operand 8']
    #allocation15 [shape = 'u8[2048]{0}', space=vmem, size = 0x800, scoped, tag = 'packed  for operand 8']
    #allocation16 [shape = 'u8[4096]{0}', space=vmem, size = 0x1000, scoped, tag = 'operand span for operand 9']
    #allocation17 [shape = 'u8[2048]{0}', space=vmem, size = 0x800, scoped, tag = 'packed  for operand 9']
    loop: start=0, step=1, limit=36
    $region2: #{custom-call.16} parent=1 // loop_pre_header
      _
    $region3: #{custom-call.16} parent=1 // loop_header
      %s12 = sphi 0, %s16
      %p13 = scmp.ge.s32.totalorder %s12, 36
      %s19 = sphi 0, %s31
      %s20 = sphi 0, %s27
      %s21 = sphi 0, %s19
      %s22 = sphi 0, %s20
      %s23 = sphi 0, %s21
      %s24 = sphi 0, %s22
      %s38 = sphi 0, %s40
      %s41 = sphi 0, %s38
      %s42 = sphi 0, %s41
      %s58 = sphi 0, %s42
      %s68 = sphi 0, %s70
      %s71 = sphi 0, %s68
      %s72 = sphi 0, %s71
      %s88 = sphi 0, %s72
    $region4: #{custom-call.16} parent=1 // loop_header_branch
      %15 = sbr.rel (%p13) target = $region8
    $region5: #{custom-call.16} parent=1 // loop_body
      %s17 = ssub.s32 %s12, 1
      %s18 = ssub.s32 %s12, 2
      %s25 = sadd.s32 1, %s20
      %p26 = scmp.ge.s32.totalorder %s25, 17
      %s27 = scalar_select %p26, 0, %s25
      %s28 = sadd.s32 1, %s19
      %s29 = scalar_select %p26, %s28, %s19
      %p30 = scmp.ge.s32.totalorder %s29, 2
      %s31 = scalar_select %p30, 0, %s29
      %s32 = sshrl.u32 %s20, 3
      %s33 = sshrl.u32 %s27, 3
      %s34 = ssub.s32 %s19, %s31
      %s35 = ssub.s32 %s32, %s33
      %s36 = sor.u32 %s34, %s35
      %p37 = scmp.eq.s32.totalorder %s36, 0
      %s39 = sadd.s32 %s38, 1
      %s40 = scalar_select %p37, %s38, %s39
      %p43 = pneg %p37
      %p44 = scmp.eq.s32.totalorder %s12, 33
      %p45 = por %p43, %p44
      %p46 = scmp.ne.s32.totalorder %s38, %s41
      %p47 = scmp.eq.s32.totalorder %s12, 0
      %p48 = por %p46, %p47
      %p49 = scmp.ne.s32.totalorder %s38, %s41
      %p50 = scmp.eq.s32.totalorder %s17, 33
      %p51 = por %p49, %p50
      %p52 = scmp.ne.s32.totalorder %s41, %s42
      %p53 = scmp.eq.s32.totalorder %s17, 0
      %p54 = por %p52, %p53
      %p55 = scmp.ne.s32.totalorder %s41, %s42
      %p56 = scmp.eq.s32.totalorder %s18, 33
      %p57 = por %p55, %p56
      %p59 = scmp.ne.s32.totalorder %s42, %s58
      %p60 = scmp.eq.s32.totalorder %s18, 0
      %p61 = por %p59, %p60
      %s62 = sshrl.u32 %s20, 3
      %s63 = sshrl.u32 %s27, 3
      %s64 = ssub.s32 %s19, %s31
      %s65 = ssub.s32 %s62, %s63
      %s66 = sor.u32 %s64, %s65
      %p67 = scmp.eq.s32.totalorder %s66, 0
      %s69 = sadd.s32 %s68, 1
      %s70 = scalar_select %p67, %s68, %s69
      %p73 = pneg %p67
      %p74 = scmp.eq.s32.totalorder %s12, 33
      %p75 = por %p73, %p74
      %p76 = scmp.ne.s32.totalorder %s68, %s71
      %p77 = scmp.eq.s32.totalorder %s12, 0
      %p78 = por %p76, %p77
      %p79 = scmp.ne.s32.totalorder %s68, %s71
      %p80 = scmp.eq.s32.totalorder %s17, 33
      %p81 = por %p79, %p80
      %p82 = scmp.ne.s32.totalorder %s71, %s72
      %p83 = scmp.eq.s32.totalorder %s17, 0
      %p84 = por %p82, %p83
      %p85 = scmp.ne.s32.totalorder %s71, %s72
      %p86 = scmp.eq.s32.totalorder %s18, 33
      %p87 = por %p85, %p86
      %p89 = scmp.ne.s32.totalorder %s72, %s88
      %p90 = scmp.eq.s32.totalorder %s18, 0
      %p91 = por %p89, %p90
      %p92 = scmp.le.s32.totalorder 1, %s12
      %p93 = scmp.lt.s32.totalorder %s12, 35
      %p94 = pnand %p92, %p93
      %p95 = pneg %p94
      // Predicated region
      $region9: #{custom-call.16} parent=5 // pred_check
        _
      $region10: #{custom-call.16} parent=5 // pred_check_branch
        %97 = sbr.rel (%p94) target = $region12
      $region11: #{custom-call.16} parent=5 // pred_region
        %s98 = ssub.s32 %s12, 1
      $region12: #{custom-call.16} parent=5 // pred_fallthru
        _
      %p99 = scmp.lt.s32.totalorder %s12, 34
      // Predicated region
      $region13: #{custom-call.16} parent=5 // pred_check
        %p100 = pneg %p99
      $region14: #{custom-call.16} parent=5 // pred_check_branch
        %102 = sbr.rel (%p100) target = $region16
      $region15: #{custom-call.16} parent=5 // pred_region
        %s103 = sand.u32 %s12, 1
        %s104 = sand.u32 %s12, 1
        %s105 = smul.addr %s104, 2
        %s106 = scalar_lea.vmem [#allocation1], %s105
        %s107 = smul.addr %s19, 17
        %s108 = sadd.s32 %s20, %s107
        %s109 = smul.addr %s108, 2
        %s110 = scalar_lea.vmem %s0, %s109
        // Predicated region
        $region17: #{custom-call.16} parent=15 // pred_check
          _
        $region18: #{custom-call.16} parent=15 // pred_check_branch
          %112 = sbr.rel (0) target = $region20
        $region19: #{custom-call.16} parent=15 // pred_region
          // Predicated region
          $region21: #{custom-call.16} parent=19 // pred_check
            _
          $region22: #{custom-call.16} parent=19 // pred_check_branch
            %114 = sbr.rel target = $region24
          $region23: #{custom-call.16} parent=19 // pred_region
            // Predicated region
            $region36: #{custom-call.16} parent=23 // pred_check
              _
            $region37: #{custom-call.16} parent=23 // pred_check_branch
              %129 = sbr.rel (0) target = $region39
            $region38: #{custom-call.16} parent=23 // pred_region
              loop: start=0, step=1, limit=1
              $region40: #{custom-call.16} parent=38 // loop_pre_header
                _
              $region41: #{custom-call.16} parent=38 // loop_header
                %s132 = sphi 0, %s136
                %p133 = scmp.ge.s32.totalorder %s132, 1
                %s137 = sphi %s110, %s110
                %s138 = sphi %s106, %s106
              $region42: #{custom-call.16} parent=38 // loop_header_branch
                %135 = sbr.rel (%p133) target = $region46
              $region43: #{custom-call.16} parent=38 // loop_body
                %v139 = vld [vmem:[%s137] sm:$0x3]
                %140 = vst [vmem:[%s138] sm:$0x3] %v139
              $region44: #{custom-call.16} parent=38 // loop_footer
                %s136 = sadd.s32 1, %s132
              $region45: #{custom-call.16} parent=38 // loop_footer_branch
                %131 = sbr.rel target = $region41
              $region46: #{custom-call.16} parent=38 // loop_exit
                _
            $region39: #{custom-call.16} parent=23 // pred_fallthru
              _
          $region24: #{custom-call.16} parent=19 // pred_fallthru
            _
          // Predicated region
          $region25: #{custom-call.16} parent=19 // pred_check
            _
          $region26: #{custom-call.16} parent=19 // pred_check_branch
            %116 = sbr.rel (0) target = $region28
          $region27: #{custom-call.16} parent=19 // pred_region
            loop: start=0, step=1, limit=1
            $region29: #{custom-call.16} parent=27 // loop_pre_header
              _
            $region30: #{custom-call.16} parent=27 // loop_header
              %s119 = sphi 0, %s123
              %p120 = scmp.ge.s32.totalorder %s119, 1
              %s124 = sphi %s110, %s110
              %s125 = sphi %s106, %s106
            $region31: #{custom-call.16} parent=27 // loop_header_branch
              %122 = sbr.rel (%p120) target = $region35
            $region32: #{custom-call.16} parent=27 // loop_body
              %v126 = vld [vmem:[%s124] sm:$0x3]
              %127 = vst [vmem:[%s125] sm:$0x3] %v126
            $region33: #{custom-call.16} parent=27 // loop_footer
              %s123 = sadd.s32 1, %s119
            $region34: #{custom-call.16} parent=27 // loop_footer_branch
              %118 = sbr.rel target = $region30
            $region35: #{custom-call.16} parent=27 // loop_exit
              _
          $region28: #{custom-call.16} parent=19 // pred_fallthru
            _
        $region20: #{custom-call.16} parent=15 // pred_fallthru
          _
        %141 = vnop
        %s142 = sand.u32 %s12, 1
        %s143 = sand.u32 %s12, 1
        %s144 = smul.addr %s143, 2
        %s145 = scalar_lea.vmem [#allocation3], %s144
        %s146 = smul.addr %s19, 17
        %s147 = sadd.s32 %s20, %s146
        %s148 = smul.addr %s147, 2
        %s149 = scalar_lea.vmem %s1, %s148
        // Predicated region
        $region47: #{custom-call.16} parent=15 // pred_check
          _
        $region48: #{custom-call.16} parent=15 // pred_check_branch
          %151 = sbr.rel (0) target = $region50
        $region49: #{custom-call.16} parent=15 // pred_region
          // Predicated region
          $region51: #{custom-call.16} parent=49 // pred_check
            _
          $region52: #{custom-call.16} parent=49 // pred_check_branch
            %153 = sbr.rel target = $region54
          $region53: #{custom-call.16} parent=49 // pred_region
            // Predicated region
            $region66: #{custom-call.16} parent=53 // pred_check
              _
            $region67: #{custom-call.16} parent=53 // pred_check_branch
              %168 = sbr.rel (0) target = $region69
            $region68: #{custom-call.16} parent=53 // pred_region
              loop: start=0, step=1, limit=1
              $region70: #{custom-call.16} parent=68 // loop_pre_header
                _
              $region71: #{custom-call.16} parent=68 // loop_header
                %s171 = sphi 0, %s175
                %p172 = scmp.ge.s32.totalorder %s171, 1
                %s176 = sphi %s149, %s149
                %s177 = sphi %s145, %s145
              $region72: #{custom-call.16} parent=68 // loop_header_branch
                %174 = sbr.rel (%p172) target = $region76
              $region73: #{custom-call.16} parent=68 // loop_body
                %v178 = vld [vmem:[%s176] sm:$0x3]
                %179 = vst [vmem:[%s177] sm:$0x3] %v178
              $region74: #{custom-call.16} parent=68 // loop_footer
                %s175 = sadd.s32 1, %s171
              $region75: #{custom-call.16} parent=68 // loop_footer_branch
                %170 = sbr.rel target = $region71
              $region76: #{custom-call.16} parent=68 // loop_exit
                _
            $region69: #{custom-call.16} parent=53 // pred_fallthru
              _
          $region54: #{custom-call.16} parent=49 // pred_fallthru
            _
          // Predicated region
          $region55: #{custom-call.16} parent=49 // pred_check
            _
          $region56: #{custom-call.16} parent=49 // pred_check_branch
            %155 = sbr.rel (0) target = $region58
          $region57: #{custom-call.16} parent=49 // pred_region
            loop: start=0, step=1, limit=1
            $region59: #{custom-call.16} parent=57 // loop_pre_header
              _
            $region60: #{custom-call.16} parent=57 // loop_header
              %s158 = sphi 0, %s162
              %p159 = scmp.ge.s32.totalorder %s158, 1
              %s163 = sphi %s149, %s149
              %s164 = sphi %s145, %s145
            $region61: #{custom-call.16} parent=57 // loop_header_branch
              %161 = sbr.rel (%p159) target = $region65
            $region62: #{custom-call.16} parent=57 // loop_body
              %v165 = vld [vmem:[%s163] sm:$0x3]
              %166 = vst [vmem:[%s164] sm:$0x3] %v165
            $region63: #{custom-call.16} parent=57 // loop_footer
              %s162 = sadd.s32 1, %s158
            $region64: #{custom-call.16} parent=57 // loop_footer_branch
              %157 = sbr.rel target = $region60
            $region65: #{custom-call.16} parent=57 // loop_exit
              _
          $region58: #{custom-call.16} parent=49 // pred_fallthru
            _
        $region50: #{custom-call.16} parent=15 // pred_fallthru
          _
        %180 = vnop
        %s181 = sand.u32 %s12, 1
        %s182 = sand.u32 %s12, 1
        %s183 = smul.addr %s182, 2
        %s184 = scalar_lea.vmem [#allocation5], %s183
        %s185 = smul.addr %s19, 17
        %s186 = sadd.s32 %s20, %s185
        %s187 = smul.addr %s186, 2
        %s188 = scalar_lea.vmem %s2, %s187
        // Predicated region
        $region77: #{custom-call.16} parent=15 // pred_check
          _
        $region78: #{custom-call.16} parent=15 // pred_check_branch
          %190 = sbr.rel (0) target = $region80
        $region79: #{custom-call.16} parent=15 // pred_region
          // Predicated region
          $region81: #{custom-call.16} parent=79 // pred_check
            _
          $region82: #{custom-call.16} parent=79 // pred_check_branch
            %192 = sbr.rel target = $region84
          $region83: #{custom-call.16} parent=79 // pred_region
            // Predicated region
            $region96: #{custom-call.16} parent=83 // pred_check
              _
            $region97: #{custom-call.16} parent=83 // pred_check_branch
              %207 = sbr.rel (0) target = $region99
            $region98: #{custom-call.16} parent=83 // pred_region
              loop: start=0, step=1, limit=1
              $region100: #{custom-call.16} parent=98 // loop_pre_header
                _
              $region101: #{custom-call.16} parent=98 // loop_header
                %s210 = sphi 0, %s214
                %p211 = scmp.ge.s32.totalorder %s210, 1
                %s215 = sphi %s188, %s188
                %s216 = sphi %s184, %s184
              $region102: #{custom-call.16} parent=98 // loop_header_branch
                %213 = sbr.rel (%p211) target = $region106
              $region103: #{custom-call.16} parent=98 // loop_body
                %v217 = vld [vmem:[%s215] sm:$0x3]
                %218 = vst [vmem:[%s216] sm:$0x3] %v217
              $region104: #{custom-call.16} parent=98 // loop_footer
                %s214 = sadd.s32 1, %s210
              $region105: #{custom-call.16} parent=98 // loop_footer_branch
                %209 = sbr.rel target = $region101
              $region106: #{custom-call.16} parent=98 // loop_exit
                _
            $region99: #{custom-call.16} parent=83 // pred_fallthru
              _
          $region84: #{custom-call.16} parent=79 // pred_fallthru
            _
          // Predicated region
          $region85: #{custom-call.16} parent=79 // pred_check
            _
          $region86: #{custom-call.16} parent=79 // pred_check_branch
            %194 = sbr.rel (0) target = $region88
          $region87: #{custom-call.16} parent=79 // pred_region
            loop: start=0, step=1, limit=1
            $region89: #{custom-call.16} parent=87 // loop_pre_header
              _
            $region90: #{custom-call.16} parent=87 // loop_header
              %s197 = sphi 0, %s201
              %p198 = scmp.ge.s32.totalorder %s197, 1
              %s202 = sphi %s188, %s188
              %s203 = sphi %s184, %s184
            $region91: #{custom-call.16} parent=87 // loop_header_branch
              %200 = sbr.rel (%p198) target = $region95
            $region92: #{custom-call.16} parent=87 // loop_body
              %v204 = vld [vmem:[%s202] sm:$0x3]
              %205 = vst [vmem:[%s203] sm:$0x3] %v204
            $region93: #{custom-call.16} parent=87 // loop_footer
              %s201 = sadd.s32 1, %s197
            $region94: #{custom-call.16} parent=87 // loop_footer_branch
              %196 = sbr.rel target = $region90
            $region95: #{custom-call.16} parent=87 // loop_exit
              _
          $region88: #{custom-call.16} parent=79 // pred_fallthru
            _
        $region80: #{custom-call.16} parent=15 // pred_fallthru
          _
        %219 = vnop
        %s220 = sand.u32 %s12, 1
        %s221 = sand.u32 %s12, 1
        %s222 = smul.addr %s221, 2
        %s223 = scalar_lea.vmem [#allocation7], %s222
        %s224 = smul.addr %s19, 17
        %s225 = sadd.s32 %s20, %s224
        %s226 = smul.addr %s225, 2
        %s227 = scalar_lea.vmem %s3, %s226
        // Predicated region
        $region107: #{custom-call.16} parent=15 // pred_check
          _
        $region108: #{custom-call.16} parent=15 // pred_check_branch
          %229 = sbr.rel (0) target = $region110
        $region109: #{custom-call.16} parent=15 // pred_region
          // Predicated region
          $region111: #{custom-call.16} parent=109 // pred_check
            _
          $region112: #{custom-call.16} parent=109 // pred_check_branch
            %231 = sbr.rel target = $region114
          $region113: #{custom-call.16} parent=109 // pred_region
            // Predicated region
            $region126: #{custom-call.16} parent=113 // pred_check
              _
            $region127: #{custom-call.16} parent=113 // pred_check_branch
              %246 = sbr.rel (0) target = $region129
            $region128: #{custom-call.16} parent=113 // pred_region
              loop: start=0, step=1, limit=1
              $region130: #{custom-call.16} parent=128 // loop_pre_header
                _
              $region131: #{custom-call.16} parent=128 // loop_header
                %s249 = sphi 0, %s253
                %p250 = scmp.ge.s32.totalorder %s249, 1
                %s254 = sphi %s227, %s227
                %s255 = sphi %s223, %s223
              $region132: #{custom-call.16} parent=128 // loop_header_branch
                %252 = sbr.rel (%p250) target = $region136
              $region133: #{custom-call.16} parent=128 // loop_body
                %v256 = vld [vmem:[%s254] sm:$0x3]
                %257 = vst [vmem:[%s255] sm:$0x3] %v256
              $region134: #{custom-call.16} parent=128 // loop_footer
                %s253 = sadd.s32 1, %s249
              $region135: #{custom-call.16} parent=128 // loop_footer_branch
                %248 = sbr.rel target = $region131
              $region136: #{custom-call.16} parent=128 // loop_exit
                _
            $region129: #{custom-call.16} parent=113 // pred_fallthru
              _
          $region114: #{custom-call.16} parent=109 // pred_fallthru
            _
          // Predicated region
          $region115: #{custom-call.16} parent=109 // pred_check
            _
          $region116: #{custom-call.16} parent=109 // pred_check_branch
            %233 = sbr.rel (0) target = $region118
          $region117: #{custom-call.16} parent=109 // pred_region
            loop: start=0, step=1, limit=1
            $region119: #{custom-call.16} parent=117 // loop_pre_header
              _
            $region120: #{custom-call.16} parent=117 // loop_header
              %s236 = sphi 0, %s240
              %p237 = scmp.ge.s32.totalorder %s236, 1
              %s241 = sphi %s227, %s227
              %s242 = sphi %s223, %s223
            $region121: #{custom-call.16} parent=117 // loop_header_branch
              %239 = sbr.rel (%p237) target = $region125
            $region122: #{custom-call.16} parent=117 // loop_body
              %v243 = vld [vmem:[%s241] sm:$0x3]
              %244 = vst [vmem:[%s242] sm:$0x3] %v243
            $region123: #{custom-call.16} parent=117 // loop_footer
              %s240 = sadd.s32 1, %s236
            $region124: #{custom-call.16} parent=117 // loop_footer_branch
              %235 = sbr.rel target = $region120
            $region125: #{custom-call.16} parent=117 // loop_exit
              _
          $region118: #{custom-call.16} parent=109 // pred_fallthru
            _
        $region110: #{custom-call.16} parent=15 // pred_fallthru
          _
        %258 = vnop
      $region16: #{custom-call.16} parent=5 // pred_fallthru
        _
      %p259 = scmp.le.s32.totalorder 1, %s12
      %p260 = scmp.lt.s32.totalorder %s12, 35
      %p261 = pnand %p259, %p260
      %p262 = pneg %p261
      // Predicated region
      $region137: #{custom-call.16} parent=5 // pred_check
        _
      $region138: #{custom-call.16} parent=5 // pred_check_branch
        %264 = sbr.rel (%p261) target = $region140
      $region139: #{custom-call.16} parent=5 // pred_region
        #allocation18 [shape = 'f32[2,2]{1,0}', space=vmem, size = 0x1000, scoped, tag = 'a top-left matrix']
        #allocation19 [shape = 'f32[2,2]{1,0}', space=vmem, size = 0x1000, scoped, tag = 'a top-right matrix']
        #allocation20 [shape = 'f32[2,2]{1,0}', space=vmem, size = 0x1000, scoped, tag = 'a bottom-left matrix']
        #allocation21 [shape = 'f32[2,2]{1,0}', space=vmem, size = 0x1000, scoped, tag = 'a bottom-right matrix']
        %s265 = ssub.s32 %s12, 1
        %s266 = sand.u32 %s17, 1
        %s267 = sand.u32 %s17, 1
        %s268 = smul.addr %s267, 2
        %s269 = scalar_lea.vmem [#allocation1], %s268
        %s270 = sand.u32 %s17, 1
        %s271 = sand.u32 %s17, 1
        %s272 = smul.addr %s271, 2
        %s273 = scalar_lea.vmem [#allocation3], %s272
        %s274 = sand.u32 %s17, 1
        %s275 = sand.u32 %s17, 1
        %s276 = smul.addr %s275, 2
        %s277 = scalar_lea.vmem [#allocation5], %s276
        %s278 = sand.u32 %s17, 1
        %s279 = sand.u32 %s17, 1
        %s280 = smul.addr %s279, 2
        %s281 = scalar_lea.vmem [#allocation7], %s280
        %s282 = sand.u32 %s17, 1
        %s283 = sand.u32 %s17, 1
        %s284 = smul.addr %s283, 2
        %s285 = scalar_lea.vmem [#allocation1], %s284
        %s286 = sand.u32 %s17, 1
        %s287 = sand.u32 %s17, 1
        %s288 = smul.addr %s287, 2
        %s289 = scalar_lea.vmem [#allocation3], %s288
        %s290 = sand.u32 %s17, 1
        %s291 = sand.u32 %s17, 1
        %s292 = smul.addr %s291, 2
        %s293 = scalar_lea.vmem [#allocation5], %s292
        %s294 = sand.u32 %s17, 1
        %s295 = sand.u32 %s17, 1
        %s296 = smul.addr %s295, 2
        %s297 = scalar_lea.vmem [#allocation7], %s296
        %p298 = pneg %p54
        %p299 = pneg %p51
        %s300 = sand.u32 %s41, 1
        %s301 = sand.u32 %s41, 1
        %s302 = smul.addr %s301, 8
        %s303 = scalar_lea.vmem [#allocation8], %s302
        %p304 = pneg %p84
        %p305 = pneg %p81
        %s306 = sand.u32 %s71, 1
        %s307 = sand.u32 %s71, 1
        %s308 = smul.addr %s307, 8
        %s309 = scalar_lea.vmem [#allocation9], %s308
        %s310 = sand.u32 %s17, 1
        %s311 = sand.u32 %s17, 1
        %s312 = smul.addr %s311, 2
        %s313 = scalar_lea.vmem [#allocation11], %s312
        %s314 = sand.u32 %s17, 1
        %s315 = sand.u32 %s17, 1
        %s316 = smul.addr %s315, 2
        %s317 = scalar_lea.vmem [#allocation13], %s316
        %s318 = sand.u32 %s17, 1
        %s319 = sand.u32 %s17, 1
        %s320 = smul.addr %s319, 2
        %s321 = scalar_lea.vmem [#allocation15], %s320
        %s322 = sand.u32 %s17, 1
        %s323 = sand.u32 %s17, 1
        %s324 = smul.addr %s323, 2
        %s325 = scalar_lea.vmem [#allocation17], %s324
        %s327 = sshllo.u32 0, 2
        %v328 = vld [vmem:[%s285] sm:%s327]
        %329 = vst [vmem:[#allocation0] sm:%s327] %v328
        %s331 = sshllo.u32 0, 2
        %v332 = vld [vmem:[%s289] sm:%s331]
        %333 = vst [vmem:[#allocation2] sm:%s331] %v332
        %s335 = sshllo.u32 0, 2
        %v336 = vld [vmem:[%s293] sm:%s335]
        %337 = vst [vmem:[#allocation4] sm:%s335] %v336
        %s339 = sshllo.u32 0, 2
        %v340 = vld [vmem:[%s297] sm:%s339]
        %341 = vst [vmem:[#allocation6] sm:%s339] %v340
        %s342 = sshrl.u32 %s22, 3
        %s343 = sshrl.u32 %s22, 3
        %s344 = smov [#allocation18]
        %v345 = vld [vmem:[#allocation0] sm:$0xff]
        %346 = vst [vmem:[%s344] sm:$0xff] %v345
        %s347 = smov [#allocation19]
        %v348 = vld [vmem:[#allocation2] sm:$0xff]
        %349 = vst [vmem:[%s347] sm:$0xff] %v348
        %s350 = smov [#allocation20]
        %v351 = vld [vmem:[#allocation4] sm:$0xff]
        %352 = vst [vmem:[%s350] sm:$0xff] %v351
        %s353 = smov [#allocation21]
        %v354 = vld [vmem:[#allocation6] sm:$0xff]
        %355 = vst [vmem:[%s353] sm:$0xff] %v354
        %356 = vst [vmem:[#allocation10] sm:$0xff] 0.0
        %357 = vst [vmem:[#allocation12] sm:$0xff] 0.0
        %358 = vst [vmem:[#allocation14] sm:$0xff] 0.0
        %359 = vst [vmem:[#allocation16] sm:$0xff] 0.0
        %s360 = smov [#allocation10]
        %v361 = vlaneseq
        %v362 = vand.u32 %v361, 127
        %v363 = vmov %v362
        %v364 = vlaneseq
        %v365 = vshrl.u32 %v364, 7
        %v366 = vmov %v365
        %v367 = vld [vmem:[%s360] sm:$0x3]
        %vm370 = vcmp.eq.s32.totalorder %v366, %v363
        %v371 = vsel %vm370, 1.0, %v367
        %372 = vst [vmem:[%s360] sm:$0x3] %v371
        %s373 = smov [#allocation16]
        %v374 = vlaneseq
        %v375 = vand.u32 %v374, 127
        %v376 = vmov %v375
        %v377 = vlaneseq
        %v378 = vshrl.u32 %v377, 7
        %v379 = vmov %v378
        %v380 = vld [vmem:[%s373] sm:$0x3]
        %vm383 = vcmp.eq.s32.totalorder %v379, %v376
        %v384 = vsel %vm383, 1.0, %v380
        %385 = vst [vmem:[%s373] sm:$0x3] %v384
        // While loop
        $region141: #{custom-call.16} parent=139 // loop_pre_header
          _
        $region142: #{custom-call.16} parent=139 // loop_header
          %s387 = sphi 0, %s929
          %v388 = vlaneseq
          %v389 = vand.u32 %v388, 127
          %v390 = vmov %v389
          %v391 = vlaneseq
          %v392 = vshrl.u32 %v391, 7
          %v393 = vmov %v392
          %s394 = smov [#allocation18]
          %v395 = vlaneseq
          %v396 = vand.u32 %v395, 127
          %vm397 = vcmp.ge.s32.totalorder %v396, 0
          %vm398 = vcmp.lt.s32.totalorder %v396, 2
          %vm399 = vmand %vm397, %vm398
          %v400 = vld [vmem:[%s394] sm:$0x3]
          %v401 = vsel %vm399, %v400, 0.0
          %v402 = vmul.f32 %v401, %v401
          %vm405 = vcmp.eq.s32.totalorder %v393, %v390
          %v406 = vsel %vm405, 0.0, %v402
          %v407 = vlaneseq
          %v408 = vand.u32 %v407, 127
          %v409 = vmov %v408
          %v410 = vlaneseq
          %v411 = vshrl.u32 %v410, 7
          %v412 = vmov %v411
          %s413 = smov [#allocation19]
          %v414 = vlaneseq
          %v415 = vand.u32 %v414, 127
          %vm416 = vcmp.ge.s32.totalorder %v415, 0
          %vm417 = vcmp.lt.s32.totalorder %v415, 2
          %vm418 = vmand %vm416, %vm417
          %v419 = vld [vmem:[%s413] sm:$0x3]
          %v420 = vsel %vm418, %v419, 0.0
          %v421 = vmul.f32 %v420, %v420
          %v422 = vadd.f32 %v406, %v421
          %v423 = vadd.f32 %v402, %v421
          %v424 = vlaneseq
          %v425 = vand.u32 %v424, 127
          %v426 = vmov %v425
          %v427 = vlaneseq
          %v428 = vshrl.u32 %v427, 7
          %v429 = vmov %v428
          %s430 = smov [#allocation20]
          %v431 = vlaneseq
          %v432 = vand.u32 %v431, 127
          %vm433 = vcmp.ge.s32.totalorder %v432, 0
          %vm434 = vcmp.lt.s32.totalorder %v432, 2
          %vm435 = vmand %vm433, %vm434
          %v436 = vld [vmem:[%s430] sm:$0x3]
          %v437 = vsel %vm435, %v436, 0.0
          %v438 = vmul.f32 %v437, %v437
          %v439 = vadd.f32 %v422, %v438
          %v440 = vadd.f32 %v423, %v438
          %v441 = vlaneseq
          %v442 = vand.u32 %v441, 127
          %v443 = vmov %v442
          %v444 = vlaneseq
          %v445 = vshrl.u32 %v444, 7
          %v446 = vmov %v445
          %s447 = smov [#allocation21]
          %v448 = vlaneseq
          %v449 = vand.u32 %v448, 127
          %vm450 = vcmp.ge.s32.totalorder %v449, 0
          %vm451 = vcmp.lt.s32.totalorder %v449, 2
          %vm452 = vmand %vm450, %vm451
          %v453 = vld [vmem:[%s447] sm:$0x3]
          %v454 = vsel %vm452, %v453, 0.0
          %v455 = vmul.f32 %v454, %v454
          %vm458 = vcmp.eq.s32.totalorder %v446, %v443
          %v459 = vsel %vm458, 0.0, %v455
          %v460 = vadd.f32 %v439, %v459
          %v461 = vadd.f32 %v440, %v455
          %462 = vadd.xlane.f32.xlu0 %v461
          %v463 = vpop.xlane.xlu0 %462
          %v464 = vrot.slane %v463, 4
          %v465 = vadd.f32 %v463, %v464
          %v466 = vrot.slane %v465, 2
          %v467 = vadd.f32 %v465, %v466
          %v468 = vrot.slane %v467, 1
          %v469 = vadd.f32 %v467, %v468
          %470 = vadd.xlane.f32.xlu0 %v460
          %v471 = vpop.xlane.xlu0 %470
          %v472 = vrot.slane %v471, 4
          %v473 = vadd.f32 %v471, %v472
          %v474 = vrot.slane %v473, 2
          %v475 = vadd.f32 %v473, %v474
          %v476 = vrot.slane %v475, 1
          %v477 = vadd.f32 %v475, %v476
          %s478 = vtos %v477
          %s479 = vtos %v469
          %s480 = smul.f32 1e-10, %s479
          %p481 = scmp.le.f32.partialorder %s478, %s480
          %p482 = scmp.ge.s32.totalorder %s387, 15
          %p483 = por %p481, %p482
        $region143: #{custom-call.16} parent=139 // loop_header_branch
          %931 = sbr.rel (%p483) target = $region147
        $region144: #{custom-call.16} parent=139 // loop_body
          loop: start=0, step=1, limit=3
          $region148: #{custom-call.16} parent=144 // loop_pre_header
            _
          $region149: #{custom-call.16} parent=144 // loop_header
            %s485 = sphi 0, %s489
            %p486 = scmp.ge.s32.totalorder %s485, 3
          $region150: #{custom-call.16} parent=144 // loop_header_branch
            %488 = sbr.rel (%p486) target = $region154
          $region151: #{custom-call.16} parent=144 // loop_body
            #allocation22 [shape = 'f32[1024]{0}', space=vmem, size = 0x1000, scoped, tag = 'a_tl_diag vmem']
            #allocation23 [shape = 'f32[1024]{0}', space=vmem, size = 0x1000, scoped, tag = 'a_tr_diag vmem']
            #allocation24 [shape = 'f32[1024]{0}', space=vmem, size = 0x1000, scoped, tag = 'a_br_diag vmem']
            #allocation25 [shape = 'f32[1024]{0}', space=vmem, size = 0x1000, scoped, tag = 'rt1 vmem']
            #allocation26 [shape = 'f32[1024]{0}', space=vmem, size = 0x1000, scoped, tag = 'rt2 vmem']
            #allocation27 [shape = 'f32[1024]{0}', space=vmem, size = 0x1000, scoped, tag = 'c vmem']
            #allocation28 [shape = 'f32[1024]{0}', space=vmem, size = 0x1000, scoped, tag = 's vmem']
            #allocation29 [shape = 'f32[4096]{0}', space=vmem, size = 0x4000, scoped, tag = 'c broadcast']
            #allocation30 [shape = 'f32[4096]{0}', space=vmem, size = 0x4000, scoped, tag = 's broadcast']
            %s490 = smov [#allocation18]
            %s491 = smov [#allocation22]
            %v492 = vlaneseq
            %v493 = vand.u32 %v492, 127
            %v494 = vmov %v493
            %v495 = vlaneseq
            %v496 = vshrl.u32 %v495, 7
            %v497 = vmov %v496
            %v498 = vld [vmem:[%s490] sm:$0x3]
            %vm501 = vcmp.eq.s32.totalorder %v497, %v494
            %v502 = vsel %vm501, %v498, 0.0
            %v503 = vrot.slane %v502, 4
            %v504 = vadd.f32 %v502, %v503
            %v505 = vrot.slane %v504, 2
            %v506 = vadd.f32 %v504, %v505
            %v507 = vrot.slane %v506, 1
            %v508 = vadd.f32 %v506, %v507
            %509 = vst [vmem:[%s491] sm:$0x1] %v508
            %s510 = smov [#allocation19]
            %s511 = smov [#allocation23]
            %v512 = vlaneseq
            %v513 = vand.u32 %v512, 127
            %v514 = vmov %v513
            %v515 = vlaneseq
            %v516 = vshrl.u32 %v515, 7
            %v517 = vmov %v516
            %v518 = vld [vmem:[%s510] sm:$0x3]
            %vm521 = vcmp.eq.s32.totalorder %v517, %v514
            %v522 = vsel %vm521, %v518, 0.0
            %v523 = vrot.slane %v522, 4
            %v524 = vadd.f32 %v522, %v523
            %v525 = vrot.slane %v524, 2
            %v526 = vadd.f32 %v524, %v525
            %v527 = vrot.slane %v526, 1
            %v528 = vadd.f32 %v526, %v527
            %529 = vst [vmem:[%s511] sm:$0x1] %v528
            %s530 = smov [#allocation21]
            %s531 = smov [#allocation24]
            %v532 = vlaneseq
            %v533 = vand.u32 %v532, 127
            %v534 = vmov %v533
            %v535 = vlaneseq
            %v536 = vshrl.u32 %v535, 7
            %v537 = vmov %v536
            %v538 = vld [vmem:[%s530] sm:$0x3]
            %vm541 = vcmp.eq.s32.totalorder %v537, %v534
            %v542 = vsel %vm541, %v538, 0.0
            %v543 = vrot.slane %v542, 4
            %v544 = vadd.f32 %v542, %v543
            %v545 = vrot.slane %v544, 2
            %v546 = vadd.f32 %v544, %v545
            %v547 = vrot.slane %v546, 1
            %v548 = vadd.f32 %v546, %v547
            %549 = vst [vmem:[%s531] sm:$0x1] %v548
            %s550 = smov [#allocation27]
            %s551 = smov [#allocation28]
            %s552 = smov [#allocation22]
            %v553 = vld [vmem:[%s552] sm:$0xff]
            %s554 = smov [#allocation23]
            %v555 = vld [vmem:[%s554] sm:$0xff]
            %s556 = smov [#allocation24]
            %v557 = vld [vmem:[%s556] sm:$0xff]
            %v558 = vsub.f32 %v557, %v553
            %v559 = vmul.f32 2.0, %v555
            %v560 = vrcp.pop %v559
            %v561 = vmul.f32 %v558, %v560
            %vm562 = vcmp.ge.f32.partialorder %v561, 0.0
            %v563 = vmul.f32 %v561, %v561
            %v564 = vadd.f32 1.0, %v563
            %v565 = vrsqrt.pop %v564
            %v566 = vmul.f32 %v564, %v565
            %vm567 = vcmp.eq.f32.partialorder %v564, inf
            %v568 = vsel %vm567, %v564, %v566
            %vm569 = vcmp.eq.f32.partialorder %v564, 0.0
            %v570 = vand.u32 %v564, 2147483648
            %v571 = vsel %vm569, %v570, %v568
            %v572 = vxor.u32 %v571, 2147483648
            %v573 = vsel %vm562, %v571, %v572
            %v574 = vadd.f32 %v561, %v573
            %v575 = vrcp.pop %v574
            %v576 = vand.u32 2147483647, %v553
            %v577 = vand.u32 2147483647, %v555
            %v578 = vand.u32 2147483647, %v557
            %v579 = vmin.f32 %v576, %v578
            %v580 = vmul.f32 1.1920929e-08, %v579
            %vm581 = vcmp.le.f32.partialorder %v577, %v580
            %v582 = vsel %vm581, 0.0, %v575
            %v583 = vmul.f32 %v582, %v582
            %v584 = vadd.f32 1.0, %v583
            %v585 = vrsqrt.pop %v584
            %v586 = vmul.f32 %v582, %v585
            %v587 = vmul.f32 %v582, %v555
            %v588 = vsub.f32 %v553, %v587
            %v589 = vmul.f32 %v582, %v555
            %v590 = vadd.f32 %v557, %v589
            %s591 = smov [#allocation25]
            %592 = vst [vmem:[%s591] sm:$0xff] %v588
            %s593 = smov [#allocation26]
            %594 = vst [vmem:[%s593] sm:$0xff] %v590
            %s595 = smov %s550
            %596 = vst [vmem:[%s595] sm:$0xff] %v585
            %s597 = smov %s551
            %598 = vst [vmem:[%s597] sm:$0xff] %v586
            %s599 = smov [#allocation27]
            %v600 = vld [vmem:[%s599] ss:$0 sm:$0xff]
            %v601 = vlaneseq
            %v602 = vand.u32 %v601, 127
            %v603 = vmov %v602
            %v604 = vlaneseq
            %v605 = vshrl.u32 %v604, 7
            %v606 = vmov %v605
            %vm608 = vcmp.eq.s32.totalorder %v606, %v603
            %v609 = vsel %vm608, %v600, 0.0
            %610 = vadd.xlane.f32.xlu0 %v609
            %v611 = vpop.xlane.xlu0 %610
            %s612 = smov [#allocation29]
            %613 = vst [vmem:[%s612] sm:$0xff] %v611
            %s614 = smov [#allocation28]
            %v615 = vld [vmem:[%s614] ss:$0 sm:$0xff]
            %v616 = vlaneseq
            %v617 = vand.u32 %v616, 127
            %v618 = vmov %v617
            %v619 = vlaneseq
            %v620 = vshrl.u32 %v619, 7
            %v621 = vmov %v620
            %vm623 = vcmp.eq.s32.totalorder %v621, %v618
            %v624 = vsel %vm623, %v615, 0.0
            %625 = vadd.xlane.f32.xlu0 %v624
            %v626 = vpop.xlane.xlu0 %625
            %s627 = smov [#allocation30]
            %628 = vst [vmem:[%s627] sm:$0xff] %v626
            %s629 = smov [#allocation29]
            %v630 = vld [vmem:[%s629] sm:$0xff]
            %s631 = smov [#allocation30]
            %v632 = vld [vmem:[%s631] sm:$0xff]
            %s633 = smov [#allocation18]
            %s634 = smov [#allocation19]
            %s635 = smov [#allocation20]
            %s636 = smov [#allocation21]
            %v637 = vld [vmem:[%s633] sm:$0x3]
            %v638 = vld [vmem:[%s634] sm:$0x3]
            %v639 = vld [vmem:[%s635] sm:$0x3]
            %v640 = vld [vmem:[%s636] sm:$0x3]
            %v641 = vmul.f32 %v630, %v637
            %v642 = vmul.f32 %v632, %v639
            %v643 = vsub.f32 %v641, %v642
            %v644 = vmul.f32 %v630, %v638
            %v645 = vmul.f32 %v632, %v640
            %v646 = vsub.f32 %v644, %v645
            %v647 = vmul.f32 %v632, %v637
            %v648 = vmul.f32 %v630, %v639
            %v649 = vadd.f32 %v647, %v648
            %v650 = vmul.f32 %v632, %v638
            %v651 = vmul.f32 %v630, %v640
            %v652 = vadd.f32 %v650, %v651
            %653 = vst [vmem:[%s633] sm:$0x3] %v643
            %654 = vst [vmem:[%s634] sm:$0x3] %v646
            %655 = vst [vmem:[%s635] sm:$0x3] %v649
            %656 = vst [vmem:[%s636] sm:$0x3] %v652
            %s657 = smov [#allocation27]
            %v658 = vld [vmem:[%s657] ss:$0 sm:$0xff]
            %s659 = smov [#allocation28]
            %v660 = vld [vmem:[%s659] ss:$0 sm:$0xff]
            %s661 = smov [#allocation18]
            %s662 = smov [#allocation19]
            %s663 = smov [#allocation20]
            %s664 = smov [#allocation21]
            %v665 = vld [vmem:[%s661] sm:$0x3]
            %v666 = vld [vmem:[%s662] sm:$0x3]
            %v667 = vld [vmem:[%s663] sm:$0x3]
            %v668 = vld [vmem:[%s664] sm:$0x3]
            %v669 = vmul.f32 %v658, %v665
            %v670 = vmul.f32 %v660, %v666
            %v671 = vsub.f32 %v669, %v670
            %v672 = vmul.f32 %v660, %v665
            %v673 = vmul.f32 %v658, %v666
            %v674 = vadd.f32 %v672, %v673
            %v675 = vmul.f32 %v658, %v667
            %v676 = vmul.f32 %v660, %v668
            %v677 = vsub.f32 %v675, %v676
            %v678 = vmul.f32 %v660, %v667
            %v679 = vmul.f32 %v658, %v668
            %v680 = vadd.f32 %v678, %v679
            %681 = vst [vmem:[%s661] sm:$0x3] %v671
            %682 = vst [vmem:[%s662] sm:$0x3] %v674
            %683 = vst [vmem:[%s663] sm:$0x3] %v677
            %684 = vst [vmem:[%s664] sm:$0x3] %v680
            %s685 = smov [#allocation18]
            %s686 = smov [#allocation25]
            %v687 = vlaneseq
            %v688 = vand.u32 %v687, 127
            %v689 = vmov %v688
            %v690 = vlaneseq
            %v691 = vshrl.u32 %v690, 7
            %v692 = vmov %v691
            %v693 = vld [vmem:[%s686] ss:$0 sm:$0xff]
            %v694 = vld [vmem:[%s685] sm:$0x3]
            %vm697 = vcmp.eq.s32.totalorder %v692, %v689
            %v698 = vsel %vm697, %v693, %v694
            %699 = vst [vmem:[%s685] sm:$0x3] %v698
            %s700 = smov [#allocation19]
            %v701 = vlaneseq
            %v702 = vand.u32 %v701, 127
            %v703 = vmov %v702
            %v704 = vlaneseq
            %v705 = vshrl.u32 %v704, 7
            %v706 = vmov %v705
            %v707 = vld [vmem:[%s700] sm:$0x3]
            %vm710 = vcmp.eq.s32.totalorder %v706, %v703
            %v711 = vsel %vm710, 0.0, %v707
            %712 = vst [vmem:[%s700] sm:$0x3] %v711
            %s713 = smov [#allocation20]
            %v714 = vlaneseq
            %v715 = vand.u32 %v714, 127
            %v716 = vmov %v715
            %v717 = vlaneseq
            %v718 = vshrl.u32 %v717, 7
            %v719 = vmov %v718
            %v720 = vld [vmem:[%s713] sm:$0x3]
            %vm723 = vcmp.eq.s32.totalorder %v719, %v716
            %v724 = vsel %vm723, 0.0, %v720
            %725 = vst [vmem:[%s713] sm:$0x3] %v724
            %s726 = smov [#allocation21]
            %s727 = smov [#allocation26]
            %v728 = vlaneseq
            %v729 = vand.u32 %v728, 127
            %v730 = vmov %v729
            %v731 = vlaneseq
            %v732 = vshrl.u32 %v731, 7
            %v733 = vmov %v732
            %v734 = vld [vmem:[%s727] ss:$0 sm:$0xff]
            %v735 = vld [vmem:[%s726] sm:$0x3]
            %vm738 = vcmp.eq.s32.totalorder %v733, %v730
            %v739 = vsel %vm738, %v734, %v735
            %740 = vst [vmem:[%s726] sm:$0x3] %v739
            %s741 = smov [#allocation18]
            %s742 = smov [#allocation19]
            %v743 = vld [vmem:[%s742] sm:$0x3]
            %744 = vrot.lane.b32.xlu0 %v743, 1
            %v745 = vpop.permute.xlu0 %744
            %v746 = vld [vmem:[%s741] sm:$0x3]
            %v747 = vld [vmem:[%s741] sm:$0x3]
            %748 = vrot.lane.b32.xlu0 %v747, 1
            %v749 = vpop.permute.xlu0 %748
            %v750 = vlaneseq
            %v751 = vand.u32 %v750, 127
            %vm752 = vcmp.eq.s32.totalorder %v751, 0
            %v753 = vsel %vm752, %v747, %v749
            %v754 = vlaneseq
            %v755 = vand.u32 %v754, 127
            %vm756 = vcmp.eq.s32.totalorder %v755, 1
            %v757 = vsel %vm756, %v745, %v753
            %v758 = vlaneseq
            %v759 = vand.u32 %v758, 127
            %vm760 = vcmp.ge.s32.totalorder %v759, 0
            %vm761 = vcmp.lt.s32.totalorder %v759, 2
            %vm762 = vmand %vm760, %vm761
            %v763 = vsel %vm762, %v757, 0.0
            %v764 = vld [vmem:[%s742] sm:$0x3]
            %765 = vrot.lane.b32.xlu0 %v764, 127
            %v766 = vpop.permute.xlu0 %765
            %v767 = vlaneseq
            %v768 = vand.u32 %v767, 127
            %vm769 = vcmp.eq.s32.totalorder %v768, 1
            %v770 = vsel %vm769, %v746, %v766
            %771 = vst [vmem:[%s741] sm:$0x3] %v763
            %772 = vst [vmem:[%s742] sm:$0x3] %v770
            %s773 = smov [#allocation20]
            %s774 = smov [#allocation21]
            %v775 = vld [vmem:[%s774] sm:$0x3]
            %776 = vrot.lane.b32.xlu0 %v775, 1
            %v777 = vpop.permute.xlu0 %776
            %v778 = vld [vmem:[%s773] sm:$0x3]
            %v779 = vld [vmem:[%s773] sm:$0x3]
            %780 = vrot.lane.b32.xlu0 %v779, 1
            %v781 = vpop.permute.xlu0 %780
            %v782 = vlaneseq
            %v783 = vand.u32 %v782, 127
            %vm784 = vcmp.eq.s32.totalorder %v783, 0
            %v785 = vsel %vm784, %v779, %v781
            %v786 = vlaneseq
            %v787 = vand.u32 %v786, 127
            %vm788 = vcmp.eq.s32.totalorder %v787, 1
            %v789 = vsel %vm788, %v777, %v785
            %v790 = vlaneseq
            %v791 = vand.u32 %v790, 127
            %vm792 = vcmp.ge.s32.totalorder %v791, 0
            %vm793 = vcmp.lt.s32.totalorder %v791, 2
            %vm794 = vmand %vm792, %vm793
            %v795 = vsel %vm794, %v789, 0.0
            %v796 = vld [vmem:[%s774] sm:$0x3]
            %797 = vrot.lane.b32.xlu0 %v796, 127
            %v798 = vpop.permute.xlu0 %797
            %v799 = vlaneseq
            %v800 = vand.u32 %v799, 127
            %vm801 = vcmp.eq.s32.totalorder %v800, 1
            %v802 = vsel %vm801, %v778, %v798
            %803 = vst [vmem:[%s773] sm:$0x3] %v795
            %804 = vst [vmem:[%s774] sm:$0x3] %v802
            %s805 = smov [#allocation18]
            %s806 = smov [#allocation20]
            %v807 = vld [vmem:[%s805] ss:$0 sm:$0xff]
            %s809 = scalar_lea.vmem %s805, 4294967295
            %v810 = vld [vmem:[%s809] sm:$0x2]
            %v811 = vlaneseq
            %v812 = vshrl.u32 %v811, 7
            %vm813 = vcmp.eq.s32.totalorder %v812, 0
            %v814 = vsel %vm813, %v807, %v810
            %s815 = scalar_lea.vmem %s805, 1
            %v816 = vld [vmem:[%s815] ss:$0 sm:$0xff]
            %817 = vst [vmem:[%s805] sm:$0x3] %v814
            %v818 = vld [vmem:[%s806] ss:$0 sm:$0xff]
            %s819 = scalar_lea.vmem %s805, 1
            %820 = vst [vmem:[%s819] sm:$0x1] %v818
            %s821 = scalar_lea.vmem %s806, 1
            %v822 = vld [vmem:[%s821] sm:$0x1]
            %v823 = vlaneseq
            %v824 = vshrl.u32 %v823, 7
            %vm825 = vcmp.eq.s32.totalorder %v824, 1
            %v826 = vsel %vm825, %v816, %v822
            %v827 = vld [vmem:[%s806] ss:$0 sm:$0xff]
            %828 = vst [vmem:[%s806] sm:$0x3] %v826
            %s829 = smov [#allocation19]
            %s830 = smov [#allocation21]
            %v831 = vld [vmem:[%s829] ss:$0 sm:$0xff]
            %s833 = scalar_lea.vmem %s829, 4294967295
            %v834 = vld [vmem:[%s833] sm:$0x2]
            %v835 = vlaneseq
            %v836 = vshrl.u32 %v835, 7
            %vm837 = vcmp.eq.s32.totalorder %v836, 0
            %v838 = vsel %vm837, %v831, %v834
            %s839 = scalar_lea.vmem %s829, 1
            %v840 = vld [vmem:[%s839] ss:$0 sm:$0xff]
            %841 = vst [vmem:[%s829] sm:$0x3] %v838
            %v842 = vld [vmem:[%s830] ss:$0 sm:$0xff]
            %s843 = scalar_lea.vmem %s829, 1
            %844 = vst [vmem:[%s843] sm:$0x1] %v842
            %s845 = scalar_lea.vmem %s830, 1
            %v846 = vld [vmem:[%s845] sm:$0x1]
            %v847 = vlaneseq
            %v848 = vshrl.u32 %v847, 7
            %vm849 = vcmp.eq.s32.totalorder %v848, 1
            %v850 = vsel %vm849, %v840, %v846
            %v851 = vld [vmem:[%s830] ss:$0 sm:$0xff]
            %852 = vst [vmem:[%s830] sm:$0x3] %v850
            %s853 = smov [#allocation29]
            %v854 = vld [vmem:[%s853] sm:$0xff]
            %s855 = smov [#allocation30]
            %v856 = vld [vmem:[%s855] sm:$0xff]
            %s857 = smov [#allocation10]
            %s858 = smov [#allocation12]
            %s859 = smov [#allocation14]
            %s860 = smov [#allocation16]
            %v861 = vld [vmem:[%s857] sm:$0x3]
            %v862 = vld [vmem:[%s858] sm:$0x3]
            %v863 = vld [vmem:[%s859] sm:$0x3]
            %v864 = vld [vmem:[%s860] sm:$0x3]
            %v865 = vmul.f32 %v854, %v861
            %v866 = vmul.f32 %v856, %v863
            %v867 = vsub.f32 %v865, %v866
            %v868 = vmul.f32 %v854, %v862
            %v869 = vmul.f32 %v856, %v864
            %v870 = vsub.f32 %v868, %v869
            %v871 = vmul.f32 %v856, %v861
            %v872 = vmul.f32 %v854, %v863
            %v873 = vadd.f32 %v871, %v872
            %v874 = vmul.f32 %v856, %v862
            %v875 = vmul.f32 %v854, %v864
            %v876 = vadd.f32 %v874, %v875
            %877 = vst [vmem:[%s857] sm:$0x3] %v867
            %878 = vst [vmem:[%s858] sm:$0x3] %v870
            %879 = vst [vmem:[%s859] sm:$0x3] %v873
            %880 = vst [vmem:[%s860] sm:$0x3] %v876
            %s881 = smov [#allocation10]
            %s882 = smov [#allocation14]
            %v883 = vld [vmem:[%s881] ss:$0 sm:$0xff]
            %s885 = scalar_lea.vmem %s881, 4294967295
            %v886 = vld [vmem:[%s885] sm:$0x2]
            %v887 = vlaneseq
            %v888 = vshrl.u32 %v887, 7
            %vm889 = vcmp.eq.s32.totalorder %v888, 0
            %v890 = vsel %vm889, %v883, %v886
            %s891 = scalar_lea.vmem %s881, 1
            %v892 = vld [vmem:[%s891] ss:$0 sm:$0xff]
            %893 = vst [vmem:[%s881] sm:$0x3] %v890
            %v894 = vld [vmem:[%s882] ss:$0 sm:$0xff]
            %s895 = scalar_lea.vmem %s881, 1
            %896 = vst [vmem:[%s895] sm:$0x1] %v894
            %s897 = scalar_lea.vmem %s882, 1
            %v898 = vld [vmem:[%s897] sm:$0x1]
            %v899 = vlaneseq
            %v900 = vshrl.u32 %v899, 7
            %vm901 = vcmp.eq.s32.totalorder %v900, 1
            %v902 = vsel %vm901, %v892, %v898
            %v903 = vld [vmem:[%s882] ss:$0 sm:$0xff]
            %904 = vst [vmem:[%s882] sm:$0x3] %v902
            %s905 = smov [#allocation12]
            %s906 = smov [#allocation16]
            %v907 = vld [vmem:[%s905] ss:$0 sm:$0xff]
            %s909 = scalar_lea.vmem %s905, 4294967295
            %v910 = vld [vmem:[%s909] sm:$0x2]
            %v911 = vlaneseq
            %v912 = vshrl.u32 %v911, 7
            %vm913 = vcmp.eq.s32.totalorder %v912, 0
            %v914 = vsel %vm913, %v907, %v910
            %s915 = scalar_lea.vmem %s905, 1
            %v916 = vld [vmem:[%s915] ss:$0 sm:$0xff]
            %917 = vst [vmem:[%s905] sm:$0x3] %v914
            %v918 = vld [vmem:[%s906] ss:$0 sm:$0xff]
            %s919 = scalar_lea.vmem %s905, 1
            %920 = vst [vmem:[%s919] sm:$0x1] %v918
            %s921 = scalar_lea.vmem %s906, 1
            %v922 = vld [vmem:[%s921] sm:$0x1]
            %v923 = vlaneseq
            %v924 = vshrl.u32 %v923, 7
            %vm925 = vcmp.eq.s32.totalorder %v924, 1
            %v926 = vsel %vm925, %v916, %v922
            %v927 = vld [vmem:[%s906] ss:$0 sm:$0xff]
            %928 = vst [vmem:[%s906] sm:$0x3] %v926
          $region152: #{custom-call.16} parent=144 // loop_footer
            %s489 = sadd.s32 1, %s485
          $region153: #{custom-call.16} parent=144 // loop_footer_branch
            %484 = sbr.rel target = $region149
          $region154: #{custom-call.16} parent=144 // loop_exit
            _
          %s929 = sadd.s32 %s387, 1
        $region145: #{custom-call.16} parent=139 // loop_footer
          _
        $region146: #{custom-call.16} parent=139 // loop_footer_branch
          %386 = sbr.rel target = $region142
        $region147: #{custom-call.16} parent=139 // loop_exit
          _
        %s932 = sand.u32 %s22, 7
        %s933 = scalar_lea.vmem %s303, %s932 [#allocation8]
        %s934 = sand.u32 %s22, 7
        %s935 = scalar_lea.vmem %s309, %s934 [#allocation9]
        %s936 = smov [#allocation18]
        %s937 = smov %s933
        %v938 = vlaneseq
        %v939 = vand.u32 %v938, 127
        %v940 = vmov %v939
        %v941 = vlaneseq
        %v942 = vshrl.u32 %v941, 7
        %v943 = vmov %v942
        %v944 = vld [vmem:[%s936] sm:$0x3]
        %vm947 = vcmp.eq.s32.totalorder %v943, %v940
        %v948 = vsel %vm947, %v944, 0.0
        %v949 = vrot.slane %v948, 4
        %v950 = vadd.f32 %v948, %v949
        %v951 = vrot.slane %v950, 2
        %v952 = vadd.f32 %v950, %v951
        %v953 = vrot.slane %v952, 1
        %v954 = vadd.f32 %v952, %v953
        %955 = vst [vmem:[%s937] sm:$0x1] %v954
        %s956 = smov [#allocation21]
        %s957 = smov %s935
        %v958 = vlaneseq
        %v959 = vand.u32 %v958, 127
        %v960 = vmov %v959
        %v961 = vlaneseq
        %v962 = vshrl.u32 %v961, 7
        %v963 = vmov %v962
        %v964 = vld [vmem:[%s956] sm:$0x3]
        %vm967 = vcmp.eq.s32.totalorder %v963, %v960
        %v968 = vsel %vm967, %v964, 0.0
        %v969 = vrot.slane %v968, 4
        %v970 = vadd.f32 %v968, %v969
        %v971 = vrot.slane %v970, 2
        %v972 = vadd.f32 %v970, %v971
        %v973 = vrot.slane %v972, 1
        %v974 = vadd.f32 %v972, %v973
        %975 = vst [vmem:[%s957] sm:$0x1] %v974
        %s977 = sshllo.u32 0, 2
        %v979 = vld [vmem:[#allocation10] sm:%s977]
        %s980 = sshllo.u32 0, 2
        %981 = vst [vmem:[%s313] sm:%s980] %v979
        %s983 = sshllo.u32 0, 2
        %v985 = vld [vmem:[#allocation12] sm:%s983]
        %s986 = sshllo.u32 0, 2
        %987 = vst [vmem:[%s317] sm:%s986] %v985
        %s989 = sshllo.u32 0, 2
        %v991 = vld [vmem:[#allocation14] sm:%s989]
        %s992 = sshllo.u32 0, 2
        %993 = vst [vmem:[%s321] sm:%s992] %v991
        %s995 = sshllo.u32 0, 2
        %v997 = vld [vmem:[#allocation16] sm:%s995]
        %s998 = sshllo.u32 0, 2
        %999 = vst [vmem:[%s325] sm:%s998] %v997
        %s1000 = sand.u32 %s41, 1
        %s1001 = sand.u32 %s41, 1
        %s1002 = smul.addr %s1001, 8
        %s1003 = scalar_lea.vmem [#allocation8], %s1002
        %s1004 = sand.u32 %s71, 1
        %s1005 = sand.u32 %s71, 1
        %s1006 = smul.addr %s1005, 8
        %s1007 = scalar_lea.vmem [#allocation9], %s1006
        %s1008 = sand.u32 %s17, 1
        %s1009 = sand.u32 %s17, 1
        %s1010 = smul.addr %s1009, 2
        %s1011 = scalar_lea.vmem [#allocation11], %s1010
        %s1012 = sand.u32 %s17, 1
        %s1013 = sand.u32 %s17, 1
        %s1014 = smul.addr %s1013, 2
        %s1015 = scalar_lea.vmem [#allocation13], %s1014
        %s1016 = sand.u32 %s17, 1
        %s1017 = sand.u32 %s17, 1
        %s1018 = smul.addr %s1017, 2
        %s1019 = scalar_lea.vmem [#allocation15], %s1018
        %s1020 = sand.u32 %s17, 1
        %s1021 = sand.u32 %s17, 1
        %s1022 = smul.addr %s1021, 2
        %s1023 = scalar_lea.vmem [#allocation17], %s1022
        // Predicated region
        $region155: #{custom-call.16} parent=139 // pred_check
          %p1024 = pneg %p51
        $region156: #{custom-call.16} parent=139 // pred_check_branch
          %1026 = sbr.rel (%p1024) target = $region158
        $region157: #{custom-call.16} parent=139 // pred_region
          %s1027 = sshrl.u32 %s22, 3
          %s1028 = smul.addr %s21, 3
          %s1029 = sadd.s32 %s1027, %s1028
          %s1030 = smul.addr %s1029, 8
          %s1031 = scalar_lea.vmem %s4, %s1030
          // Predicated region
          $region159: #{custom-call.16} parent=157 // pred_check
            _
          $region160: #{custom-call.16} parent=157 // pred_check_branch
            %1033 = sbr.rel (0) target = $region162
          $region161: #{custom-call.16} parent=157 // pred_region
            // Predicated region
            $region163: #{custom-call.16} parent=161 // pred_check
              _
            $region164: #{custom-call.16} parent=161 // pred_check_branch
              %1035 = sbr.rel (0) target = $region166
            $region165: #{custom-call.16} parent=161 // pred_region
              // Predicated region
              $region178: #{custom-call.16} parent=165 // pred_check
                _
              $region179: #{custom-call.16} parent=165 // pred_check_branch
                %1050 = sbr.rel (0) target = $region181
              $region180: #{custom-call.16} parent=165 // pred_region
                loop: start=0, step=1, limit=1
                $region182: #{custom-call.16} parent=180 // loop_pre_header
                  _
                $region183: #{custom-call.16} parent=180 // loop_header
                  %s1052 = sphi 0, %s1056
                  %p1053 = scmp.ge.s32.totalorder %s1052, 1
                  %s1057 = sphi %s1003, %s1003
                  %s1058 = sphi %s1031, %s1031
                $region184: #{custom-call.16} parent=180 // loop_header_branch
                  %1055 = sbr.rel (%p1053) target = $region188
                $region185: #{custom-call.16} parent=180 // loop_body
                  %v1059 = vld [vmem:[%s1057] sm:$0xff]
                  %1060 = vst [vmem:[%s1058] sm:$0xff] %v1059
                $region186: #{custom-call.16} parent=180 // loop_footer
                  %s1056 = sadd.s32 1, %s1052
                $region187: #{custom-call.16} parent=180 // loop_footer_branch
                  %1051 = sbr.rel target = $region183
                $region188: #{custom-call.16} parent=180 // loop_exit
                  _
              $region181: #{custom-call.16} parent=165 // pred_fallthru
                _
              // Predicated region
              $region189: #{custom-call.16} parent=165 // pred_check
                _
              $region190: #{custom-call.16} parent=165 // pred_check_branch
                %1062 = sbr.rel target = $region192
              $region191: #{custom-call.16} parent=165 // pred_region
                _
              $region192: #{custom-call.16} parent=165 // pred_fallthru
                _
            $region166: #{custom-call.16} parent=161 // pred_fallthru
              _
            // Predicated region
            $region167: #{custom-call.16} parent=161 // pred_check
              _
            $region168: #{custom-call.16} parent=161 // pred_check_branch
              %1037 = sbr.rel target = $region170
            $region169: #{custom-call.16} parent=161 // pred_region
              loop: start=0, step=1, limit=1
              $region171: #{custom-call.16} parent=169 // loop_pre_header
                _
              $region172: #{custom-call.16} parent=169 // loop_header
                %s1040 = sphi 0, %s1044
                %p1041 = scmp.ge.s32.totalorder %s1040, 1
                %s1045 = sphi %s1003, %s1003
                %s1046 = sphi %s1031, %s1031
              $region173: #{custom-call.16} parent=169 // loop_header_branch
                %1043 = sbr.rel (%p1041) target = $region177
              $region174: #{custom-call.16} parent=169 // loop_body
                %v1047 = vld [vmem:[%s1045] sm:$0xff]
                %1048 = vst [vmem:[%s1046] sm:$0xff] %v1047
              $region175: #{custom-call.16} parent=169 // loop_footer
                %s1044 = sadd.s32 1, %s1040
              $region176: #{custom-call.16} parent=169 // loop_footer_branch
                %1039 = sbr.rel target = $region172
              $region177: #{custom-call.16} parent=169 // loop_exit
                _
            $region170: #{custom-call.16} parent=161 // pred_fallthru
              _
          $region162: #{custom-call.16} parent=157 // pred_fallthru
            _
          %1063 = vnop
        $region158: #{custom-call.16} parent=139 // pred_fallthru
          _
        // Predicated region
        $region193: #{custom-call.16} parent=139 // pred_check
          %p1064 = pneg %p81
        $region194: #{custom-call.16} parent=139 // pred_check_branch
          %1066 = sbr.rel (%p1064) target = $region196
        $region195: #{custom-call.16} parent=139 // pred_region
          %s1067 = sshrl.u32 %s22, 3
          %s1068 = smul.addr %s21, 3
          %s1069 = sadd.s32 %s1067, %s1068
          %s1070 = smul.addr %s1069, 8
          %s1071 = scalar_lea.vmem %s5, %s1070
          // Predicated region
          $region197: #{custom-call.16} parent=195 // pred_check
            _
          $region198: #{custom-call.16} parent=195 // pred_check_branch
            %1073 = sbr.rel (0) target = $region200
          $region199: #{custom-call.16} parent=195 // pred_region
            // Predicated region
            $region201: #{custom-call.16} parent=199 // pred_check
              _
            $region202: #{custom-call.16} parent=199 // pred_check_branch
              %1075 = sbr.rel (0) target = $region204
            $region203: #{custom-call.16} parent=199 // pred_region
              // Predicated region
              $region216: #{custom-call.16} parent=203 // pred_check
                _
              $region217: #{custom-call.16} parent=203 // pred_check_branch
                %1090 = sbr.rel (0) target = $region219
              $region218: #{custom-call.16} parent=203 // pred_region
                loop: start=0, step=1, limit=1
                $region220: #{custom-call.16} parent=218 // loop_pre_header
                  _
                $region221: #{custom-call.16} parent=218 // loop_header
                  %s1092 = sphi 0, %s1096
                  %p1093 = scmp.ge.s32.totalorder %s1092, 1
                  %s1097 = sphi %s1007, %s1007
                  %s1098 = sphi %s1071, %s1071
                $region222: #{custom-call.16} parent=218 // loop_header_branch
                  %1095 = sbr.rel (%p1093) target = $region226
                $region223: #{custom-call.16} parent=218 // loop_body
                  %v1099 = vld [vmem:[%s1097] sm:$0xff]
                  %1100 = vst [vmem:[%s1098] sm:$0xff] %v1099
                $region224: #{custom-call.16} parent=218 // loop_footer
                  %s1096 = sadd.s32 1, %s1092
                $region225: #{custom-call.16} parent=218 // loop_footer_branch
                  %1091 = sbr.rel target = $region221
                $region226: #{custom-call.16} parent=218 // loop_exit
                  _
              $region219: #{custom-call.16} parent=203 // pred_fallthru
                _
              // Predicated region
              $region227: #{custom-call.16} parent=203 // pred_check
                _
              $region228: #{custom-call.16} parent=203 // pred_check_branch
                %1102 = sbr.rel target = $region230
              $region229: #{custom-call.16} parent=203 // pred_region
                _
              $region230: #{custom-call.16} parent=203 // pred_fallthru
                _
            $region204: #{custom-call.16} parent=199 // pred_fallthru
              _
            // Predicated region
            $region205: #{custom-call.16} parent=199 // pred_check
              _
            $region206: #{custom-call.16} parent=199 // pred_check_branch
              %1077 = sbr.rel target = $region208
            $region207: #{custom-call.16} parent=199 // pred_region
              loop: start=0, step=1, limit=1
              $region209: #{custom-call.16} parent=207 // loop_pre_header
                _
              $region210: #{custom-call.16} parent=207 // loop_header
                %s1080 = sphi 0, %s1084
                %p1081 = scmp.ge.s32.totalorder %s1080, 1
                %s1085 = sphi %s1007, %s1007
                %s1086 = sphi %s1071, %s1071
              $region211: #{custom-call.16} parent=207 // loop_header_branch
                %1083 = sbr.rel (%p1081) target = $region215
              $region212: #{custom-call.16} parent=207 // loop_body
                %v1087 = vld [vmem:[%s1085] sm:$0xff]
                %1088 = vst [vmem:[%s1086] sm:$0xff] %v1087
              $region213: #{custom-call.16} parent=207 // loop_footer
                %s1084 = sadd.s32 1, %s1080
              $region214: #{custom-call.16} parent=207 // loop_footer_branch
                %1079 = sbr.rel target = $region210
              $region215: #{custom-call.16} parent=207 // loop_exit
                _
            $region208: #{custom-call.16} parent=199 // pred_fallthru
              _
          $region200: #{custom-call.16} parent=195 // pred_fallthru
            _
          %1103 = vnop
        $region196: #{custom-call.16} parent=139 // pred_fallthru
          _
        %s1104 = smul.addr %s21, 17
        %s1105 = sadd.s32 %s22, %s1104
        %s1106 = smul.addr %s1105, 2
        %s1107 = scalar_lea.vmem %s6, %s1106
        // Predicated region
        $region231: #{custom-call.16} parent=139 // pred_check
          _
        $region232: #{custom-call.16} parent=139 // pred_check_branch
          %1109 = sbr.rel (0) target = $region234
        $region233: #{custom-call.16} parent=139 // pred_region
          // Predicated region
          $region235: #{custom-call.16} parent=233 // pred_check
            _
          $region236: #{custom-call.16} parent=233 // pred_check_branch
            %1111 = sbr.rel target = $region238
          $region237: #{custom-call.16} parent=233 // pred_region
            // Predicated region
            $region250: #{custom-call.16} parent=237 // pred_check
              _
            $region251: #{custom-call.16} parent=237 // pred_check_branch
              %1126 = sbr.rel (0) target = $region253
            $region252: #{custom-call.16} parent=237 // pred_region
              loop: start=0, step=1, limit=1
              $region254: #{custom-call.16} parent=252 // loop_pre_header
                _
              $region255: #{custom-call.16} parent=252 // loop_header
                %s1129 = sphi 0, %s1133
                %p1130 = scmp.ge.s32.totalorder %s1129, 1
                %s1134 = sphi %s1011, %s1011
                %s1135 = sphi %s1107, %s1107
              $region256: #{custom-call.16} parent=252 // loop_header_branch
                %1132 = sbr.rel (%p1130) target = $region260
              $region257: #{custom-call.16} parent=252 // loop_body
                %v1136 = vld [vmem:[%s1134] sm:$0x3]
                %1137 = vst [vmem:[%s1135] sm:$0x3] %v1136
              $region258: #{custom-call.16} parent=252 // loop_footer
                %s1133 = sadd.s32 1, %s1129
              $region259: #{custom-call.16} parent=252 // loop_footer_branch
                %1128 = sbr.rel target = $region255
              $region260: #{custom-call.16} parent=252 // loop_exit
                _
            $region253: #{custom-call.16} parent=237 // pred_fallthru
              _
          $region238: #{custom-call.16} parent=233 // pred_fallthru
            _
          // Predicated region
          $region239: #{custom-call.16} parent=233 // pred_check
            _
          $region240: #{custom-call.16} parent=233 // pred_check_branch
            %1113 = sbr.rel (0) target = $region242
          $region241: #{custom-call.16} parent=233 // pred_region
            loop: start=0, step=1, limit=1
            $region243: #{custom-call.16} parent=241 // loop_pre_header
              _
            $region244: #{custom-call.16} parent=241 // loop_header
              %s1116 = sphi 0, %s1120
              %p1117 = scmp.ge.s32.totalorder %s1116, 1
              %s1121 = sphi %s1011, %s1011
              %s1122 = sphi %s1107, %s1107
            $region245: #{custom-call.16} parent=241 // loop_header_branch
              %1119 = sbr.rel (%p1117) target = $region249
            $region246: #{custom-call.16} parent=241 // loop_body
              %v1123 = vld [vmem:[%s1121] sm:$0x3]
              %1124 = vst [vmem:[%s1122] sm:$0x3] %v1123
            $region247: #{custom-call.16} parent=241 // loop_footer
              %s1120 = sadd.s32 1, %s1116
            $region248: #{custom-call.16} parent=241 // loop_footer_branch
              %1115 = sbr.rel target = $region244
            $region249: #{custom-call.16} parent=241 // loop_exit
              _
          $region242: #{custom-call.16} parent=233 // pred_fallthru
            _
        $region234: #{custom-call.16} parent=139 // pred_fallthru
          _
        %1138 = vnop
        %s1139 = smul.addr %s21, 17
        %s1140 = sadd.s32 %s22, %s1139
        %s1141 = smul.addr %s1140, 2
        %s1142 = scalar_lea.vmem %s7, %s1141
        // Predicated region
        $region261: #{custom-call.16} parent=139 // pred_check
          _
        $region262: #{custom-call.16} parent=139 // pred_check_branch
          %1144 = sbr.rel (0) target = $region264
        $region263: #{custom-call.16} parent=139 // pred_region
          // Predicated region
          $region265: #{custom-call.16} parent=263 // pred_check
            _
          $region266: #{custom-call.16} parent=263 // pred_check_branch
            %1146 = sbr.rel target = $region268
          $region267: #{custom-call.16} parent=263 // pred_region
            // Predicated region
            $region280: #{custom-call.16} parent=267 // pred_check
              _
            $region281: #{custom-call.16} parent=267 // pred_check_branch
              %1161 = sbr.rel (0) target = $region283
            $region282: #{custom-call.16} parent=267 // pred_region
              loop: start=0, step=1, limit=1
              $region284: #{custom-call.16} parent=282 // loop_pre_header
                _
              $region285: #{custom-call.16} parent=282 // loop_header
                %s1164 = sphi 0, %s1168
                %p1165 = scmp.ge.s32.totalorder %s1164, 1
                %s1169 = sphi %s1015, %s1015
                %s1170 = sphi %s1142, %s1142
              $region286: #{custom-call.16} parent=282 // loop_header_branch
                %1167 = sbr.rel (%p1165) target = $region290
              $region287: #{custom-call.16} parent=282 // loop_body
                %v1171 = vld [vmem:[%s1169] sm:$0x3]
                %1172 = vst [vmem:[%s1170] sm:$0x3] %v1171
              $region288: #{custom-call.16} parent=282 // loop_footer
                %s1168 = sadd.s32 1, %s1164
              $region289: #{custom-call.16} parent=282 // loop_footer_branch
                %1163 = sbr.rel target = $region285
              $region290: #{custom-call.16} parent=282 // loop_exit
                _
            $region283: #{custom-call.16} parent=267 // pred_fallthru
              _
          $region268: #{custom-call.16} parent=263 // pred_fallthru
            _
          // Predicated region
          $region269: #{custom-call.16} parent=263 // pred_check
            _
          $region270: #{custom-call.16} parent=263 // pred_check_branch
            %1148 = sbr.rel (0) target = $region272
          $region271: #{custom-call.16} parent=263 // pred_region
            loop: start=0, step=1, limit=1
            $region273: #{custom-call.16} parent=271 // loop_pre_header
              _
            $region274: #{custom-call.16} parent=271 // loop_header
              %s1151 = sphi 0, %s1155
              %p1152 = scmp.ge.s32.totalorder %s1151, 1
              %s1156 = sphi %s1015, %s1015
              %s1157 = sphi %s1142, %s1142
            $region275: #{custom-call.16} parent=271 // loop_header_branch
              %1154 = sbr.rel (%p1152) target = $region279
            $region276: #{custom-call.16} parent=271 // loop_body
              %v1158 = vld [vmem:[%s1156] sm:$0x3]
              %1159 = vst [vmem:[%s1157] sm:$0x3] %v1158
            $region277: #{custom-call.16} parent=271 // loop_footer
              %s1155 = sadd.s32 1, %s1151
            $region278: #{custom-call.16} parent=271 // loop_footer_branch
              %1150 = sbr.rel target = $region274
            $region279: #{custom-call.16} parent=271 // loop_exit
              _
          $region272: #{custom-call.16} parent=263 // pred_fallthru
            _
        $region264: #{custom-call.16} parent=139 // pred_fallthru
          _
        %1173 = vnop
        %s1174 = smul.addr %s21, 17
        %s1175 = sadd.s32 %s22, %s1174
        %s1176 = smul.addr %s1175, 2
        %s1177 = scalar_lea.vmem %s8, %s1176
        // Predicated region
        $region291: #{custom-call.16} parent=139 // pred_check
          _
        $region292: #{custom-call.16} parent=139 // pred_check_branch
          %1179 = sbr.rel (0) target = $region294
        $region293: #{custom-call.16} parent=139 // pred_region
          // Predicated region
          $region295: #{custom-call.16} parent=293 // pred_check
            _
          $region296: #{custom-call.16} parent=293 // pred_check_branch
            %1181 = sbr.rel target = $region298
          $region297: #{custom-call.16} parent=293 // pred_region
            // Predicated region
            $region310: #{custom-call.16} parent=297 // pred_check
              _
            $region311: #{custom-call.16} parent=297 // pred_check_branch
              %1196 = sbr.rel (0) target = $region313
            $region312: #{custom-call.16} parent=297 // pred_region
              loop: start=0, step=1, limit=1
              $region314: #{custom-call.16} parent=312 // loop_pre_header
                _
              $region315: #{custom-call.16} parent=312 // loop_header
                %s1199 = sphi 0, %s1203
                %p1200 = scmp.ge.s32.totalorder %s1199, 1
                %s1204 = sphi %s1019, %s1019
                %s1205 = sphi %s1177, %s1177
              $region316: #{custom-call.16} parent=312 // loop_header_branch
                %1202 = sbr.rel (%p1200) target = $region320
              $region317: #{custom-call.16} parent=312 // loop_body
                %v1206 = vld [vmem:[%s1204] sm:$0x3]
                %1207 = vst [vmem:[%s1205] sm:$0x3] %v1206
              $region318: #{custom-call.16} parent=312 // loop_footer
                %s1203 = sadd.s32 1, %s1199
              $region319: #{custom-call.16} parent=312 // loop_footer_branch
                %1198 = sbr.rel target = $region315
              $region320: #{custom-call.16} parent=312 // loop_exit
                _
            $region313: #{custom-call.16} parent=297 // pred_fallthru
              _
          $region298: #{custom-call.16} parent=293 // pred_fallthru
            _
          // Predicated region
          $region299: #{custom-call.16} parent=293 // pred_check
            _
          $region300: #{custom-call.16} parent=293 // pred_check_branch
            %1183 = sbr.rel (0) target = $region302
          $region301: #{custom-call.16} parent=293 // pred_region
            loop: start=0, step=1, limit=1
            $region303: #{custom-call.16} parent=301 // loop_pre_header
              _
            $region304: #{custom-call.16} parent=301 // loop_header
              %s1186 = sphi 0, %s1190
              %p1187 = scmp.ge.s32.totalorder %s1186, 1
              %s1191 = sphi %s1019, %s1019
              %s1192 = sphi %s1177, %s1177
            $region305: #{custom-call.16} parent=301 // loop_header_branch
              %1189 = sbr.rel (%p1187) target = $region309
            $region306: #{custom-call.16} parent=301 // loop_body
              %v1193 = vld [vmem:[%s1191] sm:$0x3]
              %1194 = vst [vmem:[%s1192] sm:$0x3] %v1193
            $region307: #{custom-call.16} parent=301 // loop_footer
              %s1190 = sadd.s32 1, %s1186
            $region308: #{custom-call.16} parent=301 // loop_footer_branch
              %1185 = sbr.rel target = $region304
            $region309: #{custom-call.16} parent=301 // loop_exit
              _
          $region302: #{custom-call.16} parent=293 // pred_fallthru
            _
        $region294: #{custom-call.16} parent=139 // pred_fallthru
          _
        %1208 = vnop
        %s1209 = smul.addr %s21, 17
        %s1210 = sadd.s32 %s22, %s1209
        %s1211 = smul.addr %s1210, 2
        %s1212 = scalar_lea.vmem %s9, %s1211
        // Predicated region
        $region321: #{custom-call.16} parent=139 // pred_check
          _
        $region322: #{custom-call.16} parent=139 // pred_check_branch
          %1214 = sbr.rel (0) target = $region324
        $region323: #{custom-call.16} parent=139 // pred_region
          // Predicated region
          $region325: #{custom-call.16} parent=323 // pred_check
            _
          $region326: #{custom-call.16} parent=323 // pred_check_branch
            %1216 = sbr.rel target = $region328
          $region327: #{custom-call.16} parent=323 // pred_region
            // Predicated region
            $region340: #{custom-call.16} parent=327 // pred_check
              _
            $region341: #{custom-call.16} parent=327 // pred_check_branch
              %1231 = sbr.rel (0) target = $region343
            $region342: #{custom-call.16} parent=327 // pred_region
              loop: start=0, step=1, limit=1
              $region344: #{custom-call.16} parent=342 // loop_pre_header
                _
              $region345: #{custom-call.16} parent=342 // loop_header
                %s1234 = sphi 0, %s1238
                %p1235 = scmp.ge.s32.totalorder %s1234, 1
                %s1239 = sphi %s1023, %s1023
                %s1240 = sphi %s1212, %s1212
              $region346: #{custom-call.16} parent=342 // loop_header_branch
                %1237 = sbr.rel (%p1235) target = $region350
              $region347: #{custom-call.16} parent=342 // loop_body
                %v1241 = vld [vmem:[%s1239] sm:$0x3]
                %1242 = vst [vmem:[%s1240] sm:$0x3] %v1241
              $region348: #{custom-call.16} parent=342 // loop_footer
                %s1238 = sadd.s32 1, %s1234
              $region349: #{custom-call.16} parent=342 // loop_footer_branch
                %1233 = sbr.rel target = $region345
              $region350: #{custom-call.16} parent=342 // loop_exit
                _
            $region343: #{custom-call.16} parent=327 // pred_fallthru
              _
          $region328: #{custom-call.16} parent=323 // pred_fallthru
            _
          // Predicated region
          $region329: #{custom-call.16} parent=323 // pred_check
            _
          $region330: #{custom-call.16} parent=323 // pred_check_branch
            %1218 = sbr.rel (0) target = $region332
          $region331: #{custom-call.16} parent=323 // pred_region
            loop: start=0, step=1, limit=1
            $region333: #{custom-call.16} parent=331 // loop_pre_header
              _
            $region334: #{custom-call.16} parent=331 // loop_header
              %s1221 = sphi 0, %s1225
              %p1222 = scmp.ge.s32.totalorder %s1221, 1
              %s1226 = sphi %s1023, %s1023
              %s1227 = sphi %s1212, %s1212
            $region335: #{custom-call.16} parent=331 // loop_header_branch
              %1224 = sbr.rel (%p1222) target = $region339
            $region336: #{custom-call.16} parent=331 // loop_body
              %v1228 = vld [vmem:[%s1226] sm:$0x3]
              %1229 = vst [vmem:[%s1227] sm:$0x3] %v1228
            $region337: #{custom-call.16} parent=331 // loop_footer
              %s1225 = sadd.s32 1, %s1221
            $region338: #{custom-call.16} parent=331 // loop_footer_branch
              %1220 = sbr.rel target = $region334
            $region339: #{custom-call.16} parent=331 // loop_exit
              _
          $region332: #{custom-call.16} parent=323 // pred_fallthru
            _
        $region324: #{custom-call.16} parent=139 // pred_fallthru
          _
        %1243 = vnop
      $region140: #{custom-call.16} parent=5 // pred_fallthru
        _
      %p1244 = scmp.le.s32.totalorder 2, %s12
      // Predicated region
      $region351: #{custom-call.16} parent=5 // pred_check
        %p1245 = pneg %p1244
      $region352: #{custom-call.16} parent=5 // pred_check_branch
        %1247 = sbr.rel (%p1245) target = $region354
      $region353: #{custom-call.16} parent=5 // pred_region
        %s1248 = ssub.s32 %s12, 2
        // Predicated region
        $region355: #{custom-call.16} parent=353 // pred_check
          %p1249 = pneg %p57
        $region356: #{custom-call.16} parent=353 // pred_check_branch
          %1251 = sbr.rel (%p1249) target = $region358
        $region357: #{custom-call.16} parent=353 // pred_region
          %s1252 = sand.u32 %s42, 1
          %s1253 = sand.u32 %s42, 1
          %s1254 = smul.addr %s1253, 8
          %s1255 = scalar_lea.vmem [#allocation8], %s1254
        $region358: #{custom-call.16} parent=353 // pred_fallthru
          _
        // Predicated region
        $region359: #{custom-call.16} parent=353 // pred_check
          %p1256 = pneg %p87
        $region360: #{custom-call.16} parent=353 // pred_check_branch
          %1258 = sbr.rel (%p1256) target = $region362
        $region361: #{custom-call.16} parent=353 // pred_region
          %s1259 = sand.u32 %s72, 1
          %s1260 = sand.u32 %s72, 1
          %s1261 = smul.addr %s1260, 8
          %s1262 = scalar_lea.vmem [#allocation9], %s1261
        $region362: #{custom-call.16} parent=353 // pred_fallthru
          _
        %s1263 = sand.u32 %s18, 1
        %s1264 = sand.u32 %s18, 1
        %s1265 = smul.addr %s1264, 2
        %s1266 = scalar_lea.vmem [#allocation11], %s1265
        %s1267 = sand.u32 %s18, 1
        %s1268 = sand.u32 %s18, 1
        %s1269 = smul.addr %s1268, 2
        %s1270 = scalar_lea.vmem [#allocation13], %s1269
        %s1271 = sand.u32 %s18, 1
        %s1272 = sand.u32 %s18, 1
        %s1273 = smul.addr %s1272, 2
        %s1274 = scalar_lea.vmem [#allocation15], %s1273
        %s1275 = sand.u32 %s18, 1
        %s1276 = sand.u32 %s18, 1
        %s1277 = smul.addr %s1276, 2
        %s1278 = scalar_lea.vmem [#allocation17], %s1277
      $region354: #{custom-call.16} parent=5 // pred_fallthru
        _
    $region6: #{custom-call.16} parent=1 // loop_footer
      %s16 = sadd.s32 1, %s12
    $region7: #{custom-call.16} parent=1 // loop_footer_branch
      %11 = sbr.rel target = $region3
    $region8: #{custom-call.16} parent=1 // loop_exit
      _

// kernel: reverse
$region0: #{reverse}
  %s0 = inlined_call_operand.vmem [shape: f32[2,17,4], index: 0, kind: input, shape index: {}]
  %s1 = inlined_call_operand.vmem [shape: f32[2,17,4], index: 1, kind: output, shape index: {}]
  $region1: #{reverse} parent=0
    #allocation0 [shape = 'u8[16384]{0}', space=vmem, size = 0x4000, scoped, tag = 'operand span for operand 0']
    #allocation1 [shape = 'u8[8192]{0}', space=vmem, size = 0x2000, scoped, tag = 'packed  for operand 0']
    #allocation2 [shape = 'u8[8192]{0}', space=vmem, size = 0x2000, scoped, tag = 'operand span for operand 1']
    #allocation3 [shape = 'u8[4096]{0}', space=vmem, size = 0x1000, scoped, tag = 'packed  for operand 1']
    %s2 = scalar_lea.vmem [#allocation1], 4
    // Predicated region
    $region2: #{reverse} parent=1 // pred_check
      _
    $region3: #{reverse} parent=1 // pred_check_branch
      %4 = sbr.rel (0) target = $region5
    $region4: #{reverse} parent=1 // pred_region
      // Predicated region
      $region6: #{reverse} parent=4 // pred_check
        _
      $region7: #{reverse} parent=4 // pred_check_branch
        %6 = sbr.rel target = $region9
      $region8: #{reverse} parent=4 // pred_region
        // Predicated region
        $region21: #{reverse} parent=8 // pred_check
          _
        $region22: #{reverse} parent=8 // pred_check_branch
          %23 = sbr.rel (0) target = $region24
        $region23: #{reverse} parent=8 // pred_region
          loop: start=0, step=1, limit=1
          $region25: #{reverse} parent=23 // loop_pre_header
            _
          $region26: #{reverse} parent=23 // loop_header
            %s25 = sphi 0, %s29
            %p26 = scmp.ge.s32.totalorder %s25, 1
            %s30 = sphi %s0, %s0
            %s31 = sphi %s2, %s2
          $region27: #{reverse} parent=23 // loop_header_branch
            %28 = sbr.rel (%p26) target = $region31
          $region28: #{reverse} parent=23 // loop_body
            _
          $region29: #{reverse} parent=23 // loop_footer
            %s29 = sadd.s32 1, %s25
          $region30: #{reverse} parent=23 // loop_footer_branch
            %24 = sbr.rel target = $region26
          $region31: #{reverse} parent=23 // loop_exit
            _
          loop: start=0, step=1, limit=1
          $region32: #{reverse} parent=23 // loop_pre_header
            _
          $region33: #{reverse} parent=23 // loop_header
            %s34 = sphi 0, %s38
            %p35 = scmp.ge.s32.totalorder %s34, 1
            %s39 = sphi %s0, %s0
            %s40 = sphi %s2, %s2
          $region34: #{reverse} parent=23 // loop_header_branch
            %37 = sbr.rel (%p35) target = $region38
          $region35: #{reverse} parent=23 // loop_body
            %v41 = vld [vmem:[%s39] sm:$0xf]
            %42 = vst [vmem:[%s40] sm:$0xf] %v41
            %v43 = vld [vmem:[%s39 + $0x4] sm:$0xf]
            %44 = vst [vmem:[%s40 + $0x8] sm:$0xf] %v43
          $region36: #{reverse} parent=23 // loop_footer
            %s38 = sadd.s32 1, %s34
          $region37: #{reverse} parent=23 // loop_footer_branch
            %33 = sbr.rel target = $region33
          $region38: #{reverse} parent=23 // loop_exit
            _
        $region24: #{reverse} parent=8 // pred_fallthru
          _
      $region9: #{reverse} parent=4 // pred_fallthru
        _
      // Predicated region
      $region10: #{reverse} parent=4 // pred_check
        _
      $region11: #{reverse} parent=4 // pred_check_branch
        %8 = sbr.rel (0) target = $region13
      $region12: #{reverse} parent=4 // pred_region
        loop: start=0, step=1, limit=1
        $region14: #{reverse} parent=12 // loop_pre_header
          _
        $region15: #{reverse} parent=12 // loop_header
          %s11 = sphi 0, %s15
          %p12 = scmp.ge.s32.totalorder %s11, 1
          %s16 = sphi %s0, %s0
          %s17 = sphi %s2, %s2
        $region16: #{reverse} parent=12 // loop_header_branch
          %14 = sbr.rel (%p12) target = $region20
        $region17: #{reverse} parent=12 // loop_body
          %v18 = vld [vmem:[%s16] sm:$0xf]
          %19 = vst [vmem:[%s17] sm:$0xf] %v18
          %v20 = vld [vmem:[%s16 + $0x4] sm:$0xf]
          %21 = vst [vmem:[%s17 + $0x8] sm:$0xf] %v20
        $region18: #{reverse} parent=12 // loop_footer
          %s15 = sadd.s32 1, %s11
        $region19: #{reverse} parent=12 // loop_footer_branch
          %10 = sbr.rel target = $region15
        $region20: #{reverse} parent=12 // loop_exit
          _
      $region13: #{reverse} parent=4 // pred_fallthru
        _
    $region5: #{reverse} parent=1 // pred_fallthru
      _
    %45 = vnop
    %s47 = sshllo.u32 0, 4
    %s48 = smul.addr 4, 3
    %s49 = scalar_lea.vmem [#allocation1], %s48
    %v50 = vld [vmem:[%s49] sm:%s47]
    %s51 = scalar_lea.vmem [#allocation0], 24
    %52 = vst [vmem:[%s51] sm:%s47] %v50
    %s53 = smul.addr 4, 2
    %s54 = scalar_lea.vmem [#allocation1], %s53
    %v55 = vld [vmem:[%s54] sm:%s47]
    %s56 = scalar_lea.vmem [#allocation0], 16
    %57 = vst [vmem:[%s56] sm:%s47] %v55
    %s58 = scalar_lea.vmem [#allocation1], 4
    %v59 = vld [vmem:[%s58] sm:%s47]
    %s60 = scalar_lea.vmem [#allocation0], 8
    %61 = vst [vmem:[%s60] sm:%s47] %v59
    %v62 = vld [vmem:[#allocation1] sm:%s47]
    %63 = vst [vmem:[#allocation0] sm:%s47] %v62
    %s64 = scalar_lea.vmem [#allocation0], 7
    %v65 = vld [vmem:[%s64] ss:$-1 sm:$0xff]
    %v66 = vrot.slane %v65, 4
    %67 = vst [vmem:[#allocation2] sm:$0xff] %v66
    %s68 = scalar_lea.vmem [#allocation0], 8
    %s69 = scalar_lea.vmem %s68, 7 [#allocation0]
    %v70 = vld [vmem:[%s69] ss:$-1 sm:$0xff]
    %v71 = vrot.slane %v70, 4
    %v72 = vlaneseq
    %v73 = vshrl.u32 %v72, 7
    %vm74 = vcmp.lt.s32.totalorder %v73, 4
    %75 = vst.msk [vmem:[#allocation2] sm:$0xff] %vm74, %v71
    %s76 = scalar_lea.vmem [#allocation2], 8
    %s77 = scalar_lea.vmem [#allocation0], 16
    %s78 = scalar_lea.vmem %s77, 7 [#allocation0]
    %v79 = vld [vmem:[%s78] ss:$-1 sm:$0xff]
    %v80 = vrot.slane %v79, 4
    %81 = vst [vmem:[%s76] sm:$0xff] %v80
    %s82 = scalar_lea.vmem %s77, 8 [#allocation0]
    %s83 = scalar_lea.vmem %s82, 7 [#allocation0]
    %v84 = vld [vmem:[%s83] ss:$-1 sm:$0xff]
    %v85 = vrot.slane %v84, 4
    %v86 = vlaneseq
    %v87 = vshrl.u32 %v86, 7
    %vm88 = vcmp.lt.s32.totalorder %v87, 4
    %89 = vst.msk [vmem:[%s76] sm:$0xff] %vm88, %v85
    %s91 = sshllo.u32 0, 4
    %v93 = vld [vmem:[#allocation2] sm:%s91]
    %s94 = sshllo.u32 0, 4
    %95 = vst [vmem:[#allocation3] sm:%s94] %v93
    %s96 = scalar_lea.vmem [#allocation2], 8
    %v97 = vld [vmem:[%s96] sm:%s91]
    %s98 = sshllo.u32 0, 4
    %s99 = scalar_lea.vmem [#allocation3], 4
    %100 = vst [vmem:[%s99] sm:%s98] %v97
    // Predicated region
    $region39: #{reverse} parent=1 // pred_check
      _
    $region40: #{reverse} parent=1 // pred_check_branch
      %102 = sbr.rel (0) target = $region42
    $region41: #{reverse} parent=1 // pred_region
      // Predicated region
      $region43: #{reverse} parent=41 // pred_check
        _
      $region44: #{reverse} parent=41 // pred_check_branch
        %104 = sbr.rel target = $region46
      $region45: #{reverse} parent=41 // pred_region
        // Predicated region
        $region58: #{reverse} parent=45 // pred_check
          _
        $region59: #{reverse} parent=45 // pred_check_branch
          %121 = sbr.rel (0) target = $region61
        $region60: #{reverse} parent=45 // pred_region
          loop: start=0, step=1, limit=1
          $region62: #{reverse} parent=60 // loop_pre_header
            _
          $region63: #{reverse} parent=60 // loop_header
            %s123 = sphi 0, %s127
            %p124 = scmp.ge.s32.totalorder %s123, 1
            %s128 = sphi [#allocation3], [#allocation3]
            %s129 = sphi %s1, %s1
          $region64: #{reverse} parent=60 // loop_header_branch
            %126 = sbr.rel (%p124) target = $region68
          $region65: #{reverse} parent=60 // loop_body
            _
          $region66: #{reverse} parent=60 // loop_footer
            %s127 = sadd.s32 1, %s123
          $region67: #{reverse} parent=60 // loop_footer_branch
            %122 = sbr.rel target = $region63
          $region68: #{reverse} parent=60 // loop_exit
            _
          loop: start=0, step=1, limit=1
          $region69: #{reverse} parent=60 // loop_pre_header
            _
          $region70: #{reverse} parent=60 // loop_header
            %s132 = sphi 0, %s136
            %p133 = scmp.ge.s32.totalorder %s132, 1
            %s137 = sphi [#allocation3], [#allocation3]
            %s138 = sphi %s1, %s1
          $region71: #{reverse} parent=60 // loop_header_branch
            %135 = sbr.rel (%p133) target = $region75
          $region72: #{reverse} parent=60 // loop_body
            %v139 = vld [vmem:[%s137] sm:$0xf]
            %140 = vst [vmem:[%s138] sm:$0xf] %v139
            %v141 = vld [vmem:[%s137 + $0x4] sm:$0xf]
            %142 = vst [vmem:[%s138 + $0x4] sm:$0xf] %v141
          $region73: #{reverse} parent=60 // loop_footer
            %s136 = sadd.s32 1, %s132
          $region74: #{reverse} parent=60 // loop_footer_branch
            %131 = sbr.rel target = $region70
          $region75: #{reverse} parent=60 // loop_exit
            _
        $region61: #{reverse} parent=45 // pred_fallthru
          _
      $region46: #{reverse} parent=41 // pred_fallthru
        _
      // Predicated region
      $region47: #{reverse} parent=41 // pred_check
        _
      $region48: #{reverse} parent=41 // pred_check_branch
        %106 = sbr.rel (0) target = $region50
      $region49: #{reverse} parent=41 // pred_region
        loop: start=0, step=1, limit=1
        $region51: #{reverse} parent=49 // loop_pre_header
          _
        $region52: #{reverse} parent=49 // loop_header
          %s109 = sphi 0, %s113
          %p110 = scmp.ge.s32.totalorder %s109, 1
          %s114 = sphi [#allocation3], [#allocation3]
          %s115 = sphi %s1, %s1
        $region53: #{reverse} parent=49 // loop_header_branch
          %112 = sbr.rel (%p110) target = $region57
        $region54: #{reverse} parent=49 // loop_body
          %v116 = vld [vmem:[%s114] sm:$0xf]
          %117 = vst [vmem:[%s115] sm:$0xf] %v116
          %v118 = vld [vmem:[%s114 + $0x4] sm:$0xf]
          %119 = vst [vmem:[%s115 + $0x4] sm:$0xf] %v118
        $region55: #{reverse} parent=49 // loop_footer
          %s113 = sadd.s32 1, %s109
        $region56: #{reverse} parent=49 // loop_footer_branch
          %108 = sbr.rel target = $region52
        $region57: #{reverse} parent=49 // loop_exit
          _
      $region50: #{reverse} parent=41 // pred_fallthru
        _
    $region42: #{reverse} parent=1 // pred_fallthru
      _
    %143 = vnop

</llo_original>
